<compile_context>
chip_gen: v6e
topology: v6e:2x2x1
jax: 0.10.0
libtpu: 0.0.40
codegen_flags: <defaults>
</compile_context>

<pallas_src>
import jax
import jax.numpy as jnp
from jax.experimental import pallas as pl
from jax.experimental.pallas import tpu as pltpu

BN_EPS = 1e-5
_LANE = 128


def _round_up(x, m):
    return (x + m - 1) // m * m


def _vmem_limit_bytes():
    """Generation-aware scoped-VMEM budget (48 MiB on v7x, 96 MiB on v5e/v6e)."""
    try:
        phys = int(pltpu.get_tpu_info().vmem_capacity_bytes)
    except Exception:
        phys = 64 * 1024 * 1024          # conservative: v7x physical per core
    return int(min(phys * 3 // 4, 96 * 1024 * 1024))


def _choose_tiling(L, D, cin, cout, vmem_limit):
    """Pick (TH, TM, S, num_tiles): TM is the flat-M tile, TH the halo block.

    TM is the largest TH-multiple whose double-buffered working set (resident
    weights + input/halo/output tiles + in-kernel temporaries) fits ~70% of the
    scoped VMEM budget, capped so the grid has >= 2 (preferably even) tiles.
    """
    TH = _round_up(max(D, 1), _LANE)
    k_max = max(cout, 9 * cin)                 # deepest GEMM contraction dim
    conv_col = 8 * k_max + 12 * cout           # bf16 in (dbuf+temps) + f32 acc
    norm_col = 20 * cout                       # y/res/out bf16 dbuf + f32 temps
    per_col = max(conv_col, norm_col) + 8      # + mask row
    fixed = 36 * cout * max(cout, cin) + 8 * k_max * TH   # weights + halo blocks
    budget = max(int(vmem_limit * 0.7) - fixed, per_col * TH)
    tm_vmem = max(TH, budget // per_col // TH * TH)
    tm_half = _round_up(pl.cdiv(L, 2), TH)     # guarantee >= 2 grid tiles
    TM = max(TH, min(tm_vmem, tm_half))
    nt = pl.cdiv(L, TM)
    if nt % 2 == 1 and nt > 1:                 # prefer an even tile count (v7x)
        alt = max(TH, _round_up(pl.cdiv(L, nt + 1), TH))
        if pl.cdiv(L, alt) % 2 == 0:
            TM = alt
            nt = pl.cdiv(L, alt)
    return TH, TM, nt * TM, nt


# ------------------------------ Pallas kernels ------------------------------ #
def _make_conv_stats_kernel(offsets, tile_h):
    """Implicit-GEMM conv (static tap column shifts) + BN partial statistics.

    offsets == (0,) means the input is already the full GEMM operand
    (1x1 conv or pre-im2col'd patches) and no halo blocks are passed.
    """
    has_halo = any(o != 0 for o in offsets)

    def kernel(*refs):
        if has_halo:
            m_ref, w_ref, cur_ref, left_ref, right_ref, y_ref, s_ref, sq_ref = refs
            cat = jnp.concatenate(
                [left_ref[...], cur_ref[...], right_ref[...]], axis=1)
            base = tile_h
        else:
            m_ref, w_ref, cur_ref, y_ref, s_ref, sq_ref = refs
            cat = cur_ref[...]
            base = 0
        tm = y_ref.shape[1]
        acc = None
        for t, off in enumerate(offsets):                 # static unroll (<=9)
            tap = cat[:, base + off: base + off + tm]     # lane shift, VMEM only
            d = jnp.dot(w_ref[t], tap, preferred_element_type=jnp.float32)
            acc = d if acc is None else acc + d
        ym = acc * m_ref[...]          # zero halo / padded columns (f32)
        y_ref[...] = ym.astype(y_ref.dtype)               # bf16 intermediate
        s_ref[...] = jnp.sum(ym, axis=1, keepdims=True)[None]       # [1,C,1]
        sq_ref[...] = jnp.sum(ym * ym, axis=1, keepdims=True)[None]  # [1,C,1]

    return kernel


def _make_norm_kernel(has_residual, apply_relu):
    """out = mask * relu(y*scale + shift [+ residual]); bf16 output."""
    if has_residual:
        def kernel(y_ref, sc_ref, sh_ref, m_ref, r_ref, o_ref):
            v = y_ref[...].astype(jnp.float32) * sc_ref[...] + sh_ref[...]
            v = v + r_ref[...].astype(jnp.float32)
            if apply_relu:
                v = jnp.maximum(v, 0.0)
            o_ref[...] = (v * m_ref[...]).astype(o_ref.dtype)
    else:
        def kernel(y_ref, sc_ref, sh_ref, m_ref, o_ref):
            v = y_ref[...].astype(jnp.float32) * sc_ref[...] + sh_ref[...]
            if apply_relu:
                v = jnp.maximum(v, 0.0)
            o_ref[...] = (v * m_ref[...]).astype(o_ref.dtype)
    return kernel


# ---------------------------- pallas_call wrappers --------------------------- #
def _conv_stats(a, w_taps, mask, offsets, TM, TH, vmem_limit):
    cin, S = a.shape
    T, cout, _ = w_taps.shape
    num_tiles = S // TM
    has_halo = any(o != 0 for o in offsets)
    r = TM // TH
    n_hb = S // TH

    in_specs = [
        pl.BlockSpec((1, TM), lambda i: (0, i)),               # interior mask
        pl.BlockSpec((T, cout, cin), lambda i: (0, 0, 0)),     # weights (resident)
        pl.BlockSpec((cin, TM), lambda i: (0, i)),             # current tile
    ]
    args = [mask, w_taps, a]
    if has_halo:
        in_specs += [
            pl.BlockSpec((cin, TH),
                         lambda i: (0, jnp.maximum(i * r - 1, 0))),       # left halo
            pl.BlockSpec((cin, TH),
                         lambda i: (0, jnp.minimum(i * r + r, n_hb - 1))),  # right halo
        ]
        args += [a, a]

    flops = 2 * cout * cin * T * S
    bytes_accessed = (cin * S * 2 * (3 if has_halo else 1) + T * cout * cin * 2
                      + cout * S * 2 + S * 4 + num_tiles * cout * 8)

    return pl.pallas_call(
        _make_conv_stats_kernel(tuple(offsets), TH),
        out_shape=(
            jax.ShapeDtypeStruct((cout, S), jnp.bfloat16),             # conv out
            jax.ShapeDtypeStruct((num_tiles, cout, 1), jnp.float32),   # per-tile sum
            jax.ShapeDtypeStruct((num_tiles, cout, 1), jnp.float32),   # per-tile sumsq
        ),
        grid=(num_tiles,),
        in_specs=in_specs,
        out_specs=(
            pl.BlockSpec((cout, TM), lambda i: (0, i)),
            pl.BlockSpec((1, cout, 1), lambda i: (i, 0, 0)),
            pl.BlockSpec((1, cout, 1), lambda i: (i, 0, 0)),
        ),
        compiler_params=pltpu.CompilerParams(
            dimension_semantics=("parallel",), vmem_limit_bytes=vmem_limit),
        cost_estimate=pl.CostEstimate(flops=flops, transcendentals=0,
                                      bytes_accessed=bytes_accessed),
    )(*args)


def _norm_apply(y, scale, shift, mask, residual, apply_relu, TM, vmem_limit):
    cout, S = y.shape
    num_tiles = S // TM
    has_res = residual is not None
    tile_spec = pl.BlockSpec((cout, TM), lambda i: (0, i))
    vec_spec = pl.BlockSpec((cout, 1), lambda i: (0, 0))
    mask_spec = pl.BlockSpec((1, TM), lambda i: (0, i))
    in_specs = [tile_spec, vec_spec, vec_spec, mask_spec]
    args = [y, scale, shift, mask]
    if has_res:
        in_specs.append(tile_spec)
        args.append(residual)
    return pl.pallas_call(
        _make_norm_kernel(has_res, apply_relu),
        out_shape=jax.ShapeDtypeStruct((cout, S), jnp.bfloat16),
        grid=(num_tiles,),
        in_specs=in_specs,
        out_specs=tile_spec,
        compiler_params=pltpu.CompilerParams(
            dimension_semantics=("parallel",), vmem_limit_bytes=vmem_limit),
        cost_estimate=pl.CostEstimate(
            flops=(4 + int(has_res)) * cout * S,
            transcendentals=0,
            bytes_accessed=(4 + 2 * int(has_res)) * cout * S + S * 4),
    )(*args)


# --------------------------------- JAX glue ---------------------------------- #
def _pad_flat(v, S):
    """[K, N, Ho, Wo] -> [K, S]: add zero spatial halo (pad=1), flatten, pad to S."""
    K, N, Ho, Wo = v.shape
    vp = jnp.pad(v, ((0, 0), (0, 0), (1, 1), (1, 1)))
    flat = vp.reshape(K, N * (Ho + 2) * (Wo + 2))
    return jnp.pad(flat, ((0, 0), (0, S - flat.shape[1])))


def _interior_mask(N, Ho, Wo, S):
    m = jnp.zeros((N, Ho + 2, Wo + 2), jnp.float32)
    m = m.at[:, 1:-1, 1:-1].set(1.0)
    m = m.reshape(1, N * (Ho + 2) * (Wo + 2))
    return jnp.pad(m, ((0, 0), (0, S - m.shape[1])))


def _im2col_stride2(x_cm, Ho, Wo):
    """x_cm [C, N, H, W] (bf16) -> 3x3/stride-2/pad-1 patches [C*9, N, Ho, Wo]."""
    C, N, H, W = x_cm.shape
    xp = jnp.pad(x_cm, ((0, 0), (0, 0), (1, 1), (1, 1)))
    cols = [xp[:, :, kh:kh + 2 * Ho - 1:2, kw:kw + 2 * Wo - 1:2]
            for kh in range(3) for kw in range(3)]
    return jnp.stack(cols, axis=1).reshape(C * 9, N, Ho, Wo)


def _conv_bn(a_flat, w_taps, gamma, beta, offsets, mask, m_valid,
             TM, TH, vmem_limit, residual=None, relu=True):
    """ConvBlock forward (training-mode BatchNorm) on padded-flat activations."""
    cout = w_taps.shape[1]
    y, s, sq = _conv_stats(a_flat, w_taps, mask, offsets, TM, TH, vmem_limit)
    sums = jnp.sum(s, axis=(0, 2))
    sqs = jnp.sum(sq, axis=(0, 2))
    mean = sums / m_valid
    var = jnp.maximum(sqs / m_valid - mean * mean, 0.0)   # biased var, clamped
    inv = jax.lax.rsqrt(var + BN_EPS)
    scale = (gamma * inv).reshape(cout, 1).astype(jnp.float32)
    shift = (beta - mean * gamma * inv).reshape(cout, 1).astype(jnp.float32)
    return _norm_apply(y, scale, shift, mask, residual, relu, TM, vmem_limit)


def down_conv_res_block(x_nchw, p):
    N, Cin, H, W = x_nchw.shape
    Cout = p["w1"].shape[0]
    Ho, Wo = (H - 1) // 2 + 1, (W - 1) // 2 + 1
    Hp, Wp = Ho + 2, Wo + 2
    L = N * Hp * Wp                 # padded-flat length at the block resolution
    D = Wp + 1                      # max |tap shift| for a 3x3 stride-1 conv
    m_valid = N * Ho * Wo           # true element count for BN batch stats

    vmem_limit = _vmem_limit_bytes()
    TH, TM, S, _ = _choose_tiling(L, D, Cin, Cout, vmem_limit)
    mask = _interior_mask(N, Ho, Wo, S)
    off3 = tuple((kh - 1) * Wp + (kw - 1) for kh in range(3) for kw in range(3))
    off1 = (0,)

    def w3(w):   # [Cout, Cin, 3, 3] -> tap-major [9, Cout, Cin] bf16
        return (jnp.transpose(w, (2, 3, 0, 1))
                .reshape(9, w.shape[0], w.shape[1]).astype(jnp.bfloat16))

    x_cm = jnp.transpose(x_nchw, (1, 0, 2, 3)).astype(jnp.bfloat16)

    # shortcut: 1x1 stride-2 conv -> BN (no activation)
    a_sc = _pad_flat(x_cm[:, :, ::2, ::2], S)
    w_sc = p["w_sc"].reshape(1, Cout, Cin).astype(jnp.bfloat16)
    residual = _conv_bn(a_sc, w_sc, p["g_sc"], p["b_sc"], off1, mask, m_valid,
                        TM, TH, vmem_limit, relu=False)

    # conv1: 3x3 stride-2 conv -> BN -> ReLU (stride 2 via JAX-side im2col, run once)
    a1 = _pad_flat(_im2col_stride2(x_cm, Ho, Wo), S)
    w1 = p["w1"].reshape(1, Cout, Cin * 9).astype(jnp.bfloat16)
    out = _conv_bn(a1, w1, p["g1"], p["b1"], off1, mask, m_valid,
                   TM, TH, vmem_limit, relu=True)

    # conv2: 3x3 conv -> BN -> (dropout p=0) -> + shortcut -> ReLU (fused)
    out = _conv_bn(out, w3(p["w2"]), p["g2"], p["b2"], off3, mask, m_valid,
                   TM, TH, vmem_limit, residual=residual, relu=True)

    # feat_res_block1 / feat_res_block2 (conv-BN-ReLU, conv-BN, +res, ReLU)
    for tag in ("f1", "f2"):
        res = out
        t = _conv_bn(out, w3(p[f"w_{tag}a"]), p[f"g_{tag}a"], p[f"b_{tag}a"],
                     off3, mask, m_valid, TM, TH, vmem_limit, relu=True)
        out = _conv_bn(t, w3(p[f"w_{tag}b"]), p[f"g_{tag}b"], p[f"b_{tag}b"],
                       off3, mask, m_valid, TM, TH, vmem_limit,
                       residual=res, relu=True)

    out = out[:, :L].reshape(Cout, N, Hp, Wp)[:, :, 1:-1, 1:-1]
    return jnp.transpose(out, (1, 0, 2, 3)).astype(jnp.float32)   # back to NCHW


def init_params(key, in_ch, out_ch):
    ks = jax.random.split(key, 8)

    def w(k, shape):
        return jax.random.normal(k, shape, jnp.float32) * 0.1

    ones = jnp.ones((out_ch,), jnp.float32)
    zeros = jnp.zeros((out_ch,), jnp.float32)
    return {
        "w_sc": w(ks[0], (out_ch, in_ch, 1, 1)), "g_sc": ones, "b_sc": zeros,
        "w1":   w(ks[1], (out_ch, in_ch, 3, 3)), "g1": ones, "b1": zeros,
        "w2":   w(ks[2], (out_ch, out_ch, 3, 3)), "g2": ones, "b2": zeros,
        "w_f1a": w(ks[3], (out_ch, out_ch, 3, 3)), "g_f1a": ones, "b_f1a": zeros,
        "w_f1b": w(ks[4], (out_ch, out_ch, 3, 3)), "g_f1b": ones, "b_f1b": zeros,
        "w_f2a": w(ks[5], (out_ch, out_ch, 3, 3)), "g_f2a": ones, "b_f2a": zeros,
        "w_f2b": w(ks[6], (out_ch, out_ch, 3, 3)), "g_f2b": ones, "b_f2b": zeros,
    }


if __name__ == "__main__":
    key = jax.random.PRNGKey(0)
    k_x, k_p = jax.random.split(key)
    N, Cin, Cout, H, W = 2, 4, 8, 16, 16
    x = jax.random.normal(k_x, (N, Cin, H, W), jnp.float32)   # NCHW, like PyTorch
    params = init_params(k_p, Cin, Cout)

    fwd = jax.jit(down_conv_res_block)
    out = fwd(x, params)
    jax.block_until_ready(out)
    assert out.shape == (N, Cout, H // 2, W // 2), out.shape
    assert bool(jnp.all(jnp.isfinite(out)))
    print("KERNEL_OK")
</pallas_src>

<mosaic_0001>
module attributes {stable_mosaic.version = 11 : i64} {
  func.func @kernel(%arg0: i32, %arg1: memref<1x128xf32, #tpu.memory_space<vmem>>, %arg2: memref<1x8x36xbf16, #tpu.memory_space<vmem>>, %arg3: memref<36x128xbf16, #tpu.memory_space<vmem>>, %arg4: memref<8x128xbf16, #tpu.memory_space<vmem>>, %arg5: memref<1x8x1xf32, #tpu.memory_space<vmem>>, %arg6: memref<1x8x1xf32, #tpu.memory_space<vmem>>) attributes {dimension_semantics = [#tpu.dimension_semantics<parallel>], iteration_bounds = array<i64: 2>, scalar_prefetch = 0 : i64, scratch_operands = 0 : i64, tpu.core_type = #tpu.core_type<tc>, window_params = [{transform_indices = @transform_0, window_bounds = array<i64: 1, 128>}, {pipeline_mode = #tpu.pipeline_mode<synchronous>, transform_indices = @transform_1, window_bounds = array<i64: 1, 8, 36>}, {transform_indices = @transform_2, window_bounds = array<i64: 36, 128>}, {transform_indices = @transform_3, window_bounds = array<i64: 8, 128>}, {transform_indices = @transform_4, window_bounds = array<i64: 1, 8, 1>}, {transform_indices = @transform_5, window_bounds = array<i64: 1, 8, 1>}]} {
    %c0 = arith.constant 0 : index
    %c0_0 = arith.constant 0 : index
    %0 = vector.load %arg3[%c0, %c0_0] : memref<36x128xbf16, #tpu.memory_space<vmem>>, vector<36x128xbf16>
    %c0_1 = arith.constant 0 : index
    %c0_2 = arith.constant 0 : index
    %c0_3 = arith.constant 0 : index
    %1 = vector.load %arg2[%c0_1, %c0_2, %c0_3] : memref<1x8x36xbf16, #tpu.memory_space<vmem>>, vector<1x8x36xbf16>
    %2 = vector.shape_cast %1 : vector<1x8x36xbf16> to vector<8x36xbf16>
    %cst = arith.constant dense<0.000000e+00> : vector<8x128xf32>
    %3 = tpu.matmul %2, %0, %cst {dimension_numbers = #tpu.dot_dimension_numbers<[1], [0], [0], [1], [0, 0, 1, 1], [], []>} : vector<8x36xbf16>, vector<36x128xbf16>, vector<8x128xf32> -> vector<8x128xf32>
    %c0_4 = arith.constant 0 : index
    %c0_5 = arith.constant 0 : index
    %4 = vector.load %arg1[%c0_4, %c0_5] : memref<1x128xf32, #tpu.memory_space<vmem>>, vector<1x128xf32>
    %5 = vector.broadcast %4 : vector<1x128xf32> to vector<8x128xf32>
    %6 = arith.mulf %3, %5 : vector<8x128xf32>
    %7 = arith.truncf %6 : vector<8x128xf32> to vector<8x128xbf16>
    %c0_6 = arith.constant 0 : index
    %c0_7 = arith.constant 0 : index
    %8 = vector.load %arg4[%c0_6, %c0_7] : memref<8x128xbf16, #tpu.memory_space<vmem>>, vector<8x128xbf16>
    tpu.vector_store %arg4[%c0_6, %c0_7], %7 {strides = array<i32>} : memref<8x128xbf16, #tpu.memory_space<vmem>>, vector<8x128xbf16>,
    %cst_8 = arith.constant dense<0.000000e+00> : vector<8xf32>
    %9 = vector.multi_reduction <add>, %6, %cst_8 [1] : vector<8x128xf32> to vector<8xf32>
    %10 = vector.shape_cast %9 : vector<8xf32> to vector<8x1xf32>
    %11 = vector.shape_cast %10 : vector<8x1xf32> to vector<1x8x1xf32>
    %c0_9 = arith.constant 0 : index
    %c0_10 = arith.constant 0 : index
    %c0_11 = arith.constant 0 : index
    %12 = vector.load %arg5[%c0_9, %c0_10, %c0_11] : memref<1x8x1xf32, #tpu.memory_space<vmem>>, vector<1x8x1xf32>
    tpu.vector_store %arg5[%c0_9, %c0_10, %c0_11], %11 {strides = array<i32>} : memref<1x8x1xf32, #tpu.memory_space<vmem>>, vector<1x8x1xf32>,
    %13 = arith.mulf %6, %6 : vector<8x128xf32>
    %cst_12 = arith.constant dense<0.000000e+00> : vector<8xf32>
    %14 = vector.multi_reduction <add>, %13, %cst_12 [1] : vector<8x128xf32> to vector<8xf32>
    %15 = vector.shape_cast %14 : vector<8xf32> to vector<8x1xf32>
    %16 = vector.shape_cast %15 : vector<8x1xf32> to vector<1x8x1xf32>
    %c0_13 = arith.constant 0 : index
    %c0_14 = arith.constant 0 : index
    %c0_15 = arith.constant 0 : index
    %17 = vector.load %arg6[%c0_13, %c0_14, %c0_15] : memref<1x8x1xf32, #tpu.memory_space<vmem>>, vector<1x8x1xf32>
    tpu.vector_store %arg6[%c0_13, %c0_14, %c0_15], %16 {strides = array<i32>} : memref<1x8x1xf32, #tpu.memory_space<vmem>>, vector<1x8x1xf32>,
    return
  }
  func.func @transform_0(%arg0: i32) -> (i32, i32) {
    %c0_i32 = arith.constant 0 : i32
    %c0_i32_0 = arith.constant 0 : i32
    return %c0_i32, %arg0 : i32, i32
  }
  func.func @transform_1(%arg0: i32) -> (i32, i32, i32) {
    %c0_i32 = arith.constant 0 : i32
    %c0_i32_0 = arith.constant 0 : i32
    %c0_i32_1 = arith.constant 0 : i32
    %c0_i32_2 = arith.constant 0 : i32
    return %c0_i32, %c0_i32_0, %c0_i32_1 : i32, i32, i32
  }
  func.func @transform_2(%arg0: i32) -> (i32, i32) {
    %c0_i32 = arith.constant 0 : i32
    %c0_i32_0 = arith.constant 0 : i32
    return %c0_i32, %arg0 : i32, i32
  }
  func.func @transform_3(%arg0: i32) -> (i32, i32) {
    %c0_i32 = arith.constant 0 : i32
    %c0_i32_0 = arith.constant 0 : i32
    return %c0_i32, %arg0 : i32, i32
  }
  func.func @transform_4(%arg0: i32) -> (i32, i32, i32) {
    %c0_i32 = arith.constant 0 : i32
    %c0_i32_0 = arith.constant 0 : i32
    %c0_i32_1 = arith.constant 0 : i32
    return %arg0, %c0_i32, %c0_i32_0 : i32, i32, i32
  }
  func.func @transform_5(%arg0: i32) -> (i32, i32, i32) {
    %c0_i32 = arith.constant 0 : i32
    %c0_i32_0 = arith.constant 0 : i32
    %c0_i32_1 = arith.constant 0 : i32
    return %arg0, %c0_i32, %c0_i32_0 : i32, i32, i32
  }
}

module attributes {stable_mosaic.version = 11 : i64} {
  func.func @kernel(%arg0: i32, %arg1: memref<8x128xbf16, #tpu.memory_space<vmem>>, %arg2: memref<8x1xf32, #tpu.memory_space<vmem>>, %arg3: memref<8x1xf32, #tpu.memory_space<vmem>>, %arg4: memref<1x128xf32, #tpu.memory_space<vmem>>, %arg5: memref<8x128xbf16, #tpu.memory_space<vmem>>) attributes {dimension_semantics = [#tpu.dimension_semantics<parallel>], iteration_bounds = array<i64: 2>, scalar_prefetch = 0 : i64, scratch_operands = 0 : i64, tpu.core_type = #tpu.core_type<tc>, window_params = [{transform_indices = @transform_0, window_bounds = array<i64: 8, 128>}, {pipeline_mode = #tpu.pipeline_mode<synchronous>, transform_indices = @transform_1, window_bounds = array<i64: 8, 1>}, {pipeline_mode = #tpu.pipeline_mode<synchronous>, transform_indices = @transform_2, window_bounds = array<i64: 8, 1>}, {transform_indices = @transform_3, window_bounds = array<i64: 1, 128>}, {transform_indices = @transform_4, window_bounds = array<i64: 8, 128>}]} {
    %c0 = arith.constant 0 : index
    %c0_0 = arith.constant 0 : index
    %0 = vector.load %arg1[%c0, %c0_0] : memref<8x128xbf16, #tpu.memory_space<vmem>>, vector<8x128xbf16>
    %1 = arith.extf %0 : vector<8x128xbf16> to vector<8x128xf32>
    %c0_1 = arith.constant 0 : index
    %c0_2 = arith.constant 0 : index
    %2 = vector.load %arg2[%c0_1, %c0_2] : memref<8x1xf32, #tpu.memory_space<vmem>>, vector<8x1xf32>
    %3 = vector.broadcast %2 : vector<8x1xf32> to vector<8x128xf32>
    %4 = arith.mulf %1, %3 : vector<8x128xf32>
    %c0_3 = arith.constant 0 : index
    %c0_4 = arith.constant 0 : index
    %5 = vector.load %arg3[%c0_3, %c0_4] : memref<8x1xf32, #tpu.memory_space<vmem>>, vector<8x1xf32>
    %6 = vector.broadcast %5 : vector<8x1xf32> to vector<8x128xf32>
    %7 = arith.addf %4, %6 : vector<8x128xf32>
    %cst = arith.constant 0.000000e+00 : f32
    %8 = vector.broadcast %cst : f32 to vector<8x128xf32>
    %9 = arith.maximumf %7, %8 : vector<8x128xf32>
    %c0_5 = arith.constant 0 : index
    %c0_6 = arith.constant 0 : index
    %10 = vector.load %arg4[%c0_5, %c0_6] : memref<1x128xf32, #tpu.memory_space<vmem>>, vector<1x128xf32>
    %11 = vector.broadcast %10 : vector<1x128xf32> to vector<8x128xf32>
    %12 = arith.mulf %9, %11 : vector<8x128xf32>
    %13 = arith.truncf %12 : vector<8x128xf32> to vector<8x128xbf16>
    %c0_7 = arith.constant 0 : index
    %c0_8 = arith.constant 0 : index
    %14 = vector.load %arg5[%c0_7, %c0_8] : memref<8x128xbf16, #tpu.memory_space<vmem>>, vector<8x128xbf16>
    tpu.vector_store %arg5[%c0_7, %c0_8], %13 {strides = array<i32>} : memref<8x128xbf16, #tpu.memory_space<vmem>>, vector<8x128xbf16>,
    return
  }
  func.func @transform_0(%arg0: i32) -> (i32, i32) {
    %c0_i32 = arith.constant 0 : i32
    %c0_i32_0 = arith.constant 0 : i32
    return %c0_i32, %arg0 : i32, i32
  }
  func.func @transform_1(%arg0: i32) -> (i32, i32) {
    %c0_i32 = arith.constant 0 : i32
    %c0_i32_0 = arith.constant 0 : i32
    %c0_i32_1 = arith.constant 0 : i32
    return %c0_i32, %c0_i32_0 : i32, i32
  }
  func.func @transform_2(%arg0: i32) -> (i32, i32) {
    %c0_i32 = arith.constant 0 : i32
    %c0_i32_0 = arith.constant 0 : i32
    %c0_i32_1 = arith.constant 0 : i32
    return %c0_i32, %c0_i32_0 : i32, i32
  }
  func.func @transform_3(%arg0: i32) -> (i32, i32) {
    %c0_i32 = arith.constant 0 : i32
    %c0_i32_0 = arith.constant 0 : i32
    return %c0_i32, %arg0 : i32, i32
  }
  func.func @transform_4(%arg0: i32) -> (i32, i32) {
    %c0_i32 = arith.constant 0 : i32
    %c0_i32_0 = arith.constant 0 : i32
    return %c0_i32, %arg0 : i32, i32
  }
}

module attributes {stable_mosaic.version = 11 : i64} {
  func.func @kernel(%arg0: i32, %arg1: memref<1x128xf32, #tpu.memory_space<vmem>>, %arg2: memref<9x8x8xbf16, #tpu.memory_space<vmem>>, %arg3: memref<8x128xbf16, #tpu.memory_space<vmem>>, %arg4: memref<8x128xbf16, #tpu.memory_space<vmem>>, %arg5: memref<8x128xbf16, #tpu.memory_space<vmem>>, %arg6: memref<8x128xbf16, #tpu.memory_space<vmem>>, %arg7: memref<1x8x1xf32, #tpu.memory_space<vmem>>, %arg8: memref<1x8x1xf32, #tpu.memory_space<vmem>>) attributes {dimension_semantics = [#tpu.dimension_semantics<parallel>], iteration_bounds = array<i64: 2>, scalar_prefetch = 0 : i64, scratch_operands = 0 : i64, tpu.core_type = #tpu.core_type<tc>, window_params = [{transform_indices = @transform_0, window_bounds = array<i64: 1, 128>}, {pipeline_mode = #tpu.pipeline_mode<synchronous>, transform_indices = @transform_1, window_bounds = array<i64: 9, 8, 8>}, {transform_indices = @transform_2, window_bounds = array<i64: 8, 128>}, {transform_indices = @transform_3, window_bounds = array<i64: 8, 128>}, {transform_indices = @transform_4, window_bounds = array<i64: 8, 128>}, {transform_indices = @transform_5, window_bounds = array<i64: 8, 128>}, {transform_indices = @transform_6, window_bounds = array<i64: 1, 8, 1>}, {transform_indices = @transform_7, window_bounds = array<i64: 1, 8, 1>}]} {
    %c0 = arith.constant 0 : index
    %c0_0 = arith.constant 0 : index
    %0 = vector.load %arg4[%c0, %c0_0] : memref<8x128xbf16, #tpu.memory_space<vmem>>, vector<8x128xbf16>
    %c0_1 = arith.constant 0 : index
    %c0_2 = arith.constant 0 : index
    %1 = vector.load %arg3[%c0_1, %c0_2] : memref<8x128xbf16, #tpu.memory_space<vmem>>, vector<8x128xbf16>
    %c0_3 = arith.constant 0 : index
    %c0_4 = arith.constant 0 : index
    %2 = vector.load %arg5[%c0_3, %c0_4] : memref<8x128xbf16, #tpu.memory_space<vmem>>, vector<8x128xbf16>
    %3 = tpu.concatenate %0, %1, %2 in 1 : vector<8x128xbf16>, vector<8x128xbf16>, vector<8x128xbf16> -> vector<8x384xbf16>
    %4 = vector.extract_strided_slice %3 {offsets = [0, 117], sizes = [8, 128], strides = [1, 1]} : vector<8x384xbf16> to vector<8x128xbf16>
    %c0_5 = arith.constant 0 : index
    %c0_6 = arith.constant 0 : index
    %c0_7 = arith.constant 0 : index
    %5 = vector.load %arg2[%c0_5, %c0_6, %c0_7] : memref<9x8x8xbf16, #tpu.memory_space<vmem>>, vector<1x8x8xbf16>
    %6 = vector.shape_cast %5 : vector<1x8x8xbf16> to vector<8x8xbf16>
    %cst = arith.constant dense<0.000000e+00> : vector<8x128xf32>
    %7 = tpu.matmul %6, %4, %cst {dimension_numbers = #tpu.dot_dimension_numbers<[1], [0], [0], [1], [0, 0, 1, 1], [], []>} : vector<8x8xbf16>, vector<8x128xbf16>, vector<8x128xf32> -> vector<8x128xf32>
    %8 = vector.extract_strided_slice %3 {offsets = [0, 118], sizes = [8, 128], strides = [1, 1]} : vector<8x384xbf16> to vector<8x128xbf16>
    %c1 = arith.constant 1 : index
    %c0_8 = arith.constant 0 : index
    %c0_9 = arith.constant 0 : index
    %9 = vector.load %arg2[%c1, %c0_8, %c0_9] : memref<9x8x8xbf16, #tpu.memory_space<vmem>>, vector<1x8x8xbf16>
    %10 = vector.shape_cast %9 : vector<1x8x8xbf16> to vector<8x8xbf16>
    %cst_10 = arith.constant dense<0.000000e+00> : vector<8x128xf32>
    %11 = tpu.matmul %10, %8, %cst_10 {dimension_numbers = #tpu.dot_dimension_numbers<[1], [0], [0], [1], [0, 0, 1, 1], [], []>} : vector<8x8xbf16>, vector<8x128xbf16>, vector<8x128xf32> -> vector<8x128xf32>
    %12 = arith.addf %7, %11 : vector<8x128xf32>
    %13 = vector.extract_strided_slice %3 {offsets = [0, 119], sizes = [8, 128], strides = [1, 1]} : vector<8x384xbf16> to vector<8x128xbf16>
    %c2 = arith.constant 2 : index
    %c0_11 = arith.constant 0 : index
    %c0_12 = arith.constant 0 : index
    %14 = vector.load %arg2[%c2, %c0_11, %c0_12] : memref<9x8x8xbf16, #tpu.memory_space<vmem>>, vector<1x8x8xbf16>
    %15 = vector.shape_cast %14 : vector<1x8x8xbf16> to vector<8x8xbf16>
    %cst_13 = arith.constant dense<0.000000e+00> : vector<8x128xf32>
    %16 = tpu.matmul %15, %13, %cst_13 {dimension_numbers = #tpu.dot_dimension_numbers<[1], [0], [0], [1], [0, 0, 1, 1], [], []>} : vector<8x8xbf16>, vector<8x128xbf16>, vector<8x128xf32> -> vector<8x128xf32>
    %17 = arith.addf %12, %16 : vector<8x128xf32>
    %18 = vector.extract_strided_slice %3 {offsets = [0, 127], sizes = [8, 128], strides = [1, 1]} : vector<8x384xbf16> to vector<8x128xbf16>
    %c3 = arith.constant 3 : index
    %c0_14 = arith.constant 0 : index
    %c0_15 = arith.constant 0 : index
    %19 = vector.load %arg2[%c3, %c0_14, %c0_15] : memref<9x8x8xbf16, #tpu.memory_space<vmem>>, vector<1x8x8xbf16>
    %20 = vector.shape_cast %19 : vector<1x8x8xbf16> to vector<8x8xbf16>
    %cst_16 = arith.constant dense<0.000000e+00> : vector<8x128xf32>
    %21 = tpu.matmul %20, %18, %cst_16 {dimension_numbers = #tpu.dot_dimension_numbers<[1], [0], [0], [1], [0, 0, 1, 1], [], []>} : vector<8x8xbf16>, vector<8x128xbf16>, vector<8x128xf32> -> vector<8x128xf32>
    %22 = arith.addf %17, %21 : vector<8x128xf32>
    %23 = vector.extract_strided_slice %3 {offsets = [0, 128], sizes = [8, 128], strides = [1, 1]} : vector<8x384xbf16> to vector<8x128xbf16>
    %c4 = arith.constant 4 : index
    %c0_17 = arith.constant 0 : index
    %c0_18 = arith.constant 0 : index
    %24 = vector.load %arg2[%c4, %c0_17, %c0_18] : memref<9x8x8xbf16, #tpu.memory_space<vmem>>, vector<1x8x8xbf16>
    %25 = vector.shape_cast %24 : vector<1x8x8xbf16> to vector<8x8xbf16>
    %cst_19 = arith.constant dense<0.000000e+00> : vector<8x128xf32>
    %26 = tpu.matmul %25, %23, %cst_19 {dimension_numbers = #tpu.dot_dimension_numbers<[1], [0], [0], [1], [0, 0, 1, 1], [], []>} : vector<8x8xbf16>, vector<8x128xbf16>, vector<8x128xf32> -> vector<8x128xf32>
    %27 = arith.addf %22, %26 : vector<8x128xf32>
    %28 = vector.extract_strided_slice %3 {offsets = [0, 129], sizes = [8, 128], strides = [1, 1]} : vector<8x384xbf16> to vector<8x128xbf16>
    %c5 = arith.constant 5 : index
    %c0_20 = arith.constant 0 : index
    %c0_21 = arith.constant 0 : index
    %29 = vector.load %arg2[%c5, %c0_20, %c0_21] : memref<9x8x8xbf16, #tpu.memory_space<vmem>>, vector<1x8x8xbf16>
    %30 = vector.shape_cast %29 : vector<1x8x8xbf16> to vector<8x8xbf16>
    %cst_22 = arith.constant dense<0.000000e+00> : vector<8x128xf32>
    %31 = tpu.matmul %30, %28, %cst_22 {dimension_numbers = #tpu.dot_dimension_numbers<[1], [0], [0], [1], [0, 0, 1, 1], [], []>} : vector<8x8xbf16>, vector<8x128xbf16>, vector<8x128xf32> -> vector<8x128xf32>
    %32 = arith.addf %27, %31 : vector<8x128xf32>
    %33 = vector.extract_strided_slice %3 {offsets = [0, 137], sizes = [8, 128], strides = [1, 1]} : vector<8x384xbf16> to vector<8x128xbf16>
    %c6 = arith.constant 6 : index
    %c0_23 = arith.constant 0 : index
    %c0_24 = arith.constant 0 : index
    %34 = vector.load %arg2[%c6, %c0_23, %c0_24] : memref<9x8x8xbf16, #tpu.memory_space<vmem>>, vector<1x8x8xbf16>
    %35 = vector.shape_cast %34 : vector<1x8x8xbf16> to vector<8x8xbf16>
    %cst_25 = arith.constant dense<0.000000e+00> : vector<8x128xf32>
    %36 = tpu.matmul %35, %33, %cst_25 {dimension_numbers = #tpu.dot_dimension_numbers<[1], [0], [0], [1], [0, 0, 1, 1], [], []>} : vector<8x8xbf16>, vector<8x128xbf16>, vector<8x128xf32> -> vector<8x128xf32>
    %37 = arith.addf %32, %36 : vector<8x128xf32>
    %38 = vector.extract_strided_slice %3 {offsets = [0, 138], sizes = [8, 128], strides = [1, 1]} : vector<8x384xbf16> to vector<8x128xbf16>
    %c7 = arith.constant 7 : index
    %c0_26 = arith.constant 0 : index
    %c0_27 = arith.constant 0 : index
    %39 = vector.load %arg2[%c7, %c0_26, %c0_27] : memref<9x8x8xbf16, #tpu.memory_space<vmem>>, vector<1x8x8xbf16>
    %40 = vector.shape_cast %39 : vector<1x8x8xbf16> to vector<8x8xbf16>
    %cst_28 = arith.constant dense<0.000000e+00> : vector<8x128xf32>
    %41 = tpu.matmul %40, %38, %cst_28 {dimension_numbers = #tpu.dot_dimension_numbers<[1], [0], [0], [1], [0, 0, 1, 1], [], []>} : vector<8x8xbf16>, vector<8x128xbf16>, vector<8x128xf32> -> vector<8x128xf32>
    %42 = arith.addf %37, %41 : vector<8x128xf32>
    %43 = vector.extract_strided_slice %3 {offsets = [0, 139], sizes = [8, 128], strides = [1, 1]} : vector<8x384xbf16> to vector<8x128xbf16>
    %c8 = arith.constant 8 : index
    %c0_29 = arith.constant 0 : index
    %c0_30 = arith.constant 0 : index
    %44 = vector.load %arg2[%c8, %c0_29, %c0_30] : memref<9x8x8xbf16, #tpu.memory_space<vmem>>, vector<1x8x8xbf16>
    %45 = vector.shape_cast %44 : vector<1x8x8xbf16> to vector<8x8xbf16>
    %cst_31 = arith.constant dense<0.000000e+00> : vector<8x128xf32>
    %46 = tpu.matmul %45, %43, %cst_31 {dimension_numbers = #tpu.dot_dimension_numbers<[1], [0], [0], [1], [0, 0, 1, 1], [], []>} : vector<8x8xbf16>, vector<8x128xbf16>, vector<8x128xf32> -> vector<8x128xf32>
    %47 = arith.addf %42, %46 : vector<8x128xf32>
    %c0_32 = arith.constant 0 : index
    %c0_33 = arith.constant 0 : index
    %48 = vector.load %arg1[%c0_32, %c0_33] : memref<1x128xf32, #tpu.memory_space<vmem>>, vector<1x128xf32>
    %49 = vector.broadcast %48 : vector<1x128xf32> to vector<8x128xf32>
    %50 = arith.mulf %47, %49 : vector<8x128xf32>
    %51 = arith.truncf %50 : vector<8x128xf32> to vector<8x128xbf16>
    %c0_34 = arith.constant 0 : index
    %c0_35 = arith.constant 0 : index
    %52 = vector.load %arg6[%c0_34, %c0_35] : memref<8x128xbf16, #tpu.memory_space<vmem>>, vector<8x128xbf16>
    tpu.vector_store %arg6[%c0_34, %c0_35], %51 {strides = array<i32>} : memref<8x128xbf16, #tpu.memory_space<vmem>>, vector<8x128xbf16>,
    %cst_36 = arith.constant dense<0.000000e+00> : vector<8xf32>
    %53 = vector.multi_reduction <add>, %50, %cst_36 [1] : vector<8x128xf32> to vector<8xf32>
    %54 = vector.shape_cast %53 : vector<8xf32> to vector<8x1xf32>
    %55 = vector.shape_cast %54 : vector<8x1xf32> to vector<1x8x1xf32>
    %c0_37 = arith.constant 0 : index
    %c0_38 = arith.constant 0 : index
    %c0_39 = arith.constant 0 : index
    %56 = vector.load %arg7[%c0_37, %c0_38, %c0_39] : memref<1x8x1xf32, #tpu.memory_space<vmem>>, vector<1x8x1xf32>
    tpu.vector_store %arg7[%c0_37, %c0_38, %c0_39], %55 {strides = array<i32>} : memref<1x8x1xf32, #tpu.memory_space<vmem>>, vector<1x8x1xf32>,
    %57 = arith.mulf %50, %50 : vector<8x128xf32>
    %cst_40 = arith.constant dense<0.000000e+00> : vector<8xf32>
    %58 = vector.multi_reduction <add>, %57, %cst_40 [1] : vector<8x128xf32> to vector<8xf32>
    %59 = vector.shape_cast %58 : vector<8xf32> to vector<8x1xf32>
    %60 = vector.shape_cast %59 : vector<8x1xf32> to vector<1x8x1xf32>
    %c0_41 = arith.constant 0 : index
    %c0_42 = arith.constant 0 : index
    %c0_43 = arith.constant 0 : index
    %61 = vector.load %arg8[%c0_41, %c0_42, %c0_43] : memref<1x8x1xf32, #tpu.memory_space<vmem>>, vector<1x8x1xf32>
    tpu.vector_store %arg8[%c0_41, %c0_42, %c0_43], %60 {strides = array<i32>} : memref<1x8x1xf32, #tpu.memory_space<vmem>>, vector<1x8x1xf32>,
    return
  }
  func.func @transform_0(%arg0: i32) -> (i32, i32) {
    %c0_i32 = arith.constant 0 : i32
    %c0_i32_0 = arith.constant 0 : i32
    return %c0_i32, %arg0 : i32, i32
  }
  func.func @transform_1(%arg0: i32) -> (i32, i32, i32) {
    %c0_i32 = arith.constant 0 : i32
    %c0_i32_0 = arith.constant 0 : i32
    %c0_i32_1 = arith.constant 0 : i32
    %c0_i32_2 = arith.constant 0 : i32
    return %c0_i32, %c0_i32_0, %c0_i32_1 : i32, i32, i32
  }
  func.func @transform_2(%arg0: i32) -> (i32, i32) {
    %c0_i32 = arith.constant 0 : i32
    %c0_i32_0 = arith.constant 0 : i32
    return %c0_i32, %arg0 : i32, i32
  }
  func.func @transform_3(%arg0: i32) -> (i32, i32) {
    %c1_i32 = arith.constant 1 : i32
    %0 = arith.muli %arg0, %c1_i32 : i32
    %c1_i32_0 = arith.constant 1 : i32
    %1 = arith.subi %0, %c1_i32_0 : i32
    %c0_i32 = arith.constant 0 : i32
    %2 = arith.maxsi %1, %c0_i32 : i32
    %c0_i32_1 = arith.constant 0 : i32
    %c0_i32_2 = arith.constant 0 : i32
    return %c0_i32_1, %2 : i32, i32
  }
  func.func @transform_4(%arg0: i32) -> (i32, i32) {
    %c1_i32 = arith.constant 1 : i32
    %0 = arith.muli %arg0, %c1_i32 : i32
    %c1_i32_0 = arith.constant 1 : i32
    %1 = arith.addi %0, %c1_i32_0 : i32
    %c1_i32_1 = arith.constant 1 : i32
    %2 = arith.minsi %1, %c1_i32_1 : i32
    %c0_i32 = arith.constant 0 : i32
    %c0_i32_2 = arith.constant 0 : i32
    return %c0_i32, %2 : i32, i32
  }
  func.func @transform_5(%arg0: i32) -> (i32, i32) {
    %c0_i32 = arith.constant 0 : i32
    %c0_i32_0 = arith.constant 0 : i32
    return %c0_i32, %arg0 : i32, i32
  }
  func.func @transform_6(%arg0: i32) -> (i32, i32, i32) {
    %c0_i32 = arith.constant 0 : i32
    %c0_i32_0 = arith.constant 0 : i32
    %c0_i32_1 = arith.constant 0 : i32
    return %arg0, %c0_i32, %c0_i32_0 : i32, i32, i32
  }
  func.func @transform_7(%arg0: i32) -> (i32, i32, i32) {
    %c0_i32 = arith.constant 0 : i32
    %c0_i32_0 = arith.constant 0 : i32
    %c0_i32_1 = arith.constant 0 : i32
    return %arg0, %c0_i32, %c0_i32_0 : i32, i32, i32
  }
}

module attributes {stable_mosaic.version = 11 : i64} {
  func.func @kernel(%arg0: i32, %arg1: memref<1x128xf32, #tpu.memory_space<vmem>>, %arg2: memref<1x8x4xbf16, #tpu.memory_space<vmem>>, %arg3: memref<4x128xbf16, #tpu.memory_space<vmem>>, %arg4: memref<8x128xbf16, #tpu.memory_space<vmem>>, %arg5: memref<1x8x1xf32, #tpu.memory_space<vmem>>, %arg6: memref<1x8x1xf32, #tpu.memory_space<vmem>>) attributes {dimension_semantics = [#tpu.dimension_semantics<parallel>], iteration_bounds = array<i64: 2>, scalar_prefetch = 0 : i64, scratch_operands = 0 : i64, tpu.core_type = #tpu.core_type<tc>, window_params = [{transform_indices = @transform_0, window_bounds = array<i64: 1, 128>}, {pipeline_mode = #tpu.pipeline_mode<synchronous>, transform_indices = @transform_1, window_bounds = array<i64: 1, 8, 4>}, {transform_indices = @transform_2, window_bounds = array<i64: 4, 128>}, {transform_indices = @transform_3, window_bounds = array<i64: 8, 128>}, {transform_indices = @transform_4, window_bounds = array<i64: 1, 8, 1>}, {transform_indices = @transform_5, window_bounds = array<i64: 1, 8, 1>}]} {
    %c0 = arith.constant 0 : index
    %c0_0 = arith.constant 0 : index
    %0 = vector.load %arg3[%c0, %c0_0] : memref<4x128xbf16, #tpu.memory_space<vmem>>, vector<4x128xbf16>
    %c0_1 = arith.constant 0 : index
    %c0_2 = arith.constant 0 : index
    %c0_3 = arith.constant 0 : index
    %1 = vector.load %arg2[%c0_1, %c0_2, %c0_3] : memref<1x8x4xbf16, #tpu.memory_space<vmem>>, vector<1x8x4xbf16>
    %2 = vector.shape_cast %1 : vector<1x8x4xbf16> to vector<8x4xbf16>
    %cst = arith.constant dense<0.000000e+00> : vector<8x128xf32>
    %3 = tpu.matmul %2, %0, %cst {dimension_numbers = #tpu.dot_dimension_numbers<[1], [0], [0], [1], [0, 0, 1, 1], [], []>} : vector<8x4xbf16>, vector<4x128xbf16>, vector<8x128xf32> -> vector<8x128xf32>
    %c0_4 = arith.constant 0 : index
    %c0_5 = arith.constant 0 : index
    %4 = vector.load %arg1[%c0_4, %c0_5] : memref<1x128xf32, #tpu.memory_space<vmem>>, vector<1x128xf32>
    %5 = vector.broadcast %4 : vector<1x128xf32> to vector<8x128xf32>
    %6 = arith.mulf %3, %5 : vector<8x128xf32>
    %7 = arith.truncf %6 : vector<8x128xf32> to vector<8x128xbf16>
    %c0_6 = arith.constant 0 : index
    %c0_7 = arith.constant 0 : index
    %8 = vector.load %arg4[%c0_6, %c0_7] : memref<8x128xbf16, #tpu.memory_space<vmem>>, vector<8x128xbf16>
    tpu.vector_store %arg4[%c0_6, %c0_7], %7 {strides = array<i32>} : memref<8x128xbf16, #tpu.memory_space<vmem>>, vector<8x128xbf16>,
    %cst_8 = arith.constant dense<0.000000e+00> : vector<8xf32>
    %9 = vector.multi_reduction <add>, %6, %cst_8 [1] : vector<8x128xf32> to vector<8xf32>
    %10 = vector.shape_cast %9 : vector<8xf32> to vector<8x1xf32>
    %11 = vector.shape_cast %10 : vector<8x1xf32> to vector<1x8x1xf32>
    %c0_9 = arith.constant 0 : index
    %c0_10 = arith.constant 0 : index
    %c0_11 = arith.constant 0 : index
    %12 = vector.load %arg5[%c0_9, %c0_10, %c0_11] : memref<1x8x1xf32, #tpu.memory_space<vmem>>, vector<1x8x1xf32>
    tpu.vector_store %arg5[%c0_9, %c0_10, %c0_11], %11 {strides = array<i32>} : memref<1x8x1xf32, #tpu.memory_space<vmem>>, vector<1x8x1xf32>,
    %13 = arith.mulf %6, %6 : vector<8x128xf32>
    %cst_12 = arith.constant dense<0.000000e+00> : vector<8xf32>
    %14 = vector.multi_reduction <add>, %13, %cst_12 [1] : vector<8x128xf32> to vector<8xf32>
    %15 = vector.shape_cast %14 : vector<8xf32> to vector<8x1xf32>
    %16 = vector.shape_cast %15 : vector<8x1xf32> to vector<1x8x1xf32>
    %c0_13 = arith.constant 0 : index
    %c0_14 = arith.constant 0 : index
    %c0_15 = arith.constant 0 : index
    %17 = vector.load %arg6[%c0_13, %c0_14, %c0_15] : memref<1x8x1xf32, #tpu.memory_space<vmem>>, vector<1x8x1xf32>
    tpu.vector_store %arg6[%c0_13, %c0_14, %c0_15], %16 {strides = array<i32>} : memref<1x8x1xf32, #tpu.memory_space<vmem>>, vector<1x8x1xf32>,
    return
  }
  func.func @transform_0(%arg0: i32) -> (i32, i32) {
    %c0_i32 = arith.constant 0 : i32
    %c0_i32_0 = arith.constant 0 : i32
    return %c0_i32, %arg0 : i32, i32
  }
  func.func @transform_1(%arg0: i32) -> (i32, i32, i32) {
    %c0_i32 = arith.constant 0 : i32
    %c0_i32_0 = arith.constant 0 : i32
    %c0_i32_1 = arith.constant 0 : i32
    %c0_i32_2 = arith.constant 0 : i32
    return %c0_i32, %c0_i32_0, %c0_i32_1 : i32, i32, i32
  }
  func.func @transform_2(%arg0: i32) -> (i32, i32) {
    %c0_i32 = arith.constant 0 : i32
    %c0_i32_0 = arith.constant 0 : i32
    return %c0_i32, %arg0 : i32, i32
  }
  func.func @transform_3(%arg0: i32) -> (i32, i32) {
    %c0_i32 = arith.constant 0 : i32
    %c0_i32_0 = arith.constant 0 : i32
    return %c0_i32, %arg0 : i32, i32
  }
  func.func @transform_4(%arg0: i32) -> (i32, i32, i32) {
    %c0_i32 = arith.constant 0 : i32
    %c0_i32_0 = arith.constant 0 : i32
    %c0_i32_1 = arith.constant 0 : i32
    return %arg0, %c0_i32, %c0_i32_0 : i32, i32, i32
  }
  func.func @transform_5(%arg0: i32) -> (i32, i32, i32) {
    %c0_i32 = arith.constant 0 : i32
    %c0_i32_0 = arith.constant 0 : i32
    %c0_i32_1 = arith.constant 0 : i32
    return %arg0, %c0_i32, %c0_i32_0 : i32, i32, i32
  }
}

module attributes {stable_mosaic.version = 11 : i64} {
  func.func @kernel(%arg0: i32, %arg1: memref<8x128xbf16, #tpu.memory_space<vmem>>, %arg2: memref<8x1xf32, #tpu.memory_space<vmem>>, %arg3: memref<8x1xf32, #tpu.memory_space<vmem>>, %arg4: memref<1x128xf32, #tpu.memory_space<vmem>>, %arg5: memref<8x128xbf16, #tpu.memory_space<vmem>>, %arg6: memref<8x128xbf16, #tpu.memory_space<vmem>>) attributes {dimension_semantics = [#tpu.dimension_semantics<parallel>], iteration_bounds = array<i64: 2>, scalar_prefetch = 0 : i64, scratch_operands = 0 : i64, tpu.core_type = #tpu.core_type<tc>, window_params = [{transform_indices = @transform_0, window_bounds = array<i64: 8, 128>}, {pipeline_mode = #tpu.pipeline_mode<synchronous>, transform_indices = @transform_1, window_bounds = array<i64: 8, 1>}, {pipeline_mode = #tpu.pipeline_mode<synchronous>, transform_indices = @transform_2, window_bounds = array<i64: 8, 1>}, {transform_indices = @transform_3, window_bounds = array<i64: 1, 128>}, {transform_indices = @transform_4, window_bounds = array<i64: 8, 128>}, {transform_indices = @transform_5, window_bounds = array<i64: 8, 128>}]} {
    %c0 = arith.constant 0 : index
    %c0_0 = arith.constant 0 : index
    %0 = vector.load %arg1[%c0, %c0_0] : memref<8x128xbf16, #tpu.memory_space<vmem>>, vector<8x128xbf16>
    %1 = arith.extf %0 : vector<8x128xbf16> to vector<8x128xf32>
    %c0_1 = arith.constant 0 : index
    %c0_2 = arith.constant 0 : index
    %2 = vector.load %arg2[%c0_1, %c0_2] : memref<8x1xf32, #tpu.memory_space<vmem>>, vector<8x1xf32>
    %3 = vector.broadcast %2 : vector<8x1xf32> to vector<8x128xf32>
    %4 = arith.mulf %1, %3 : vector<8x128xf32>
    %c0_3 = arith.constant 0 : index
    %c0_4 = arith.constant 0 : index
    %5 = vector.load %arg3[%c0_3, %c0_4] : memref<8x1xf32, #tpu.memory_space<vmem>>, vector<8x1xf32>
    %6 = vector.broadcast %5 : vector<8x1xf32> to vector<8x128xf32>
    %7 = arith.addf %4, %6 : vector<8x128xf32>
    %c0_5 = arith.constant 0 : index
    %c0_6 = arith.constant 0 : index
    %8 = vector.load %arg5[%c0_5, %c0_6] : memref<8x128xbf16, #tpu.memory_space<vmem>>, vector<8x128xbf16>
    %9 = arith.extf %8 : vector<8x128xbf16> to vector<8x128xf32>
    %10 = arith.addf %7, %9 : vector<8x128xf32>
    %cst = arith.constant 0.000000e+00 : f32
    %11 = vector.broadcast %cst : f32 to vector<8x128xf32>
    %12 = arith.maximumf %10, %11 : vector<8x128xf32>
    %c0_7 = arith.constant 0 : index
    %c0_8 = arith.constant 0 : index
    %13 = vector.load %arg4[%c0_7, %c0_8] : memref<1x128xf32, #tpu.memory_space<vmem>>, vector<1x128xf32>
    %14 = vector.broadcast %13 : vector<1x128xf32> to vector<8x128xf32>
    %15 = arith.mulf %12, %14 : vector<8x128xf32>
    %16 = arith.truncf %15 : vector<8x128xf32> to vector<8x128xbf16>
    %c0_9 = arith.constant 0 : index
    %c0_10 = arith.constant 0 : index
    %17 = vector.load %arg6[%c0_9, %c0_10] : memref<8x128xbf16, #tpu.memory_space<vmem>>, vector<8x128xbf16>
    tpu.vector_store %arg6[%c0_9, %c0_10], %16 {strides = array<i32>} : memref<8x128xbf16, #tpu.memory_space<vmem>>, vector<8x128xbf16>,
    return
  }
  func.func @transform_0(%arg0: i32) -> (i32, i32) {
    %c0_i32 = arith.constant 0 : i32
    %c0_i32_0 = arith.constant 0 : i32
    return %c0_i32, %arg0 : i32, i32
  }
  func.func @transform_1(%arg0: i32) -> (i32, i32) {
    %c0_i32 = arith.constant 0 : i32
    %c0_i32_0 = arith.constant 0 : i32
    %c0_i32_1 = arith.constant 0 : i32
    return %c0_i32, %c0_i32_0 : i32, i32
  }
  func.func @transform_2(%arg0: i32) -> (i32, i32) {
    %c0_i32 = arith.constant 0 : i32
    %c0_i32_0 = arith.constant 0 : i32
    %c0_i32_1 = arith.constant 0 : i32
    return %c0_i32, %c0_i32_0 : i32, i32
  }
  func.func @transform_3(%arg0: i32) -> (i32, i32) {
    %c0_i32 = arith.constant 0 : i32
    %c0_i32_0 = arith.constant 0 : i32
    return %c0_i32, %arg0 : i32, i32
  }
  func.func @transform_4(%arg0: i32) -> (i32, i32) {
    %c0_i32 = arith.constant 0 : i32
    %c0_i32_0 = arith.constant 0 : i32
    return %c0_i32, %arg0 : i32, i32
  }
  func.func @transform_5(%arg0: i32) -> (i32, i32) {
    %c0_i32 = arith.constant 0 : i32
    %c0_i32_0 = arith.constant 0 : i32
    return %c0_i32, %arg0 : i32, i32
  }
}

module attributes {stable_mosaic.version = 11 : i64} {
  func.func @kernel(%arg0: i32, %arg1: memref<8x128xbf16, #tpu.memory_space<vmem>>, %arg2: memref<8x1xf32, #tpu.memory_space<vmem>>, %arg3: memref<8x1xf32, #tpu.memory_space<vmem>>, %arg4: memref<1x128xf32, #tpu.memory_space<vmem>>, %arg5: memref<8x128xbf16, #tpu.memory_space<vmem>>) attributes {dimension_semantics = [#tpu.dimension_semantics<parallel>], iteration_bounds = array<i64: 2>, scalar_prefetch = 0 : i64, scratch_operands = 0 : i64, tpu.core_type = #tpu.core_type<tc>, window_params = [{transform_indices = @transform_0, window_bounds = array<i64: 8, 128>}, {pipeline_mode = #tpu.pipeline_mode<synchronous>, transform_indices = @transform_1, window_bounds = array<i64: 8, 1>}, {pipeline_mode = #tpu.pipeline_mode<synchronous>, transform_indices = @transform_2, window_bounds = array<i64: 8, 1>}, {transform_indices = @transform_3, window_bounds = array<i64: 1, 128>}, {transform_indices = @transform_4, window_bounds = array<i64: 8, 128>}]} {
    %c0 = arith.constant 0 : index
    %c0_0 = arith.constant 0 : index
    %0 = vector.load %arg1[%c0, %c0_0] : memref<8x128xbf16, #tpu.memory_space<vmem>>, vector<8x128xbf16>
    %1 = arith.extf %0 : vector<8x128xbf16> to vector<8x128xf32>
    %c0_1 = arith.constant 0 : index
    %c0_2 = arith.constant 0 : index
    %2 = vector.load %arg2[%c0_1, %c0_2] : memref<8x1xf32, #tpu.memory_space<vmem>>, vector<8x1xf32>
    %3 = vector.broadcast %2 : vector<8x1xf32> to vector<8x128xf32>
    %4 = arith.mulf %1, %3 : vector<8x128xf32>
    %c0_3 = arith.constant 0 : index
    %c0_4 = arith.constant 0 : index
    %5 = vector.load %arg3[%c0_3, %c0_4] : memref<8x1xf32, #tpu.memory_space<vmem>>, vector<8x1xf32>
    %6 = vector.broadcast %5 : vector<8x1xf32> to vector<8x128xf32>
    %7 = arith.addf %4, %6 : vector<8x128xf32>
    %c0_5 = arith.constant 0 : index
    %c0_6 = arith.constant 0 : index
    %8 = vector.load %arg4[%c0_5, %c0_6] : memref<1x128xf32, #tpu.memory_space<vmem>>, vector<1x128xf32>
    %9 = vector.broadcast %8 : vector<1x128xf32> to vector<8x128xf32>
    %10 = arith.mulf %7, %9 : vector<8x128xf32>
    %11 = arith.truncf %10 : vector<8x128xf32> to vector<8x128xbf16>
    %c0_7 = arith.constant 0 : index
    %c0_8 = arith.constant 0 : index
    %12 = vector.load %arg5[%c0_7, %c0_8] : memref<8x128xbf16, #tpu.memory_space<vmem>>, vector<8x128xbf16>
    tpu.vector_store %arg5[%c0_7, %c0_8], %11 {strides = array<i32>} : memref<8x128xbf16, #tpu.memory_space<vmem>>, vector<8x128xbf16>,
    return
  }
  func.func @transform_0(%arg0: i32) -> (i32, i32) {
    %c0_i32 = arith.constant 0 : i32
    %c0_i32_0 = arith.constant 0 : i32
    return %c0_i32, %arg0 : i32, i32
  }
  func.func @transform_1(%arg0: i32) -> (i32, i32) {
    %c0_i32 = arith.constant 0 : i32
    %c0_i32_0 = arith.constant 0 : i32
    %c0_i32_1 = arith.constant 0 : i32
    return %c0_i32, %c0_i32_0 : i32, i32
  }
  func.func @transform_2(%arg0: i32) -> (i32, i32) {
    %c0_i32 = arith.constant 0 : i32
    %c0_i32_0 = arith.constant 0 : i32
    %c0_i32_1 = arith.constant 0 : i32
    return %c0_i32, %c0_i32_0 : i32, i32
  }
  func.func @transform_3(%arg0: i32) -> (i32, i32) {
    %c0_i32 = arith.constant 0 : i32
    %c0_i32_0 = arith.constant 0 : i32
    return %c0_i32, %arg0 : i32, i32
  }
  func.func @transform_4(%arg0: i32) -> (i32, i32) {
    %c0_i32 = arith.constant 0 : i32
    %c0_i32_0 = arith.constant 0 : i32
    return %c0_i32, %arg0 : i32, i32
  }
}

</mosaic_0001>

<llo_original>
// kernel: down_conv_res_block.16
$region0: #{down_conv_res_block.16}
  #allocation0 [shape = 'u32[]', space=smem, size = 0x4, offset = 0x4, fixed_abs, tag = 'smem constant byte address 0x4 - core index']
  #allocation1 [shape = 'u32[144,128]{1,0:T(1,128)}', space=vmem, size = 0x12000, scoped, tag = 'internal scratch']
  %s0 = inlined_call_operand.vmem [shape: f32[1,256], index: 0, kind: input, shape index: {}]
  %s1 = inlined_call_operand.vmem [shape: bf16[1,8,36], index: 1, kind: input, shape index: {}]
  %s2 = inlined_call_operand.vmem [shape: bf16[36,256], index: 2, kind: input, shape index: {}]
  %s3 = inlined_call_operand.vmem [shape: bf16[8,256], index: 3, kind: output, shape index: {0}]
  %s4 = inlined_call_operand.vmem [shape: f32[2,8,1], index: 4, kind: output, shape index: {1}]
  %s5 = inlined_call_operand.vmem [shape: f32[2,8,1], index: 5, kind: output, shape index: {2}]
  %6 = xla_tuple %s3, %s4, %s5
  %s7 = sld [smem:[#allocation0]]
  $region102: #{down_conv_res_block.16} parent=0
    _
  %s9 = ssub.s32 1, %s7
  %s10 = scalar_select 0, %s9, %s7
  $region1: #{down_conv_res_block.16} parent=0
    #allocation2 [shape = 'u8[20480]{0}', space=vmem, size = 0x5000, scoped, tag = 'input window, operand 2']
    loop: start=0, step=1, limit=4
    $region2: #{down_conv_res_block.16} parent=1 // loop_pre_header
      _
    $region3: #{down_conv_res_block.16} parent=1 // loop_header
      %s12 = sphi 0, %s16
      %p13 = scmp.ge.s32.totalorder %s12, 4
      %s22 = sphi 0, %s24
      %s25 = sphi 0, %s22
      %s26 = sphi 0, %s25
      %s42 = sphi 0, %s26
      %s46 = sphi 0, %s46
      %s48 = sphi 0, %s46
      %s49 = sphi 0, %s48
      %s63 = sphi 0, %s49
      %s69 = sphi 0, %s71
      %s72 = sphi 0, %s69
      %s73 = sphi 0, %s72
      %s89 = sphi 0, %s73
      %s95 = sphi 0, %s97
      %s98 = sphi 0, %s95
      %s99 = sphi 0, %s98
      %s115 = sphi 0, %s99
      %s121 = sphi 0, %s123
      %s124 = sphi 0, %s121
      %s125 = sphi 0, %s124
      %s141 = sphi 0, %s125
      %s147 = sphi 0, %s149
      %s150 = sphi 0, %s147
      %s151 = sphi 0, %s150
      %s167 = sphi 0, %s151
    $region4: #{down_conv_res_block.16} parent=1 // loop_header_branch
      %15 = sbr.rel (%p13) target = $region8
    $region5: #{down_conv_res_block.16} parent=1 // loop_body
      %s17 = ssub.s32 %s12, 1
      %s18 = ssub.s32 %s12, 2
      %s19 = sadd.s32 %s12, 1
      %s20 = ssub.s32 %s12, %s19
      %p21 = scmp.eq.s32.totalorder %s20, 0
      %s23 = sadd.s32 %s22, 1
      %s24 = scalar_select %p21, %s22, %s23
      %p27 = pneg %p21
      %p28 = scmp.eq.s32.totalorder %s12, 1
      %p29 = por %p27, %p28
      %p30 = scmp.ne.s32.totalorder %s22, %s25
      %p31 = scmp.eq.s32.totalorder %s12, 0
      %p32 = por %p30, %p31
      %p33 = scmp.ne.s32.totalorder %s22, %s25
      %p34 = scmp.eq.s32.totalorder %s17, 1
      %p35 = por %p33, %p34
      %p36 = scmp.ne.s32.totalorder %s25, %s26
      %p37 = scmp.eq.s32.totalorder %s17, 0
      %p38 = por %p36, %p37
      %p39 = scmp.ne.s32.totalorder %s25, %s26
      %p40 = scmp.eq.s32.totalorder %s18, 1
      %p41 = por %p39, %p40
      %p43 = scmp.ne.s32.totalorder %s26, %s42
      %p44 = scmp.eq.s32.totalorder %s18, 0
      %p45 = por %p43, %p44
      %s47 = sadd.s32 %s46, 1
      %p50 = scmp.eq.s32.totalorder %s12, 1
      %p51 = scmp.ne.s32.totalorder %s46, %s48
      %p52 = scmp.eq.s32.totalorder %s12, 0
      %p53 = por %p51, %p52
      %p54 = scmp.ne.s32.totalorder %s46, %s48
      %p55 = scmp.eq.s32.totalorder %s17, 1
      %p56 = por %p54, %p55
      %p57 = scmp.ne.s32.totalorder %s48, %s49
      %p58 = scmp.eq.s32.totalorder %s17, 0
      %p59 = por %p57, %p58
      %p60 = scmp.ne.s32.totalorder %s48, %s49
      %p61 = scmp.eq.s32.totalorder %s18, 1
      %p62 = por %p60, %p61
      %p64 = scmp.ne.s32.totalorder %s49, %s63
      %p65 = scmp.eq.s32.totalorder %s18, 0
      %p66 = por %p64, %p65
      %s67 = ssub.s32 %s12, %s19
      %p68 = scmp.eq.s32.totalorder %s67, 0
      %s70 = sadd.s32 %s69, 1
      %s71 = scalar_select %p68, %s69, %s70
      %p74 = pneg %p68
      %p75 = scmp.eq.s32.totalorder %s12, 1
      %p76 = por %p74, %p75
      %p77 = scmp.ne.s32.totalorder %s69, %s72
      %p78 = scmp.eq.s32.totalorder %s12, 0
      %p79 = por %p77, %p78
      %p80 = scmp.ne.s32.totalorder %s69, %s72
      %p81 = scmp.eq.s32.totalorder %s17, 1
      %p82 = por %p80, %p81
      %p83 = scmp.ne.s32.totalorder %s72, %s73
      %p84 = scmp.eq.s32.totalorder %s17, 0
      %p85 = por %p83, %p84
      %p86 = scmp.ne.s32.totalorder %s72, %s73
      %p87 = scmp.eq.s32.totalorder %s18, 1
      %p88 = por %p86, %p87
      %p90 = scmp.ne.s32.totalorder %s73, %s89
      %p91 = scmp.eq.s32.totalorder %s18, 0
      %p92 = por %p90, %p91
      %s93 = ssub.s32 %s12, %s19
      %p94 = scmp.eq.s32.totalorder %s93, 0
      %s96 = sadd.s32 %s95, 1
      %s97 = scalar_select %p94, %s95, %s96
      %p100 = pneg %p94
      %p101 = scmp.eq.s32.totalorder %s12, 1
      %p102 = por %p100, %p101
      %p103 = scmp.ne.s32.totalorder %s95, %s98
      %p104 = scmp.eq.s32.totalorder %s12, 0
      %p105 = por %p103, %p104
      %p106 = scmp.ne.s32.totalorder %s95, %s98
      %p107 = scmp.eq.s32.totalorder %s17, 1
      %p108 = por %p106, %p107
      %p109 = scmp.ne.s32.totalorder %s98, %s99
      %p110 = scmp.eq.s32.totalorder %s17, 0
      %p111 = por %p109, %p110
      %p112 = scmp.ne.s32.totalorder %s98, %s99
      %p113 = scmp.eq.s32.totalorder %s18, 1
      %p114 = por %p112, %p113
      %p116 = scmp.ne.s32.totalorder %s99, %s115
      %p117 = scmp.eq.s32.totalorder %s18, 0
      %p118 = por %p116, %p117
      %s119 = ssub.s32 %s12, %s19
      %p120 = scmp.eq.s32.totalorder %s119, 0
      %s122 = sadd.s32 %s121, 1
      %s123 = scalar_select %p120, %s121, %s122
      %p126 = pneg %p120
      %p127 = scmp.eq.s32.totalorder %s12, 1
      %p128 = por %p126, %p127
      %p129 = scmp.ne.s32.totalorder %s121, %s124
      %p130 = scmp.eq.s32.totalorder %s12, 0
      %p131 = por %p129, %p130
      %p132 = scmp.ne.s32.totalorder %s121, %s124
      %p133 = scmp.eq.s32.totalorder %s17, 1
      %p134 = por %p132, %p133
      %p135 = scmp.ne.s32.totalorder %s124, %s125
      %p136 = scmp.eq.s32.totalorder %s17, 0
      %p137 = por %p135, %p136
      %p138 = scmp.ne.s32.totalorder %s124, %s125
      %p139 = scmp.eq.s32.totalorder %s18, 1
      %p140 = por %p138, %p139
      %p142 = scmp.ne.s32.totalorder %s125, %s141
      %p143 = scmp.eq.s32.totalorder %s18, 0
      %p144 = por %p142, %p143
      %s145 = ssub.s32 %s12, %s19
      %p146 = scmp.eq.s32.totalorder %s145, 0
      %s148 = sadd.s32 %s147, 1
      %s149 = scalar_select %p146, %s147, %s148
      %p152 = pneg %p146
      %p153 = scmp.eq.s32.totalorder %s12, 1
      %p154 = por %p152, %p153
      %p155 = scmp.ne.s32.totalorder %s147, %s150
      %p156 = scmp.eq.s32.totalorder %s12, 0
      %p157 = por %p155, %p156
      %p158 = scmp.ne.s32.totalorder %s147, %s150
      %p159 = scmp.eq.s32.totalorder %s17, 1
      %p160 = por %p158, %p159
      %p161 = scmp.ne.s32.totalorder %s150, %s151
      %p162 = scmp.eq.s32.totalorder %s17, 0
      %p163 = por %p161, %p162
      %p164 = scmp.ne.s32.totalorder %s150, %s151
      %p165 = scmp.eq.s32.totalorder %s18, 1
      %p166 = por %p164, %p165
      %p168 = scmp.ne.s32.totalorder %s151, %s167
      %p169 = scmp.eq.s32.totalorder %s18, 0
      %p170 = por %p168, %p169
      %p171 = scmp.le.s32.totalorder 1, %s12
      %p172 = scmp.lt.s32.totalorder %s12, 3
      %p173 = pnand %p171, %p172
      %p174 = pneg %p173
      // Predicated region
      $region9: #{down_conv_res_block.16} parent=5 // pred_check
        _
      $region10: #{down_conv_res_block.16} parent=5 // pred_check_branch
        %176 = sbr.rel (%p173) target = $region12
      $region11: #{down_conv_res_block.16} parent=5 // pred_region
        %s177 = ssub.s32 %s12, 1
        // Predicated region
        $region13: #{down_conv_res_block.16} parent=11 // pred_check
          %p178 = pneg %p59
        $region14: #{down_conv_res_block.16} parent=11 // pred_check_branch
          %180 = sbr.rel (%p178) target = $region16
        $region15: #{down_conv_res_block.16} parent=11 // pred_region
          _
        $region16: #{down_conv_res_block.16} parent=11 // pred_fallthru
          _
      $region12: #{down_conv_res_block.16} parent=5 // pred_fallthru
        _
      %p181 = scmp.lt.s32.totalorder %s12, 2
      // Predicated region
      $region17: #{down_conv_res_block.16} parent=5 // pred_check
        %p182 = pneg %p181
      $region18: #{down_conv_res_block.16} parent=5 // pred_check_branch
        %184 = sbr.rel (%p182) target = $region20
      $region19: #{down_conv_res_block.16} parent=5 // pred_region
        // Predicated region
        $region21: #{down_conv_res_block.16} parent=19 // pred_check
          %p185 = pneg %p32
        $region22: #{down_conv_res_block.16} parent=19 // pred_check_branch
          %187 = sbr.rel (%p185) target = $region24
        $region23: #{down_conv_res_block.16} parent=19 // pred_region
          %p188 = scmp.lt.s32.totalorder %s12, 1
          %s189 = scalar_select %p188, %s12, 1
          %s190 = scalar_lea.vmem %s0, %s189
        $region24: #{down_conv_res_block.16} parent=19 // pred_fallthru
          _
        // Predicated region
        $region25: #{down_conv_res_block.16} parent=19 // pred_check
          %p191 = pneg %p79
        $region26: #{down_conv_res_block.16} parent=19 // pred_check_branch
          %193 = sbr.rel (%p191) target = $region28
        $region27: #{down_conv_res_block.16} parent=19 // pred_region
          %s194 = sand.u32 %s69, 1
          %s195 = sand.u32 %s69, 1
          %s196 = smul.addr %s195, 20
          %s197 = scalar_lea.vmem [#allocation2], %s196
          %s198 = smul.addr %s12, 4
          %s199 = scalar_lea.vmem %s2, %s198
          // Predicated region
          $region29: #{down_conv_res_block.16} parent=27 // pred_check
            _
          $region30: #{down_conv_res_block.16} parent=27 // pred_check_branch
            %201 = sbr.rel (0) target = $region32
          $region31: #{down_conv_res_block.16} parent=27 // pred_region
            // Predicated region
            $region33: #{down_conv_res_block.16} parent=31 // pred_check
              _
            $region34: #{down_conv_res_block.16} parent=31 // pred_check_branch
              %203 = sbr.rel target = $region36
            $region35: #{down_conv_res_block.16} parent=31 // pred_region
              // Predicated region
              $region48: #{down_conv_res_block.16} parent=35 // pred_check
                _
              $region49: #{down_conv_res_block.16} parent=35 // pred_check_branch
                %227 = sbr.rel (0) target = $region51
              $region50: #{down_conv_res_block.16} parent=35 // pred_region
                loop: start=0, step=1, limit=1
                $region52: #{down_conv_res_block.16} parent=50 // loop_pre_header
                  _
                $region53: #{down_conv_res_block.16} parent=50 // loop_header
                  %s229 = sphi 0, %s233
                  %p230 = scmp.ge.s32.totalorder %s229, 1
                  %s234 = sphi %s199, %s199
                  %s235 = sphi %s197, %s197
                $region54: #{down_conv_res_block.16} parent=50 // loop_header_branch
                  %232 = sbr.rel (%p230) target = $region58
                $region55: #{down_conv_res_block.16} parent=50 // loop_body
                  _
                $region56: #{down_conv_res_block.16} parent=50 // loop_footer
                  %s233 = sadd.s32 1, %s229
                $region57: #{down_conv_res_block.16} parent=50 // loop_footer_branch
                  %228 = sbr.rel target = $region53
                $region58: #{down_conv_res_block.16} parent=50 // loop_exit
                  _
                %s237 = ssub.s32 16, 1
                loop: start=0, step=1, limit=1
                $region59: #{down_conv_res_block.16} parent=50 // loop_pre_header
                  _
                $region60: #{down_conv_res_block.16} parent=50 // loop_header
                  %s239 = sphi 0, %s243
                  %p240 = scmp.ge.s32.totalorder %s239, 1
                  %s244 = sphi %s199, %s199
                  %s245 = sphi %s197, %s197
                $region61: #{down_conv_res_block.16} parent=50 // loop_header_branch
                  %242 = sbr.rel (%p240) target = $region65
                $region62: #{down_conv_res_block.16} parent=50 // loop_body
                  %v246 = vld [vmem:[%s244] sm:%s237]
                  %247 = vst [vmem:[%s245] sm:%s237] %v246
                  %v248 = vld [vmem:[%s244 + $0x8] sm:%s237]
                  %249 = vst [vmem:[%s245 + $0x4] sm:%s237] %v248
                  %v250 = vld [vmem:[%s244 + $0x10] sm:%s237]
                  %251 = vst [vmem:[%s245 + $0x8] sm:%s237] %v250
                  %v252 = vld [vmem:[%s244 + $0x18] sm:%s237]
                  %253 = vst [vmem:[%s245 + $0xc] sm:%s237] %v252
                  %v254 = vld [vmem:[%s244 + $0x20] sm:%s237]
                  %255 = vst [vmem:[%s245 + $0x10] sm:%s237] %v254
                $region63: #{down_conv_res_block.16} parent=50 // loop_footer
                  %s243 = sadd.s32 1, %s239
                $region64: #{down_conv_res_block.16} parent=50 // loop_footer_branch
                  %238 = sbr.rel target = $region60
                $region65: #{down_conv_res_block.16} parent=50 // loop_exit
                  _
              $region51: #{down_conv_res_block.16} parent=35 // pred_fallthru
                _
            $region36: #{down_conv_res_block.16} parent=31 // pred_fallthru
              _
            // Predicated region
            $region37: #{down_conv_res_block.16} parent=31 // pred_check
              _
            $region38: #{down_conv_res_block.16} parent=31 // pred_check_branch
              %205 = sbr.rel (0) target = $region40
            $region39: #{down_conv_res_block.16} parent=31 // pred_region
              %s207 = ssub.s32 16, 1
              loop: start=0, step=1, limit=1
              $region41: #{down_conv_res_block.16} parent=39 // loop_pre_header
                _
              $region42: #{down_conv_res_block.16} parent=39 // loop_header
                %s209 = sphi 0, %s213
                %p210 = scmp.ge.s32.totalorder %s209, 1
                %s214 = sphi %s199, %s199
                %s215 = sphi %s197, %s197
              $region43: #{down_conv_res_block.16} parent=39 // loop_header_branch
                %212 = sbr.rel (%p210) target = $region47
              $region44: #{down_conv_res_block.16} parent=39 // loop_body
                %v216 = vld [vmem:[%s214] sm:%s207]
                %217 = vst [vmem:[%s215] sm:%s207] %v216
                %v218 = vld [vmem:[%s214 + $0x8] sm:%s207]
                %219 = vst [vmem:[%s215 + $0x4] sm:%s207] %v218
                %v220 = vld [vmem:[%s214 + $0x10] sm:%s207]
                %221 = vst [vmem:[%s215 + $0x8] sm:%s207] %v220
                %v222 = vld [vmem:[%s214 + $0x18] sm:%s207]
                %223 = vst [vmem:[%s215 + $0xc] sm:%s207] %v222
                %v224 = vld [vmem:[%s214 + $0x20] sm:%s207]
                %225 = vst [vmem:[%s215 + $0x10] sm:%s207] %v224
              $region45: #{down_conv_res_block.16} parent=39 // loop_footer
                %s213 = sadd.s32 1, %s209
              $region46: #{down_conv_res_block.16} parent=39 // loop_footer_branch
                %208 = sbr.rel target = $region42
              $region47: #{down_conv_res_block.16} parent=39 // loop_exit
                _
            $region40: #{down_conv_res_block.16} parent=31 // pred_fallthru
              _
          $region32: #{down_conv_res_block.16} parent=27 // pred_fallthru
            _
          %256 = vnop
        $region28: #{down_conv_res_block.16} parent=19 // pred_fallthru
          _
      $region20: #{down_conv_res_block.16} parent=5 // pred_fallthru
        _
      %p257 = scmp.le.s32.totalorder 1, %s12
      %p258 = scmp.lt.s32.totalorder %s12, 3
      %p259 = pnand %p257, %p258
      %p260 = pneg %p259
      // Predicated region
      $region66: #{down_conv_res_block.16} parent=5 // pred_check
        _
      $region67: #{down_conv_res_block.16} parent=5 // pred_check_branch
        %262 = sbr.rel (%p259) target = $region69
      $region68: #{down_conv_res_block.16} parent=5 // pred_region
        %s263 = ssub.s32 %s12, 1
        %s264 = sand.u32 %s72, 1
        %s265 = sand.u32 %s72, 1
        %s266 = smul.addr %s265, 20
        %s267 = scalar_lea.vmem [#allocation2], %s266
        // Predicated region
        $region70: #{down_conv_res_block.16} parent=68 // pred_check
          %p268 = pneg %p85
        $region71: #{down_conv_res_block.16} parent=68 // pred_check_branch
          %270 = sbr.rel (%p268) target = $region73
        $region72: #{down_conv_res_block.16} parent=68 // pred_region
          _
        $region73: #{down_conv_res_block.16} parent=68 // pred_fallthru
          _
        %p271 = scmp.lt.s32.totalorder %s17, 1
        %s272 = scalar_select %p271, %s17, 1
        %s273 = scalar_lea.vmem %s0, %s272
        %p274 = pneg %p38
        %p275 = pneg %p35
        %p276 = pneg %p59
        %p277 = pneg %p56
        %s278 = sand.u32 %s72, 1
        %s279 = sand.u32 %s72, 1
        %s280 = smul.addr %s279, 20
        %s281 = scalar_lea.vmem [#allocation2], %s280
        %p282 = pneg %p85
        %p283 = pneg %p82
        %p284 = pneg %p111
        %p285 = pneg %p108
        %p286 = scmp.lt.s32.totalorder %s17, 1
        %s287 = scalar_select %p286, %s17, 1
        %s288 = smul.addr %s287, 4
        %s289 = scalar_lea.vmem %s3, %s288
        %p290 = pneg %p137
        %p291 = pneg %p134
        %p292 = scmp.lt.s32.totalorder %s17, 1
        %s293 = scalar_select %p292, %s17, 1
        %s294 = smul.addr %s293, 8
        %s295 = scalar_lea.vmem %s4, %s294
        %p296 = pneg %p163
        %p297 = pneg %p160
        %p298 = scmp.lt.s32.totalorder %s17, 1
        %s299 = scalar_select %p298, %s17, 1
        %s300 = smul.addr %s299, 8
        %s301 = scalar_lea.vmem %s5, %s300
        %p302 = scmp.lt.s32.totalorder %s17, 1
        %s303 = scalar_select %p302, %s17, 1
        %s304 = scalar_lea.vmem %s0, %s303
        %p305 = scmp.lt.s32.totalorder %s17, 1
        %s306 = scalar_select %p305, %s17, 1
        %s307 = smul.addr %s306, 4
        %s308 = scalar_lea.vmem %s3, %s307
        %p309 = scmp.lt.s32.totalorder %s17, 1
        %s310 = scalar_select %p309, %s17, 1
        %s311 = smul.addr %s310, 8
        %s312 = scalar_lea.vmem %s4, %s311
        %p313 = scmp.lt.s32.totalorder %s17, 1
        %s314 = scalar_select %p313, %s17, 1
        %s315 = smul.addr %s314, 8
        %s316 = scalar_lea.vmem %s5, %s315
        %v318 = vld [vmem:[%s267] sm:$0xf]
        %v319 = vld [vmem:[%s267 + $0x4] sm:$0xf]
        %v320 = vld [vmem:[%s267 + $0x8] sm:$0xf]
        %v321 = vld [vmem:[%s267 + $0xc] sm:$0xf]
        %v322 = vld [vmem:[%s267 + $0x10] sm:$0x3]
        %v323 = vld [vmem:[%s1] sm:$0xf]
        %v329 = vunpack.c.l.b16 %v318
        %v330 = vunpack.c.l.b16 %v319
        %v331 = vunpack.c.l.b16 %v320
        %v332 = vunpack.c.l.b16 %v321
        %v333 = vunpack.c.l.b16 %v322
        %v334 = vpack.c.b16 %v330, %v329
        %v335 = vpack.c.b16 %v332, %v331
        %v336 = vpack.c.b16 %v333, %v333
        %vm339 = vcmask 293888
        %v341 = vsel %vm339, %v323, 0
        %vm343 = vcmask 1041408
        %v345 = vsel %vm343, %v336, 0
        %347 = vmatprep.subr.bf16.mxu0 0
        %348 = vmatpush1.bf16.msra.mxu0 0
        %349 = vmatprep.subr.bf16.mxu0 0
        %350 = vmatpush1.bf16.msra.mxu0 0
        %351 = vmatprep.subr.bf16.mxu0 0
        %352 = vmatpush1.bf16.msra.mxu0 0
        %353 = vmatprep.subr.bf16.mxu0 0
        %354 = vmatpush1.bf16.msra.mxu0 0
        %355 = vmatprep.subr.bf16.mxu0 0
        %356 = vmatpush1.bf16.msra.mxu0 0
        %357 = vmatprep.subr.bf16.mxu0 0
        %358 = vmatpush1.bf16.msra.mxu0 %v345
        %359 = vmatprep.subr.bf16.mxu0 0
        %360 = vmatpush1.bf16.msra.mxu0 %v335
        %361 = vmatprep.subr.bf16.mxu0 0
        %362 = vmatpush1.bf16.msra.mxu0 %v334
        %363 = vmatprep.subr.bf16.mxu0 0
        %364 = vmatpush2.bf16.msra.mxu0 0
        %365 = vmatprep.subr.bf16.mxu0 0
        %366 = vmatpush2.bf16.msra.mxu0 0
        %367 = vmatprep.subr.bf16.mxu0 0
        %368 = vmatpush2.bf16.msra.mxu0 0
        %369 = vmatprep.subr.bf16.mxu0 0
        %370 = vmatpush2.bf16.msra.mxu0 0
        %371 = vmatprep.subr.bf16.mxu0 0
        %372 = vmatpush2.bf16.msra.mxu0 0
        %373 = vmatprep.subr.bf16.mxu0 0
        %374 = vmatpush2.bf16.msra.mxu0 0
        %375 = vmatprep.subr.bf16.mxu0 0
        %376 = vmatpush2.bf16.msra.mxu0 0
        %377 = vmatprep.subr.bf16.mxu0 0
        %378 = vmatpush2.bf16.msra.mxu0 0
        %379 = vmatprep.mubr.bf16.mxu0 0
        %380 = vmatmul.mubr.bf16.gmra.mxu0 %v341
        %v381 = vpop.f32.mrf.mxu0
        %v382 = vadd.f32 0.0, %v381
        %v383 = vpop.f32.mrf.mxu0
        %v384 = vpop.f32.mrf.mxu0
        %v385 = vpop.f32.mrf.mxu0
        %386 = vdwg.mxu0
        %v387 = vld [vmem:[%s304] sm:$0x1]
        %v389 = vlaneseq
        %v390 = vshrl.u32 %v389, 7
        %v391 = vsub.s32 0, %v390
        %v392 = vrot.slane %v387, %v391
        %v394 = vmul.f32 %v382, %v392
        %v395 = vpack.c.bf16 %v394, %v394
        %396 = vst [vmem:[%s308] sm:$0xf] %v395
        %397 = vadd.xlane.f32.xlu0 %v394
        %v398 = vpop.xlane.xlu0 %397
        %vm399 = vcmask 7168
        %400 = vst.msk [vmem:[%s312] sm:$0xff] %vm399, %v398
        %v401 = vmul.f32 %v394, %v394
        %402 = vadd.xlane.f32.xlu0 %v401
        %v403 = vpop.xlane.xlu0 %402
        %404 = vst.msk [vmem:[%s316] sm:$0xff] %vm399, %v403
        %p405 = scmp.lt.s32.totalorder %s17, 1
        %s406 = scalar_select %p405, %s17, 1
        %s407 = smul.addr %s406, 4
        %s408 = scalar_lea.vmem %s3, %s407
        %p409 = scmp.lt.s32.totalorder %s17, 1
        %s410 = scalar_select %p409, %s17, 1
        %s411 = smul.addr %s410, 8
        %s412 = scalar_lea.vmem %s4, %s411
        %p413 = scmp.lt.s32.totalorder %s17, 1
        %s414 = scalar_select %p413, %s17, 1
        %s415 = smul.addr %s414, 8
        %s416 = scalar_lea.vmem %s5, %s415
        // Predicated region
        $region74: #{down_conv_res_block.16} parent=68 // pred_check
          %p417 = pneg %p108
        $region75: #{down_conv_res_block.16} parent=68 // pred_check_branch
          %419 = sbr.rel (%p417) target = $region77
        $region76: #{down_conv_res_block.16} parent=68 // pred_region
          _
        $region77: #{down_conv_res_block.16} parent=68 // pred_fallthru
          _
        // Predicated region
        $region78: #{down_conv_res_block.16} parent=68 // pred_check
          %p420 = pneg %p134
        $region79: #{down_conv_res_block.16} parent=68 // pred_check_branch
          %422 = sbr.rel (%p420) target = $region81
        $region80: #{down_conv_res_block.16} parent=68 // pred_region
          _
        $region81: #{down_conv_res_block.16} parent=68 // pred_fallthru
          _
        // Predicated region
        $region82: #{down_conv_res_block.16} parent=68 // pred_check
          %p423 = pneg %p160
        $region83: #{down_conv_res_block.16} parent=68 // pred_check_branch
          %425 = sbr.rel (%p423) target = $region85
        $region84: #{down_conv_res_block.16} parent=68 // pred_region
          _
        $region85: #{down_conv_res_block.16} parent=68 // pred_fallthru
          _
      $region69: #{down_conv_res_block.16} parent=5 // pred_fallthru
        _
      %p426 = scmp.le.s32.totalorder 2, %s12
      // Predicated region
      $region86: #{down_conv_res_block.16} parent=5 // pred_check
        %p427 = pneg %p426
      $region87: #{down_conv_res_block.16} parent=5 // pred_check_branch
        %429 = sbr.rel (%p427) target = $region89
      $region88: #{down_conv_res_block.16} parent=5 // pred_region
        %s430 = ssub.s32 %s12, 2
        // Predicated region
        $region90: #{down_conv_res_block.16} parent=88 // pred_check
          %p431 = pneg %p114
        $region91: #{down_conv_res_block.16} parent=88 // pred_check_branch
          %433 = sbr.rel (%p431) target = $region93
        $region92: #{down_conv_res_block.16} parent=88 // pred_region
          %p434 = scmp.lt.s32.totalorder %s18, 1
          %s435 = scalar_select %p434, %s18, 1
          %s436 = smul.addr %s435, 4
          %s437 = scalar_lea.vmem %s3, %s436
        $region93: #{down_conv_res_block.16} parent=88 // pred_fallthru
          _
        // Predicated region
        $region94: #{down_conv_res_block.16} parent=88 // pred_check
          %p438 = pneg %p140
        $region95: #{down_conv_res_block.16} parent=88 // pred_check_branch
          %440 = sbr.rel (%p438) target = $region97
        $region96: #{down_conv_res_block.16} parent=88 // pred_region
          %p441 = scmp.lt.s32.totalorder %s18, 1
          %s442 = scalar_select %p441, %s18, 1
          %s443 = smul.addr %s442, 8
          %s444 = scalar_lea.vmem %s4, %s443
        $region97: #{down_conv_res_block.16} parent=88 // pred_fallthru
          _
        // Predicated region
        $region98: #{down_conv_res_block.16} parent=88 // pred_check
          %p445 = pneg %p166
        $region99: #{down_conv_res_block.16} parent=88 // pred_check_branch
          %447 = sbr.rel (%p445) target = $region101
        $region100: #{down_conv_res_block.16} parent=88 // pred_region
          %p448 = scmp.lt.s32.totalorder %s18, 1
          %s449 = scalar_select %p448, %s18, 1
          %s450 = smul.addr %s449, 8
          %s451 = scalar_lea.vmem %s5, %s450
        $region101: #{down_conv_res_block.16} parent=88 // pred_fallthru
          _
      $region89: #{down_conv_res_block.16} parent=5 // pred_fallthru
        _
    $region6: #{down_conv_res_block.16} parent=1 // loop_footer
      %s16 = sadd.s32 1, %s12
    $region7: #{down_conv_res_block.16} parent=1 // loop_footer_branch
      %11 = sbr.rel target = $region3
    $region8: #{down_conv_res_block.16} parent=1 // loop_exit
      _

// kernel: down_conv_res_block.17
$region0: #{down_conv_res_block.17}
  #allocation0 [shape = 'u32[]', space=smem, size = 0x4, offset = 0x4, fixed_abs, tag = 'smem constant byte address 0x4 - core index']
  #allocation1 [shape = 'u32[144,128]{1,0:T(1,128)}', space=vmem, size = 0x12000, scoped, tag = 'internal scratch']
  %s0 = inlined_call_operand.vmem [shape: bf16[8,256], index: 0, kind: input, shape index: {}]
  %s1 = inlined_call_operand.vmem [shape: f32[8,1], index: 1, kind: input, shape index: {}]
  %s2 = inlined_call_operand.vmem [shape: f32[8,1], index: 2, kind: input, shape index: {}]
  %s3 = inlined_call_operand.vmem [shape: f32[1,256], index: 3, kind: input, shape index: {}]
  %s4 = inlined_call_operand.vmem [shape: bf16[8,256], index: 4, kind: output, shape index: {}]
  %s5 = sld [smem:[#allocation0]]
  $region49: #{down_conv_res_block.17} parent=0
    _
  %s7 = ssub.s32 1, %s5
  %s8 = scalar_select 0, %s7, %s5
  loop: start=0, step=1, limit=4
  $region2: #{down_conv_res_block.17} parent=0 // loop_pre_header
    _
  $region3: #{down_conv_res_block.17} parent=0 // loop_header
    %s10 = sphi 0, %s14
    %p11 = scmp.ge.s32.totalorder %s10, 4
    %s20 = sphi 0, %s22
    %s23 = sphi 0, %s20
    %s24 = sphi 0, %s23
    %s40 = sphi 0, %s24
    %s44 = sphi 0, %s44
    %s46 = sphi 0, %s44
    %s47 = sphi 0, %s46
    %s61 = sphi 0, %s47
    %s65 = sphi 0, %s65
    %s67 = sphi 0, %s65
    %s68 = sphi 0, %s67
    %s82 = sphi 0, %s68
    %s88 = sphi 0, %s90
    %s91 = sphi 0, %s88
    %s92 = sphi 0, %s91
    %s108 = sphi 0, %s92
    %s114 = sphi 0, %s116
    %s117 = sphi 0, %s114
    %s118 = sphi 0, %s117
    %s134 = sphi 0, %s118
  $region4: #{down_conv_res_block.17} parent=0 // loop_header_branch
    %13 = sbr.rel (%p11) target = $region8
  $region5: #{down_conv_res_block.17} parent=0 // loop_body
    %s15 = ssub.s32 %s10, 1
    %s16 = ssub.s32 %s10, 2
    %s17 = sadd.s32 %s10, 1
    %s18 = ssub.s32 %s10, %s17
    %p19 = scmp.eq.s32.totalorder %s18, 0
    %s21 = sadd.s32 %s20, 1
    %s22 = scalar_select %p19, %s20, %s21
    %p25 = pneg %p19
    %p26 = scmp.eq.s32.totalorder %s10, 1
    %p27 = por %p25, %p26
    %p28 = scmp.ne.s32.totalorder %s20, %s23
    %p29 = scmp.eq.s32.totalorder %s10, 0
    %p30 = por %p28, %p29
    %p31 = scmp.ne.s32.totalorder %s20, %s23
    %p32 = scmp.eq.s32.totalorder %s15, 1
    %p33 = por %p31, %p32
    %p34 = scmp.ne.s32.totalorder %s23, %s24
    %p35 = scmp.eq.s32.totalorder %s15, 0
    %p36 = por %p34, %p35
    %p37 = scmp.ne.s32.totalorder %s23, %s24
    %p38 = scmp.eq.s32.totalorder %s16, 1
    %p39 = por %p37, %p38
    %p41 = scmp.ne.s32.totalorder %s24, %s40
    %p42 = scmp.eq.s32.totalorder %s16, 0
    %p43 = por %p41, %p42
    %s45 = sadd.s32 %s44, 1
    %p48 = scmp.eq.s32.totalorder %s10, 1
    %p49 = scmp.ne.s32.totalorder %s44, %s46
    %p50 = scmp.eq.s32.totalorder %s10, 0
    %p51 = por %p49, %p50
    %p52 = scmp.ne.s32.totalorder %s44, %s46
    %p53 = scmp.eq.s32.totalorder %s15, 1
    %p54 = por %p52, %p53
    %p55 = scmp.ne.s32.totalorder %s46, %s47
    %p56 = scmp.eq.s32.totalorder %s15, 0
    %p57 = por %p55, %p56
    %p58 = scmp.ne.s32.totalorder %s46, %s47
    %p59 = scmp.eq.s32.totalorder %s16, 1
    %p60 = por %p58, %p59
    %p62 = scmp.ne.s32.totalorder %s47, %s61
    %p63 = scmp.eq.s32.totalorder %s16, 0
    %p64 = por %p62, %p63
    %s66 = sadd.s32 %s65, 1
    %p69 = scmp.eq.s32.totalorder %s10, 1
    %p70 = scmp.ne.s32.totalorder %s65, %s67
    %p71 = scmp.eq.s32.totalorder %s10, 0
    %p72 = por %p70, %p71
    %p73 = scmp.ne.s32.totalorder %s65, %s67
    %p74 = scmp.eq.s32.totalorder %s15, 1
    %p75 = por %p73, %p74
    %p76 = scmp.ne.s32.totalorder %s67, %s68
    %p77 = scmp.eq.s32.totalorder %s15, 0
    %p78 = por %p76, %p77
    %p79 = scmp.ne.s32.totalorder %s67, %s68
    %p80 = scmp.eq.s32.totalorder %s16, 1
    %p81 = por %p79, %p80
    %p83 = scmp.ne.s32.totalorder %s68, %s82
    %p84 = scmp.eq.s32.totalorder %s16, 0
    %p85 = por %p83, %p84
    %s86 = ssub.s32 %s10, %s17
    %p87 = scmp.eq.s32.totalorder %s86, 0
    %s89 = sadd.s32 %s88, 1
    %s90 = scalar_select %p87, %s88, %s89
    %p93 = pneg %p87
    %p94 = scmp.eq.s32.totalorder %s10, 1
    %p95 = por %p93, %p94
    %p96 = scmp.ne.s32.totalorder %s88, %s91
    %p97 = scmp.eq.s32.totalorder %s10, 0
    %p98 = por %p96, %p97
    %p99 = scmp.ne.s32.totalorder %s88, %s91
    %p100 = scmp.eq.s32.totalorder %s15, 1
    %p101 = por %p99, %p100
    %p102 = scmp.ne.s32.totalorder %s91, %s92
    %p103 = scmp.eq.s32.totalorder %s15, 0
    %p104 = por %p102, %p103
    %p105 = scmp.ne.s32.totalorder %s91, %s92
    %p106 = scmp.eq.s32.totalorder %s16, 1
    %p107 = por %p105, %p106
    %p109 = scmp.ne.s32.totalorder %s92, %s108
    %p110 = scmp.eq.s32.totalorder %s16, 0
    %p111 = por %p109, %p110
    %s112 = ssub.s32 %s10, %s17
    %p113 = scmp.eq.s32.totalorder %s112, 0
    %s115 = sadd.s32 %s114, 1
    %s116 = scalar_select %p113, %s114, %s115
    %p119 = pneg %p113
    %p120 = scmp.eq.s32.totalorder %s10, 1
    %p121 = por %p119, %p120
    %p122 = scmp.ne.s32.totalorder %s114, %s117
    %p123 = scmp.eq.s32.totalorder %s10, 0
    %p124 = por %p122, %p123
    %p125 = scmp.ne.s32.totalorder %s114, %s117
    %p126 = scmp.eq.s32.totalorder %s15, 1
    %p127 = por %p125, %p126
    %p128 = scmp.ne.s32.totalorder %s117, %s118
    %p129 = scmp.eq.s32.totalorder %s15, 0
    %p130 = por %p128, %p129
    %p131 = scmp.ne.s32.totalorder %s117, %s118
    %p132 = scmp.eq.s32.totalorder %s16, 1
    %p133 = por %p131, %p132
    %p135 = scmp.ne.s32.totalorder %s118, %s134
    %p136 = scmp.eq.s32.totalorder %s16, 0
    %p137 = por %p135, %p136
    %p138 = scmp.le.s32.totalorder 1, %s10
    %p139 = scmp.lt.s32.totalorder %s10, 3
    %p140 = pnand %p138, %p139
    %p141 = pneg %p140
    // Predicated region
    $region9: #{down_conv_res_block.17} parent=5 // pred_check
      _
    $region10: #{down_conv_res_block.17} parent=5 // pred_check_branch
      %143 = sbr.rel (%p140) target = $region12
    $region11: #{down_conv_res_block.17} parent=5 // pred_region
      %s144 = ssub.s32 %s10, 1
      // Predicated region
      $region13: #{down_conv_res_block.17} parent=11 // pred_check
        %p145 = pneg %p57
      $region14: #{down_conv_res_block.17} parent=11 // pred_check_branch
        %147 = sbr.rel (%p145) target = $region16
      $region15: #{down_conv_res_block.17} parent=11 // pred_region
        _
      $region16: #{down_conv_res_block.17} parent=11 // pred_fallthru
        _
      // Predicated region
      $region17: #{down_conv_res_block.17} parent=11 // pred_check
        %p148 = pneg %p78
      $region18: #{down_conv_res_block.17} parent=11 // pred_check_branch
        %150 = sbr.rel (%p148) target = $region20
      $region19: #{down_conv_res_block.17} parent=11 // pred_region
        _
      $region20: #{down_conv_res_block.17} parent=11 // pred_fallthru
        _
    $region12: #{down_conv_res_block.17} parent=5 // pred_fallthru
      _
    %p151 = scmp.lt.s32.totalorder %s10, 2
    // Predicated region
    $region21: #{down_conv_res_block.17} parent=5 // pred_check
      %p152 = pneg %p151
    $region22: #{down_conv_res_block.17} parent=5 // pred_check_branch
      %154 = sbr.rel (%p152) target = $region24
    $region23: #{down_conv_res_block.17} parent=5 // pred_region
      // Predicated region
      $region25: #{down_conv_res_block.17} parent=23 // pred_check
        %p155 = pneg %p30
      $region26: #{down_conv_res_block.17} parent=23 // pred_check_branch
        %157 = sbr.rel (%p155) target = $region28
      $region27: #{down_conv_res_block.17} parent=23 // pred_region
        %p158 = scmp.lt.s32.totalorder %s10, 1
        %s159 = scalar_select %p158, %s10, 1
        %s160 = smul.addr %s159, 4
        %s161 = scalar_lea.vmem %s0, %s160
      $region28: #{down_conv_res_block.17} parent=23 // pred_fallthru
        _
      // Predicated region
      $region29: #{down_conv_res_block.17} parent=23 // pred_check
        %p162 = pneg %p98
      $region30: #{down_conv_res_block.17} parent=23 // pred_check_branch
        %164 = sbr.rel (%p162) target = $region32
      $region31: #{down_conv_res_block.17} parent=23 // pred_region
        %p165 = scmp.lt.s32.totalorder %s10, 1
        %s166 = scalar_select %p165, %s10, 1
        %s167 = scalar_lea.vmem %s3, %s166
      $region32: #{down_conv_res_block.17} parent=23 // pred_fallthru
        _
    $region24: #{down_conv_res_block.17} parent=5 // pred_fallthru
      _
    %p168 = scmp.le.s32.totalorder 1, %s10
    %p169 = scmp.lt.s32.totalorder %s10, 3
    %p170 = pnand %p168, %p169
    %p171 = pneg %p170
    // Predicated region
    $region33: #{down_conv_res_block.17} parent=5 // pred_check
      _
    $region34: #{down_conv_res_block.17} parent=5 // pred_check_branch
      %173 = sbr.rel (%p170) target = $region36
    $region35: #{down_conv_res_block.17} parent=5 // pred_region
      %s174 = ssub.s32 %s10, 1
      %p175 = scmp.lt.s32.totalorder %s15, 1
      %s176 = scalar_select %p175, %s15, 1
      %s177 = smul.addr %s176, 4
      %s178 = scalar_lea.vmem %s0, %s177
      %p179 = pneg %p36
      %p180 = pneg %p33
      %p181 = pneg %p57
      %p182 = pneg %p54
      %p183 = pneg %p78
      %p184 = pneg %p75
      %p185 = scmp.lt.s32.totalorder %s15, 1
      %s186 = scalar_select %p185, %s15, 1
      %s187 = scalar_lea.vmem %s3, %s186
      %p188 = pneg %p104
      %p189 = pneg %p101
      %p190 = pneg %p130
      %p191 = pneg %p127
      %p192 = scmp.lt.s32.totalorder %s15, 1
      %s193 = scalar_select %p192, %s15, 1
      %s194 = smul.addr %s193, 4
      %s195 = scalar_lea.vmem %s4, %s194
      %p196 = scmp.lt.s32.totalorder %s15, 1
      %s197 = scalar_select %p196, %s15, 1
      %s198 = smul.addr %s197, 4
      %s199 = scalar_lea.vmem %s0, %s198
      %p200 = scmp.lt.s32.totalorder %s15, 1
      %s201 = scalar_select %p200, %s15, 1
      %s202 = scalar_lea.vmem %s3, %s201
      %p203 = scmp.lt.s32.totalorder %s15, 1
      %s204 = scalar_select %p203, %s15, 1
      %s205 = smul.addr %s204, 4
      %s206 = scalar_lea.vmem %s4, %s205
      %v207 = vld [vmem:[%s199] sm:$0xf]
      %v208 = vunpack.c.l.bf16 %v207
      %v209 = vld [vmem:[%s1] sm:$0xff]
      %211 = vset.pattern.permute.xlu0 0
      %212 = vperm.xlu0 %211, %v209
      %v213 = vpop.permute.xlu0 %212
      %v215 = vmul.f32 %v208, %v213
      %v216 = vld [vmem:[%s2] sm:$0xff]
      %218 = vset.pattern.permute.xlu0 0
      %219 = vperm.xlu0 %218, %v216
      %v220 = vpop.permute.xlu0 %219
      %v222 = vadd.f32 %v215, %v220
      %v223 = vmax.f32 %v222, 0.0
      %v224 = vld [vmem:[%s202] sm:$0x1]
      %v226 = vlaneseq
      %v227 = vshrl.u32 %v226, 7
      %v228 = vsub.s32 0, %v227
      %v229 = vrot.slane %v224, %v228
      %v231 = vmul.f32 %v223, %v229
      %v232 = vpack.c.bf16 %v231, %v231
      %233 = vst [vmem:[%s206] sm:$0xf] %v232
      %p234 = scmp.lt.s32.totalorder %s15, 1
      %s235 = scalar_select %p234, %s15, 1
      %s236 = smul.addr %s235, 4
      %s237 = scalar_lea.vmem %s4, %s236
      // Predicated region
      $region37: #{down_conv_res_block.17} parent=35 // pred_check
        %p238 = pneg %p127
      $region38: #{down_conv_res_block.17} parent=35 // pred_check_branch
        %240 = sbr.rel (%p238) target = $region40
      $region39: #{down_conv_res_block.17} parent=35 // pred_region
        _
      $region40: #{down_conv_res_block.17} parent=35 // pred_fallthru
        _
    $region36: #{down_conv_res_block.17} parent=5 // pred_fallthru
      _
    %p241 = scmp.le.s32.totalorder 2, %s10
    // Predicated region
    $region41: #{down_conv_res_block.17} parent=5 // pred_check
      %p242 = pneg %p241
    $region42: #{down_conv_res_block.17} parent=5 // pred_check_branch
      %244 = sbr.rel (%p242) target = $region44
    $region43: #{down_conv_res_block.17} parent=5 // pred_region
      %s245 = ssub.s32 %s10, 2
      // Predicated region
      $region45: #{down_conv_res_block.17} parent=43 // pred_check
        %p246 = pneg %p133
      $region46: #{down_conv_res_block.17} parent=43 // pred_check_branch
        %248 = sbr.rel (%p246) target = $region48
      $region47: #{down_conv_res_block.17} parent=43 // pred_region
        %p249 = scmp.lt.s32.totalorder %s16, 1
        %s250 = scalar_select %p249, %s16, 1
        %s251 = smul.addr %s250, 4
        %s252 = scalar_lea.vmem %s4, %s251
      $region48: #{down_conv_res_block.17} parent=43 // pred_fallthru
        _
    $region44: #{down_conv_res_block.17} parent=5 // pred_fallthru
      _
  $region6: #{down_conv_res_block.17} parent=0 // loop_footer
    %s14 = sadd.s32 1, %s10
  $region7: #{down_conv_res_block.17} parent=0 // loop_footer_branch
    %9 = sbr.rel target = $region3
  $region8: #{down_conv_res_block.17} parent=0 // loop_exit
    _

// kernel: down_conv_res_block.18
$region0: #{down_conv_res_block.18}
  #allocation0 [shape = 'u32[]', space=smem, size = 0x4, offset = 0x4, fixed_abs, tag = 'smem constant byte address 0x4 - core index']
  #allocation1 [shape = 'u32[144,128]{1,0:T(1,128)}', space=vmem, size = 0x12000, scoped, tag = 'internal scratch']
  %s0 = inlined_call_operand.vmem [shape: f32[1,256], index: 0, kind: input, shape index: {}]
  %s1 = inlined_call_operand.vmem [shape: bf16[9,8,8], index: 1, kind: input, shape index: {}]
  %s2 = inlined_call_operand.vmem [shape: bf16[8,256], index: 2, kind: input, shape index: {}, may-alias: {2,3,4}]
  %s3 = inlined_call_operand.vmem [shape: bf16[8,256], index: 3, kind: input, shape index: {}, may-alias: {2,3,4}]
  %s4 = inlined_call_operand.vmem [shape: bf16[8,256], index: 4, kind: input, shape index: {}, may-alias: {2,3,4}]
  %s5 = inlined_call_operand.vmem [shape: bf16[8,256], index: 5, kind: output, shape index: {0}]
  %s6 = inlined_call_operand.vmem [shape: f32[2,8,1], index: 6, kind: output, shape index: {1}]
  %s7 = inlined_call_operand.vmem [shape: f32[2,8,1], index: 7, kind: output, shape index: {2}]
  %8 = xla_tuple %s5, %s6, %s7
  %s9 = sld [smem:[#allocation0]]
  $region69: #{down_conv_res_block.18} parent=0
    _
  %s11 = ssub.s32 1, %s9
  %s12 = scalar_select 0, %s11, %s9
  loop: start=0, step=1, limit=4
  $region2: #{down_conv_res_block.18} parent=0 // loop_pre_header
    _
  $region3: #{down_conv_res_block.18} parent=0 // loop_header
    %s14 = sphi 0, %s18
    %p15 = scmp.ge.s32.totalorder %s14, 4
    %s24 = sphi 0, %s26
    %s27 = sphi 0, %s24
    %s28 = sphi 0, %s27
    %s44 = sphi 0, %s28
    %s48 = sphi 0, %s48
    %s50 = sphi 0, %s48
    %s51 = sphi 0, %s50
    %s65 = sphi 0, %s51
    %s71 = sphi 0, %s73
    %s74 = sphi 0, %s71
    %s75 = sphi 0, %s74
    %s91 = sphi 0, %s75
    %s103 = sphi 0, %s105
    %s106 = sphi 0, %s103
    %s107 = sphi 0, %s106
    %s123 = sphi 0, %s107
    %s135 = sphi 0, %s137
    %s138 = sphi 0, %s135
    %s139 = sphi 0, %s138
    %s155 = sphi 0, %s139
    %s161 = sphi 0, %s163
    %s164 = sphi 0, %s161
    %s165 = sphi 0, %s164
    %s181 = sphi 0, %s165
    %s187 = sphi 0, %s189
    %s190 = sphi 0, %s187
    %s191 = sphi 0, %s190
    %s207 = sphi 0, %s191
    %s213 = sphi 0, %s215
    %s216 = sphi 0, %s213
    %s217 = sphi 0, %s216
    %s233 = sphi 0, %s217
  $region4: #{down_conv_res_block.18} parent=0 // loop_header_branch
    %17 = sbr.rel (%p15) target = $region8
  $region5: #{down_conv_res_block.18} parent=0 // loop_body
    %s19 = ssub.s32 %s14, 1
    %s20 = ssub.s32 %s14, 2
    %s21 = sadd.s32 %s14, 1
    %s22 = ssub.s32 %s14, %s21
    %p23 = scmp.eq.s32.totalorder %s22, 0
    %s25 = sadd.s32 %s24, 1
    %s26 = scalar_select %p23, %s24, %s25
    %p29 = pneg %p23
    %p30 = scmp.eq.s32.totalorder %s14, 1
    %p31 = por %p29, %p30
    %p32 = scmp.ne.s32.totalorder %s24, %s27
    %p33 = scmp.eq.s32.totalorder %s14, 0
    %p34 = por %p32, %p33
    %p35 = scmp.ne.s32.totalorder %s24, %s27
    %p36 = scmp.eq.s32.totalorder %s19, 1
    %p37 = por %p35, %p36
    %p38 = scmp.ne.s32.totalorder %s27, %s28
    %p39 = scmp.eq.s32.totalorder %s19, 0
    %p40 = por %p38, %p39
    %p41 = scmp.ne.s32.totalorder %s27, %s28
    %p42 = scmp.eq.s32.totalorder %s20, 1
    %p43 = por %p41, %p42
    %p45 = scmp.ne.s32.totalorder %s28, %s44
    %p46 = scmp.eq.s32.totalorder %s20, 0
    %p47 = por %p45, %p46
    %s49 = sadd.s32 %s48, 1
    %p52 = scmp.eq.s32.totalorder %s14, 1
    %p53 = scmp.ne.s32.totalorder %s48, %s50
    %p54 = scmp.eq.s32.totalorder %s14, 0
    %p55 = por %p53, %p54
    %p56 = scmp.ne.s32.totalorder %s48, %s50
    %p57 = scmp.eq.s32.totalorder %s19, 1
    %p58 = por %p56, %p57
    %p59 = scmp.ne.s32.totalorder %s50, %s51
    %p60 = scmp.eq.s32.totalorder %s19, 0
    %p61 = por %p59, %p60
    %p62 = scmp.ne.s32.totalorder %s50, %s51
    %p63 = scmp.eq.s32.totalorder %s20, 1
    %p64 = por %p62, %p63
    %p66 = scmp.ne.s32.totalorder %s51, %s65
    %p67 = scmp.eq.s32.totalorder %s20, 0
    %p68 = por %p66, %p67
    %s69 = ssub.s32 %s14, %s21
    %p70 = scmp.eq.s32.totalorder %s69, 0
    %s72 = sadd.s32 %s71, 1
    %s73 = scalar_select %p70, %s71, %s72
    %p76 = pneg %p70
    %p77 = scmp.eq.s32.totalorder %s14, 1
    %p78 = por %p76, %p77
    %p79 = scmp.ne.s32.totalorder %s71, %s74
    %p80 = scmp.eq.s32.totalorder %s14, 0
    %p81 = por %p79, %p80
    %p82 = scmp.ne.s32.totalorder %s71, %s74
    %p83 = scmp.eq.s32.totalorder %s19, 1
    %p84 = por %p82, %p83
    %p85 = scmp.ne.s32.totalorder %s74, %s75
    %p86 = scmp.eq.s32.totalorder %s19, 0
    %p87 = por %p85, %p86
    %p88 = scmp.ne.s32.totalorder %s74, %s75
    %p89 = scmp.eq.s32.totalorder %s20, 1
    %p90 = por %p88, %p89
    %p92 = scmp.ne.s32.totalorder %s75, %s91
    %p93 = scmp.eq.s32.totalorder %s20, 0
    %p94 = por %p92, %p93
    %s95 = ssub.s32 %s14, 1
    %p96 = scmp.gt.s32.totalorder %s95, 0
    %s97 = scalar_select %p96, %s95, 0
    %s98 = ssub.s32 %s21, 1
    %p99 = scmp.gt.s32.totalorder %s98, 0
    %s100 = scalar_select %p99, %s98, 0
    %s101 = ssub.s32 %s97, %s100
    %p102 = scmp.eq.s32.totalorder %s101, 0
    %s104 = sadd.s32 %s103, 1
    %s105 = scalar_select %p102, %s103, %s104
    %p108 = pneg %p102
    %p109 = scmp.eq.s32.totalorder %s14, 1
    %p110 = por %p108, %p109
    %p111 = scmp.ne.s32.totalorder %s103, %s106
    %p112 = scmp.eq.s32.totalorder %s14, 0
    %p113 = por %p111, %p112
    %p114 = scmp.ne.s32.totalorder %s103, %s106
    %p115 = scmp.eq.s32.totalorder %s19, 1
    %p116 = por %p114, %p115
    %p117 = scmp.ne.s32.totalorder %s106, %s107
    %p118 = scmp.eq.s32.totalorder %s19, 0
    %p119 = por %p117, %p118
    %p120 = scmp.ne.s32.totalorder %s106, %s107
    %p121 = scmp.eq.s32.totalorder %s20, 1
    %p122 = por %p120, %p121
    %p124 = scmp.ne.s32.totalorder %s107, %s123
    %p125 = scmp.eq.s32.totalorder %s20, 0
    %p126 = por %p124, %p125
    %s127 = sadd.s32 %s14, 1
    %p128 = scmp.lt.s32.totalorder %s127, 1
    %s129 = scalar_select %p128, %s127, 1
    %s130 = sadd.s32 %s21, 1
    %p131 = scmp.lt.s32.totalorder %s130, 1
    %s132 = scalar_select %p131, %s130, 1
    %s133 = ssub.s32 %s129, %s132
    %p134 = scmp.eq.s32.totalorder %s133, 0
    %s136 = sadd.s32 %s135, 1
    %s137 = scalar_select %p134, %s135, %s136
    %p140 = pneg %p134
    %p141 = scmp.eq.s32.totalorder %s14, 1
    %p142 = por %p140, %p141
    %p143 = scmp.ne.s32.totalorder %s135, %s138
    %p144 = scmp.eq.s32.totalorder %s14, 0
    %p145 = por %p143, %p144
    %p146 = scmp.ne.s32.totalorder %s135, %s138
    %p147 = scmp.eq.s32.totalorder %s19, 1
    %p148 = por %p146, %p147
    %p149 = scmp.ne.s32.totalorder %s138, %s139
    %p150 = scmp.eq.s32.totalorder %s19, 0
    %p151 = por %p149, %p150
    %p152 = scmp.ne.s32.totalorder %s138, %s139
    %p153 = scmp.eq.s32.totalorder %s20, 1
    %p154 = por %p152, %p153
    %p156 = scmp.ne.s32.totalorder %s139, %s155
    %p157 = scmp.eq.s32.totalorder %s20, 0
    %p158 = por %p156, %p157
    %s159 = ssub.s32 %s14, %s21
    %p160 = scmp.eq.s32.totalorder %s159, 0
    %s162 = sadd.s32 %s161, 1
    %s163 = scalar_select %p160, %s161, %s162
    %p166 = pneg %p160
    %p167 = scmp.eq.s32.totalorder %s14, 1
    %p168 = por %p166, %p167
    %p169 = scmp.ne.s32.totalorder %s161, %s164
    %p170 = scmp.eq.s32.totalorder %s14, 0
    %p171 = por %p169, %p170
    %p172 = scmp.ne.s32.totalorder %s161, %s164
    %p173 = scmp.eq.s32.totalorder %s19, 1
    %p174 = por %p172, %p173
    %p175 = scmp.ne.s32.totalorder %s164, %s165
    %p176 = scmp.eq.s32.totalorder %s19, 0
    %p177 = por %p175, %p176
    %p178 = scmp.ne.s32.totalorder %s164, %s165
    %p179 = scmp.eq.s32.totalorder %s20, 1
    %p180 = por %p178, %p179
    %p182 = scmp.ne.s32.totalorder %s165, %s181
    %p183 = scmp.eq.s32.totalorder %s20, 0
    %p184 = por %p182, %p183
    %s185 = ssub.s32 %s14, %s21
    %p186 = scmp.eq.s32.totalorder %s185, 0
    %s188 = sadd.s32 %s187, 1
    %s189 = scalar_select %p186, %s187, %s188
    %p192 = pneg %p186
    %p193 = scmp.eq.s32.totalorder %s14, 1
    %p194 = por %p192, %p193
    %p195 = scmp.ne.s32.totalorder %s187, %s190
    %p196 = scmp.eq.s32.totalorder %s14, 0
    %p197 = por %p195, %p196
    %p198 = scmp.ne.s32.totalorder %s187, %s190
    %p199 = scmp.eq.s32.totalorder %s19, 1
    %p200 = por %p198, %p199
    %p201 = scmp.ne.s32.totalorder %s190, %s191
    %p202 = scmp.eq.s32.totalorder %s19, 0
    %p203 = por %p201, %p202
    %p204 = scmp.ne.s32.totalorder %s190, %s191
    %p205 = scmp.eq.s32.totalorder %s20, 1
    %p206 = por %p204, %p205
    %p208 = scmp.ne.s32.totalorder %s191, %s207
    %p209 = scmp.eq.s32.totalorder %s20, 0
    %p210 = por %p208, %p209
    %s211 = ssub.s32 %s14, %s21
    %p212 = scmp.eq.s32.totalorder %s211, 0
    %s214 = sadd.s32 %s213, 1
    %s215 = scalar_select %p212, %s213, %s214
    %p218 = pneg %p212
    %p219 = scmp.eq.s32.totalorder %s14, 1
    %p220 = por %p218, %p219
    %p221 = scmp.ne.s32.totalorder %s213, %s216
    %p222 = scmp.eq.s32.totalorder %s14, 0
    %p223 = por %p221, %p222
    %p224 = scmp.ne.s32.totalorder %s213, %s216
    %p225 = scmp.eq.s32.totalorder %s19, 1
    %p226 = por %p224, %p225
    %p227 = scmp.ne.s32.totalorder %s216, %s217
    %p228 = scmp.eq.s32.totalorder %s19, 0
    %p229 = por %p227, %p228
    %p230 = scmp.ne.s32.totalorder %s216, %s217
    %p231 = scmp.eq.s32.totalorder %s20, 1
    %p232 = por %p230, %p231
    %p234 = scmp.ne.s32.totalorder %s217, %s233
    %p235 = scmp.eq.s32.totalorder %s20, 0
    %p236 = por %p234, %p235
    %p237 = scmp.le.s32.totalorder 1, %s14
    %p238 = scmp.lt.s32.totalorder %s14, 3
    %p239 = pnand %p237, %p238
    %p240 = pneg %p239
    // Predicated region
    $region9: #{down_conv_res_block.18} parent=5 // pred_check
      _
    $region10: #{down_conv_res_block.18} parent=5 // pred_check_branch
      %242 = sbr.rel (%p239) target = $region12
    $region11: #{down_conv_res_block.18} parent=5 // pred_region
      %s243 = ssub.s32 %s14, 1
      // Predicated region
      $region13: #{down_conv_res_block.18} parent=11 // pred_check
        %p244 = pneg %p61
      $region14: #{down_conv_res_block.18} parent=11 // pred_check_branch
        %246 = sbr.rel (%p244) target = $region16
      $region15: #{down_conv_res_block.18} parent=11 // pred_region
        _
      $region16: #{down_conv_res_block.18} parent=11 // pred_fallthru
        _
    $region12: #{down_conv_res_block.18} parent=5 // pred_fallthru
      _
    %p247 = scmp.lt.s32.totalorder %s14, 2
    // Predicated region
    $region17: #{down_conv_res_block.18} parent=5 // pred_check
      %p248 = pneg %p247
    $region18: #{down_conv_res_block.18} parent=5 // pred_check_branch
      %250 = sbr.rel (%p248) target = $region20
    $region19: #{down_conv_res_block.18} parent=5 // pred_region
      // Predicated region
      $region21: #{down_conv_res_block.18} parent=19 // pred_check
        %p251 = pneg %p34
      $region22: #{down_conv_res_block.18} parent=19 // pred_check_branch
        %253 = sbr.rel (%p251) target = $region24
      $region23: #{down_conv_res_block.18} parent=19 // pred_region
        %p254 = scmp.lt.s32.totalorder %s14, 1
        %s255 = scalar_select %p254, %s14, 1
        %s256 = scalar_lea.vmem %s0, %s255
      $region24: #{down_conv_res_block.18} parent=19 // pred_fallthru
        _
      // Predicated region
      $region25: #{down_conv_res_block.18} parent=19 // pred_check
        %p257 = pneg %p81
      $region26: #{down_conv_res_block.18} parent=19 // pred_check_branch
        %259 = sbr.rel (%p257) target = $region28
      $region27: #{down_conv_res_block.18} parent=19 // pred_region
        %p260 = scmp.lt.s32.totalorder %s14, 1
        %s261 = scalar_select %p260, %s14, 1
        %s262 = smul.addr %s261, 4
        %s263 = scalar_lea.vmem %s2, %s262
      $region28: #{down_conv_res_block.18} parent=19 // pred_fallthru
        _
      // Predicated region
      $region29: #{down_conv_res_block.18} parent=19 // pred_check
        %p264 = pneg %p113
      $region30: #{down_conv_res_block.18} parent=19 // pred_check_branch
        %266 = sbr.rel (%p264) target = $region32
      $region31: #{down_conv_res_block.18} parent=19 // pred_region
        %s267 = ssub.s32 %s14, 1
        %p268 = scmp.gt.s32.totalorder %s267, 0
        %s269 = scalar_select %p268, %s267, 0
        %p270 = scmp.lt.s32.totalorder %s269, 1
        %s271 = scalar_select %p270, %s269, 1
        %s272 = smul.addr %s271, 4
        %s273 = scalar_lea.vmem %s3, %s272
        %s274 = ssub.s32 %s14, 1
        %p275 = scmp.gt.s32.totalorder %s274, 0
        %s276 = scalar_select %p275, %s274, 0
      $region32: #{down_conv_res_block.18} parent=19 // pred_fallthru
        _
      // Predicated region
      $region33: #{down_conv_res_block.18} parent=19 // pred_check
        %p277 = pneg %p145
      $region34: #{down_conv_res_block.18} parent=19 // pred_check_branch
        %279 = sbr.rel (%p277) target = $region36
      $region35: #{down_conv_res_block.18} parent=19 // pred_region
        %s280 = sadd.s32 %s14, 1
        %p281 = scmp.lt.s32.totalorder %s280, 1
        %s282 = scalar_select %p281, %s280, 1
        %p283 = scmp.lt.s32.totalorder %s282, 1
        %s284 = scalar_select %p283, %s282, 1
        %s285 = smul.addr %s284, 4
        %s286 = scalar_lea.vmem %s4, %s285
        %s287 = sadd.s32 %s14, 1
        %p288 = scmp.lt.s32.totalorder %s287, 1
        %s289 = scalar_select %p288, %s287, 1
      $region36: #{down_conv_res_block.18} parent=19 // pred_fallthru
        _
    $region20: #{down_conv_res_block.18} parent=5 // pred_fallthru
      _
    %p290 = scmp.le.s32.totalorder 1, %s14
    %p291 = scmp.lt.s32.totalorder %s14, 3
    %p292 = pnand %p290, %p291
    %p293 = pneg %p292
    // Predicated region
    $region37: #{down_conv_res_block.18} parent=5 // pred_check
      _
    $region38: #{down_conv_res_block.18} parent=5 // pred_check_branch
      %295 = sbr.rel (%p292) target = $region40
    $region39: #{down_conv_res_block.18} parent=5 // pred_region
      %s296 = ssub.s32 %s14, 1
      %p297 = scmp.lt.s32.totalorder %s19, 1
      %s298 = scalar_select %p297, %s19, 1
      %s299 = scalar_lea.vmem %s0, %s298
      %p300 = pneg %p40
      %p301 = pneg %p37
      %p302 = pneg %p61
      %p303 = pneg %p58
      %p304 = scmp.lt.s32.totalorder %s19, 1
      %s305 = scalar_select %p304, %s19, 1
      %s306 = smul.addr %s305, 4
      %s307 = scalar_lea.vmem %s2, %s306
      %p308 = pneg %p87
      %p309 = pneg %p84
      %s310 = ssub.s32 %s19, 1
      %p311 = scmp.gt.s32.totalorder %s310, 0
      %s312 = scalar_select %p311, %s310, 0
      %p313 = scmp.lt.s32.totalorder %s312, 1
      %s314 = scalar_select %p313, %s312, 1
      %s315 = smul.addr %s314, 4
      %s316 = scalar_lea.vmem %s3, %s315
      %p317 = pneg %p119
      %p318 = pneg %p116
      %s319 = sadd.s32 %s19, 1
      %p320 = scmp.lt.s32.totalorder %s319, 1
      %s321 = scalar_select %p320, %s319, 1
      %p322 = scmp.lt.s32.totalorder %s321, 1
      %s323 = scalar_select %p322, %s321, 1
      %s324 = smul.addr %s323, 4
      %s325 = scalar_lea.vmem %s4, %s324
      %p326 = pneg %p151
      %p327 = pneg %p148
      %p328 = pneg %p177
      %p329 = pneg %p174
      %p330 = scmp.lt.s32.totalorder %s19, 1
      %s331 = scalar_select %p330, %s19, 1
      %s332 = smul.addr %s331, 4
      %s333 = scalar_lea.vmem %s5, %s332
      %p334 = pneg %p203
      %p335 = pneg %p200
      %p336 = scmp.lt.s32.totalorder %s19, 1
      %s337 = scalar_select %p336, %s19, 1
      %s338 = smul.addr %s337, 8
      %s339 = scalar_lea.vmem %s6, %s338
      %p340 = pneg %p229
      %p341 = pneg %p226
      %p342 = scmp.lt.s32.totalorder %s19, 1
      %s343 = scalar_select %p342, %s19, 1
      %s344 = smul.addr %s343, 8
      %s345 = scalar_lea.vmem %s7, %s344
      %p346 = scmp.lt.s32.totalorder %s19, 1
      %s347 = scalar_select %p346, %s19, 1
      %s348 = scalar_lea.vmem %s0, %s347
      %p349 = scmp.lt.s32.totalorder %s19, 1
      %s350 = scalar_select %p349, %s19, 1
      %s351 = smul.addr %s350, 4
      %s352 = scalar_lea.vmem %s2, %s351
      %s353 = ssub.s32 %s19, 1
      %p354 = scmp.gt.s32.totalorder %s353, 0
      %s355 = scalar_select %p354, %s353, 0
      %p356 = scmp.lt.s32.totalorder %s355, 1
      %s357 = scalar_select %p356, %s355, 1
      %s358 = smul.addr %s357, 4
      %s359 = scalar_lea.vmem %s3, %s358
      %s360 = ssub.s32 %s19, 1
      %p361 = scmp.gt.s32.totalorder %s360, 0
      %s362 = scalar_select %p361, %s360, 0
      %s363 = sadd.s32 %s19, 1
      %p364 = scmp.lt.s32.totalorder %s363, 1
      %s365 = scalar_select %p364, %s363, 1
      %p366 = scmp.lt.s32.totalorder %s365, 1
      %s367 = scalar_select %p366, %s365, 1
      %s368 = smul.addr %s367, 4
      %s369 = scalar_lea.vmem %s4, %s368
      %s370 = sadd.s32 %s19, 1
      %p371 = scmp.lt.s32.totalorder %s370, 1
      %s372 = scalar_select %p371, %s370, 1
      %p373 = scmp.lt.s32.totalorder %s19, 1
      %s374 = scalar_select %p373, %s19, 1
      %s375 = smul.addr %s374, 4
      %s376 = scalar_lea.vmem %s5, %s375
      %p377 = scmp.lt.s32.totalorder %s19, 1
      %s378 = scalar_select %p377, %s19, 1
      %s379 = smul.addr %s378, 8
      %s380 = scalar_lea.vmem %s6, %s379
      %p381 = scmp.lt.s32.totalorder %s19, 1
      %s382 = scalar_select %p381, %s19, 1
      %s383 = smul.addr %s382, 8
      %s384 = scalar_lea.vmem %s7, %s383
      %v386 = vld [vmem:[%s359] sm:$0xf]
      %v387 = vld [vmem:[%s352] sm:$0xf]
      %v388 = vld [vmem:[%s369] sm:$0xf]
      %v389 = vld [vmem:[%s1] sm:$0xf]
      %s390 = scalar_lea.vmem %s1, 4
      %v391 = vld [vmem:[%s390] sm:$0xf]
      %394 = vrot.lane.b32.xlu0 %v386, 10
      %v395 = vpop.permute.xlu0 %394
      %396 = vrot.lane.b32.xlu0 %v387, 10
      %v397 = vpop.permute.xlu0 %396
      %vm398 = vcmask 80896
      %v399 = vsel %vm398, %v395, %v397
      %vm400 = vcmask 64512
      %v402 = vsel %vm400, %v391, 0
      %vm404 = vcmask 1043456
      %v406 = vsel %vm404, %v399, 0
      %408 = vmatprep.subr.bf16.mxu0 0
      %409 = vmatpush1.bf16.msra.mxu0 0
      %410 = vmatprep.subr.bf16.mxu0 0
      %411 = vmatpush1.bf16.msra.mxu0 0
      %412 = vmatprep.subr.bf16.mxu0 0
      %413 = vmatpush1.bf16.msra.mxu0 0
      %414 = vmatprep.subr.bf16.mxu0 0
      %415 = vmatpush1.bf16.msra.mxu0 0
      %416 = vmatprep.subr.bf16.mxu0 0
      %417 = vmatpush1.bf16.msra.mxu0 0
      %418 = vmatprep.subr.bf16.mxu0 0
      %419 = vmatpush1.bf16.msra.mxu0 0
      %420 = vmatprep.subr.bf16.mxu0 0
      %421 = vmatpush1.bf16.msra.mxu0 0
      %422 = vmatprep.subr.bf16.mxu0 0
      %423 = vmatpush1.bf16.msra.mxu0 %v406
      %424 = vmatprep.subr.bf16.mxu0 0
      %425 = vmatpush2.bf16.msra.mxu0 0
      %426 = vmatprep.subr.bf16.mxu0 0
      %427 = vmatpush2.bf16.msra.mxu0 0
      %428 = vmatprep.subr.bf16.mxu0 0
      %429 = vmatpush2.bf16.msra.mxu0 0
      %430 = vmatprep.subr.bf16.mxu0 0
      %431 = vmatpush2.bf16.msra.mxu0 0
      %432 = vmatprep.subr.bf16.mxu0 0
      %433 = vmatpush2.bf16.msra.mxu0 0
      %434 = vmatprep.subr.bf16.mxu0 0
      %435 = vmatpush2.bf16.msra.mxu0 0
      %436 = vmatprep.subr.bf16.mxu0 0
      %437 = vmatpush2.bf16.msra.mxu0 0
      %438 = vmatprep.subr.bf16.mxu0 0
      %439 = vmatpush2.bf16.msra.mxu0 0
      %440 = vmatprep.mubr.bf16.mxu0 0
      %441 = vmatmul.mubr.bf16.gmra.mxu0 %v402
      %v442 = vpop.f32.mrf.mxu0
      %v443 = vadd.f32 0.0, %v442
      %v444 = vpop.f32.mrf.mxu0
      %v445 = vpop.f32.mrf.mxu0
      %v446 = vpop.f32.mrf.mxu0
      %447 = vdwg.mxu0
      %448 = vrot.lane.b32.xlu0 %v386, 11
      %v449 = vpop.permute.xlu0 %448
      %450 = vrot.lane.b32.xlu0 %v387, 11
      %v451 = vpop.permute.xlu0 %450
      %vm452 = vcmask 89088
      %v453 = vsel %vm452, %v449, %v451
      %v455 = vsel %vm400, %v389, 0
      %v458 = vsel %vm404, %v453, 0
      %460 = vmatprep.subr.bf16.mxu0 0
      %461 = vmatpush1.bf16.msra.mxu0 0
      %462 = vmatprep.subr.bf16.mxu0 0
      %463 = vmatpush1.bf16.msra.mxu0 0
      %464 = vmatprep.subr.bf16.mxu0 0
      %465 = vmatpush1.bf16.msra.mxu0 0
      %466 = vmatprep.subr.bf16.mxu0 0
      %467 = vmatpush1.bf16.msra.mxu0 0
      %468 = vmatprep.subr.bf16.mxu0 0
      %469 = vmatpush1.bf16.msra.mxu0 0
      %470 = vmatprep.subr.bf16.mxu0 0
      %471 = vmatpush1.bf16.msra.mxu0 0
      %472 = vmatprep.subr.bf16.mxu0 0
      %473 = vmatpush1.bf16.msra.mxu0 0
      %474 = vmatprep.subr.bf16.mxu0 0
      %475 = vmatpush1.bf16.msra.mxu0 %v458
      %476 = vmatprep.subr.bf16.mxu0 0
      %477 = vmatpush2.bf16.msra.mxu0 0
      %478 = vmatprep.subr.bf16.mxu0 0
      %479 = vmatpush2.bf16.msra.mxu0 0
      %480 = vmatprep.subr.bf16.mxu0 0
      %481 = vmatpush2.bf16.msra.mxu0 0
      %482 = vmatprep.subr.bf16.mxu0 0
      %483 = vmatpush2.bf16.msra.mxu0 0
      %484 = vmatprep.subr.bf16.mxu0 0
      %485 = vmatpush2.bf16.msra.mxu0 0
      %486 = vmatprep.subr.bf16.mxu0 0
      %487 = vmatpush2.bf16.msra.mxu0 0
      %488 = vmatprep.subr.bf16.mxu0 0
      %489 = vmatpush2.bf16.msra.mxu0 0
      %490 = vmatprep.subr.bf16.mxu0 0
      %491 = vmatpush2.bf16.msra.mxu0 0
      %492 = vmatprep.mubr.bf16.mxu0 0
      %493 = vmatmul.mubr.bf16.gmra.mxu0 %v455
      %v494 = vpop.f32.mrf.mxu0
      %v495 = vadd.f32 %v443, %v494
      %v496 = vpop.f32.mrf.mxu0
      %v497 = vpop.f32.mrf.mxu0
      %v498 = vpop.f32.mrf.mxu0
      %499 = vdwg.mxu0
      %s500 = scalar_lea.vmem %s1, 8
      %v501 = vld [vmem:[%s500] sm:$0xf]
      %502 = vrot.lane.b32.xlu0 %v386, 9
      %v503 = vpop.permute.xlu0 %502
      %504 = vrot.lane.b32.xlu0 %v387, 9
      %v505 = vpop.permute.xlu0 %504
      %vm506 = vcmask 72704
      %v507 = vsel %vm506, %v503, %v505
      %v509 = vsel %vm400, %v501, 0
      %v512 = vsel %vm404, %v507, 0
      %514 = vmatprep.subr.bf16.mxu0 0
      %515 = vmatpush1.bf16.msra.mxu0 0
      %516 = vmatprep.subr.bf16.mxu0 0
      %517 = vmatpush1.bf16.msra.mxu0 0
      %518 = vmatprep.subr.bf16.mxu0 0
      %519 = vmatpush1.bf16.msra.mxu0 0
      %520 = vmatprep.subr.bf16.mxu0 0
      %521 = vmatpush1.bf16.msra.mxu0 0
      %522 = vmatprep.subr.bf16.mxu0 0
      %523 = vmatpush1.bf16.msra.mxu0 0
      %524 = vmatprep.subr.bf16.mxu0 0
      %525 = vmatpush1.bf16.msra.mxu0 0
      %526 = vmatprep.subr.bf16.mxu0 0
      %527 = vmatpush1.bf16.msra.mxu0 0
      %528 = vmatprep.subr.bf16.mxu0 0
      %529 = vmatpush1.bf16.msra.mxu0 %v512
      %530 = vmatprep.subr.bf16.mxu0 0
      %531 = vmatpush2.bf16.msra.mxu0 0
      %532 = vmatprep.subr.bf16.mxu0 0
      %533 = vmatpush2.bf16.msra.mxu0 0
      %534 = vmatprep.subr.bf16.mxu0 0
      %535 = vmatpush2.bf16.msra.mxu0 0
      %536 = vmatprep.subr.bf16.mxu0 0
      %537 = vmatpush2.bf16.msra.mxu0 0
      %538 = vmatprep.subr.bf16.mxu0 0
      %539 = vmatpush2.bf16.msra.mxu0 0
      %540 = vmatprep.subr.bf16.mxu0 0
      %541 = vmatpush2.bf16.msra.mxu0 0
      %542 = vmatprep.subr.bf16.mxu0 0
      %543 = vmatpush2.bf16.msra.mxu0 0
      %544 = vmatprep.subr.bf16.mxu0 0
      %545 = vmatpush2.bf16.msra.mxu0 0
      %546 = vmatprep.mubr.bf16.mxu0 0
      %547 = vmatmul.mubr.bf16.gmra.mxu0 %v509
      %v548 = vpop.f32.mrf.mxu0
      %v549 = vadd.f32 0.0, %v548
      %v550 = vpop.f32.mrf.mxu0
      %v551 = vpop.f32.mrf.mxu0
      %v552 = vpop.f32.mrf.mxu0
      %553 = vdwg.mxu0
      %v554 = vadd.f32 %v495, %v549
      %s555 = scalar_lea.vmem %s1, 12
      %v556 = vld [vmem:[%s555] sm:$0xf]
      %557 = vrot.lane.b32.xlu0 %v386, 1
      %v558 = vpop.permute.xlu0 %557
      %559 = vrot.lane.b32.xlu0 %v387, 1
      %v560 = vpop.permute.xlu0 %559
      %vm561 = vcmask 7168
      %v562 = vsel %vm561, %v558, %v560
      %v564 = vsel %vm400, %v556, 0
      %v567 = vsel %vm404, %v562, 0
      %569 = vmatprep.subr.bf16.mxu0 0
      %570 = vmatpush1.bf16.msra.mxu0 0
      %571 = vmatprep.subr.bf16.mxu0 0
      %572 = vmatpush1.bf16.msra.mxu0 0
      %573 = vmatprep.subr.bf16.mxu0 0
      %574 = vmatpush1.bf16.msra.mxu0 0
      %575 = vmatprep.subr.bf16.mxu0 0
      %576 = vmatpush1.bf16.msra.mxu0 0
      %577 = vmatprep.subr.bf16.mxu0 0
      %578 = vmatpush1.bf16.msra.mxu0 0
      %579 = vmatprep.subr.bf16.mxu0 0
      %580 = vmatpush1.bf16.msra.mxu0 0
      %581 = vmatprep.subr.bf16.mxu0 0
      %582 = vmatpush1.bf16.msra.mxu0 0
      %583 = vmatprep.subr.bf16.mxu0 0
      %584 = vmatpush1.bf16.msra.mxu0 %v567
      %585 = vmatprep.subr.bf16.mxu0 0
      %586 = vmatpush2.bf16.msra.mxu0 0
      %587 = vmatprep.subr.bf16.mxu0 0
      %588 = vmatpush2.bf16.msra.mxu0 0
      %589 = vmatprep.subr.bf16.mxu0 0
      %590 = vmatpush2.bf16.msra.mxu0 0
      %591 = vmatprep.subr.bf16.mxu0 0
      %592 = vmatpush2.bf16.msra.mxu0 0
      %593 = vmatprep.subr.bf16.mxu0 0
      %594 = vmatpush2.bf16.msra.mxu0 0
      %595 = vmatprep.subr.bf16.mxu0 0
      %596 = vmatpush2.bf16.msra.mxu0 0
      %597 = vmatprep.subr.bf16.mxu0 0
      %598 = vmatpush2.bf16.msra.mxu0 0
      %599 = vmatprep.subr.bf16.mxu0 0
      %600 = vmatpush2.bf16.msra.mxu0 0
      %601 = vmatprep.mubr.bf16.mxu0 0
      %602 = vmatmul.mubr.bf16.gmra.mxu0 %v564
      %v603 = vpop.f32.mrf.mxu0
      %v604 = vadd.f32 0.0, %v603
      %v605 = vpop.f32.mrf.mxu0
      %v606 = vpop.f32.mrf.mxu0
      %v607 = vpop.f32.mrf.mxu0
      %608 = vdwg.mxu0
      %v609 = vadd.f32 %v554, %v604
      %s610 = scalar_lea.vmem %s1, 16
      %v611 = vld [vmem:[%s610] sm:$0xf]
      %v613 = vsel %vm400, %v611, 0
      %v616 = vsel %vm404, %v387, 0
      %618 = vmatprep.subr.bf16.mxu0 0
      %619 = vmatpush1.bf16.msra.mxu0 0
      %620 = vmatprep.subr.bf16.mxu0 0
      %621 = vmatpush1.bf16.msra.mxu0 0
      %622 = vmatprep.subr.bf16.mxu0 0
      %623 = vmatpush1.bf16.msra.mxu0 0
      %624 = vmatprep.subr.bf16.mxu0 0
      %625 = vmatpush1.bf16.msra.mxu0 0
      %626 = vmatprep.subr.bf16.mxu0 0
      %627 = vmatpush1.bf16.msra.mxu0 0
      %628 = vmatprep.subr.bf16.mxu0 0
      %629 = vmatpush1.bf16.msra.mxu0 0
      %630 = vmatprep.subr.bf16.mxu0 0
      %631 = vmatpush1.bf16.msra.mxu0 0
      %632 = vmatprep.subr.bf16.mxu0 0
      %633 = vmatpush1.bf16.msra.mxu0 %v616
      %634 = vmatprep.subr.bf16.mxu0 0
      %635 = vmatpush2.bf16.msra.mxu0 0
      %636 = vmatprep.subr.bf16.mxu0 0
      %637 = vmatpush2.bf16.msra.mxu0 0
      %638 = vmatprep.subr.bf16.mxu0 0
      %639 = vmatpush2.bf16.msra.mxu0 0
      %640 = vmatprep.subr.bf16.mxu0 0
      %641 = vmatpush2.bf16.msra.mxu0 0
      %642 = vmatprep.subr.bf16.mxu0 0
      %643 = vmatpush2.bf16.msra.mxu0 0
      %644 = vmatprep.subr.bf16.mxu0 0
      %645 = vmatpush2.bf16.msra.mxu0 0
      %646 = vmatprep.subr.bf16.mxu0 0
      %647 = vmatpush2.bf16.msra.mxu0 0
      %648 = vmatprep.subr.bf16.mxu0 0
      %649 = vmatpush2.bf16.msra.mxu0 0
      %650 = vmatprep.mubr.bf16.mxu0 0
      %651 = vmatmul.mubr.bf16.gmra.mxu0 %v613
      %v652 = vpop.f32.mrf.mxu0
      %v653 = vadd.f32 0.0, %v652
      %v654 = vpop.f32.mrf.mxu0
      %v655 = vpop.f32.mrf.mxu0
      %v656 = vpop.f32.mrf.mxu0
      %657 = vdwg.mxu0
      %v658 = vadd.f32 %v609, %v653
      %s659 = scalar_lea.vmem %s1, 20
      %v660 = vld [vmem:[%s659] sm:$0xf]
      %662 = vrot.lane.b32.xlu0 %v387, 127
      %v663 = vpop.permute.xlu0 %662
      %664 = vrot.lane.b32.xlu0 %v388, 127
      %v665 = vpop.permute.xlu0 %664
      %vm666 = vcmask 1039360
      %v667 = vsel %vm666, %v663, %v665
      %v669 = vsel %vm400, %v660, 0
      %v672 = vsel %vm404, %v667, 0
      %674 = vmatprep.subr.bf16.mxu0 0
      %675 = vmatpush1.bf16.msra.mxu0 0
      %676 = vmatprep.subr.bf16.mxu0 0
      %677 = vmatpush1.bf16.msra.mxu0 0
      %678 = vmatprep.subr.bf16.mxu0 0
      %679 = vmatpush1.bf16.msra.mxu0 0
      %680 = vmatprep.subr.bf16.mxu0 0
      %681 = vmatpush1.bf16.msra.mxu0 0
      %682 = vmatprep.subr.bf16.mxu0 0
      %683 = vmatpush1.bf16.msra.mxu0 0
      %684 = vmatprep.subr.bf16.mxu0 0
      %685 = vmatpush1.bf16.msra.mxu0 0
      %686 = vmatprep.subr.bf16.mxu0 0
      %687 = vmatpush1.bf16.msra.mxu0 0
      %688 = vmatprep.subr.bf16.mxu0 0
      %689 = vmatpush1.bf16.msra.mxu0 %v672
      %690 = vmatprep.subr.bf16.mxu0 0
      %691 = vmatpush2.bf16.msra.mxu0 0
      %692 = vmatprep.subr.bf16.mxu0 0
      %693 = vmatpush2.bf16.msra.mxu0 0
      %694 = vmatprep.subr.bf16.mxu0 0
      %695 = vmatpush2.bf16.msra.mxu0 0
      %696 = vmatprep.subr.bf16.mxu0 0
      %697 = vmatpush2.bf16.msra.mxu0 0
      %698 = vmatprep.subr.bf16.mxu0 0
      %699 = vmatpush2.bf16.msra.mxu0 0
      %700 = vmatprep.subr.bf16.mxu0 0
      %701 = vmatpush2.bf16.msra.mxu0 0
      %702 = vmatprep.subr.bf16.mxu0 0
      %703 = vmatpush2.bf16.msra.mxu0 0
      %704 = vmatprep.subr.bf16.mxu0 0
      %705 = vmatpush2.bf16.msra.mxu0 0
      %706 = vmatprep.mubr.bf16.mxu0 0
      %707 = vmatmul.mubr.bf16.gmra.mxu0 %v669
      %v708 = vpop.f32.mrf.mxu0
      %v709 = vadd.f32 0.0, %v708
      %v710 = vpop.f32.mrf.mxu0
      %v711 = vpop.f32.mrf.mxu0
      %v712 = vpop.f32.mrf.mxu0
      %713 = vdwg.mxu0
      %v714 = vadd.f32 %v658, %v709
      %s715 = scalar_lea.vmem %s1, 24
      %v716 = vld [vmem:[%s715] sm:$0xf]
      %717 = vrot.lane.b32.xlu0 %v387, 119
      %v718 = vpop.permute.xlu0 %717
      %719 = vrot.lane.b32.xlu0 %v388, 119
      %v720 = vpop.permute.xlu0 %719
      %vm721 = vcmask 973824
      %v722 = vsel %vm721, %v718, %v720
      %v724 = vsel %vm400, %v716, 0
      %v727 = vsel %vm404, %v722, 0
      %729 = vmatprep.subr.bf16.mxu0 0
      %730 = vmatpush1.bf16.msra.mxu0 0
      %731 = vmatprep.subr.bf16.mxu0 0
      %732 = vmatpush1.bf16.msra.mxu0 0
      %733 = vmatprep.subr.bf16.mxu0 0
      %734 = vmatpush1.bf16.msra.mxu0 0
      %735 = vmatprep.subr.bf16.mxu0 0
      %736 = vmatpush1.bf16.msra.mxu0 0
      %737 = vmatprep.subr.bf16.mxu0 0
      %738 = vmatpush1.bf16.msra.mxu0 0
      %739 = vmatprep.subr.bf16.mxu0 0
      %740 = vmatpush1.bf16.msra.mxu0 0
      %741 = vmatprep.subr.bf16.mxu0 0
      %742 = vmatpush1.bf16.msra.mxu0 0
      %743 = vmatprep.subr.bf16.mxu0 0
      %744 = vmatpush1.bf16.msra.mxu0 %v727
      %745 = vmatprep.subr.bf16.mxu0 0
      %746 = vmatpush2.bf16.msra.mxu0 0
      %747 = vmatprep.subr.bf16.mxu0 0
      %748 = vmatpush2.bf16.msra.mxu0 0
      %749 = vmatprep.subr.bf16.mxu0 0
      %750 = vmatpush2.bf16.msra.mxu0 0
      %751 = vmatprep.subr.bf16.mxu0 0
      %752 = vmatpush2.bf16.msra.mxu0 0
      %753 = vmatprep.subr.bf16.mxu0 0
      %754 = vmatpush2.bf16.msra.mxu0 0
      %755 = vmatprep.subr.bf16.mxu0 0
      %756 = vmatpush2.bf16.msra.mxu0 0
      %757 = vmatprep.subr.bf16.mxu0 0
      %758 = vmatpush2.bf16.msra.mxu0 0
      %759 = vmatprep.subr.bf16.mxu0 0
      %760 = vmatpush2.bf16.msra.mxu0 0
      %761 = vmatprep.mubr.bf16.mxu0 0
      %762 = vmatmul.mubr.bf16.gmra.mxu0 %v724
      %v763 = vpop.f32.mrf.mxu0
      %v764 = vadd.f32 0.0, %v763
      %v765 = vpop.f32.mrf.mxu0
      %v766 = vpop.f32.mrf.mxu0
      %v767 = vpop.f32.mrf.mxu0
      %768 = vdwg.mxu0
      %v769 = vadd.f32 %v714, %v764
      %s770 = scalar_lea.vmem %s1, 28
      %v771 = vld [vmem:[%s770] sm:$0xf]
      %772 = vrot.lane.b32.xlu0 %v387, 118
      %v773 = vpop.permute.xlu0 %772
      %774 = vrot.lane.b32.xlu0 %v388, 118
      %v775 = vpop.permute.xlu0 %774
      %vm776 = vcmask 965632
      %v777 = vsel %vm776, %v773, %v775
      %v779 = vsel %vm400, %v771, 0
      %v782 = vsel %vm404, %v777, 0
      %784 = vmatprep.subr.bf16.mxu0 0
      %785 = vmatpush1.bf16.msra.mxu0 0
      %786 = vmatprep.subr.bf16.mxu0 0
      %787 = vmatpush1.bf16.msra.mxu0 0
      %788 = vmatprep.subr.bf16.mxu0 0
      %789 = vmatpush1.bf16.msra.mxu0 0
      %790 = vmatprep.subr.bf16.mxu0 0
      %791 = vmatpush1.bf16.msra.mxu0 0
      %792 = vmatprep.subr.bf16.mxu0 0
      %793 = vmatpush1.bf16.msra.mxu0 0
      %794 = vmatprep.subr.bf16.mxu0 0
      %795 = vmatpush1.bf16.msra.mxu0 0
      %796 = vmatprep.subr.bf16.mxu0 0
      %797 = vmatpush1.bf16.msra.mxu0 0
      %798 = vmatprep.subr.bf16.mxu0 0
      %799 = vmatpush1.bf16.msra.mxu0 %v782
      %800 = vmatprep.subr.bf16.mxu0 0
      %801 = vmatpush2.bf16.msra.mxu0 0
      %802 = vmatprep.subr.bf16.mxu0 0
      %803 = vmatpush2.bf16.msra.mxu0 0
      %804 = vmatprep.subr.bf16.mxu0 0
      %805 = vmatpush2.bf16.msra.mxu0 0
      %806 = vmatprep.subr.bf16.mxu0 0
      %807 = vmatpush2.bf16.msra.mxu0 0
      %808 = vmatprep.subr.bf16.mxu0 0
      %809 = vmatpush2.bf16.msra.mxu0 0
      %810 = vmatprep.subr.bf16.mxu0 0
      %811 = vmatpush2.bf16.msra.mxu0 0
      %812 = vmatprep.subr.bf16.mxu0 0
      %813 = vmatpush2.bf16.msra.mxu0 0
      %814 = vmatprep.subr.bf16.mxu0 0
      %815 = vmatpush2.bf16.msra.mxu0 0
      %816 = vmatprep.mubr.bf16.mxu0 0
      %817 = vmatmul.mubr.bf16.gmra.mxu0 %v779
      %v818 = vpop.f32.mrf.mxu0
      %v819 = vadd.f32 0.0, %v818
      %v820 = vpop.f32.mrf.mxu0
      %v821 = vpop.f32.mrf.mxu0
      %v822 = vpop.f32.mrf.mxu0
      %823 = vdwg.mxu0
      %v824 = vadd.f32 %v769, %v819
      %s825 = scalar_lea.vmem %s1, 32
      %v826 = vld [vmem:[%s825] sm:$0xf]
      %827 = vrot.lane.b32.xlu0 %v387, 117
      %v828 = vpop.permute.xlu0 %827
      %829 = vrot.lane.b32.xlu0 %v388, 117
      %v830 = vpop.permute.xlu0 %829
      %vm831 = vcmask 957440
      %v832 = vsel %vm831, %v828, %v830
      %v834 = vsel %vm400, %v826, 0
      %v837 = vsel %vm404, %v832, 0
      %839 = vmatprep.subr.bf16.mxu0 0
      %840 = vmatpush1.bf16.msra.mxu0 0
      %841 = vmatprep.subr.bf16.mxu0 0
      %842 = vmatpush1.bf16.msra.mxu0 0
      %843 = vmatprep.subr.bf16.mxu0 0
      %844 = vmatpush1.bf16.msra.mxu0 0
      %845 = vmatprep.subr.bf16.mxu0 0
      %846 = vmatpush1.bf16.msra.mxu0 0
      %847 = vmatprep.subr.bf16.mxu0 0
      %848 = vmatpush1.bf16.msra.mxu0 0
      %849 = vmatprep.subr.bf16.mxu0 0
      %850 = vmatpush1.bf16.msra.mxu0 0
      %851 = vmatprep.subr.bf16.mxu0 0
      %852 = vmatpush1.bf16.msra.mxu0 0
      %853 = vmatprep.subr.bf16.mxu0 0
      %854 = vmatpush1.bf16.msra.mxu0 %v837
      %855 = vmatprep.subr.bf16.mxu0 0
      %856 = vmatpush2.bf16.msra.mxu0 0
      %857 = vmatprep.subr.bf16.mxu0 0
      %858 = vmatpush2.bf16.msra.mxu0 0
      %859 = vmatprep.subr.bf16.mxu0 0
      %860 = vmatpush2.bf16.msra.mxu0 0
      %861 = vmatprep.subr.bf16.mxu0 0
      %862 = vmatpush2.bf16.msra.mxu0 0
      %863 = vmatprep.subr.bf16.mxu0 0
      %864 = vmatpush2.bf16.msra.mxu0 0
      %865 = vmatprep.subr.bf16.mxu0 0
      %866 = vmatpush2.bf16.msra.mxu0 0
      %867 = vmatprep.subr.bf16.mxu0 0
      %868 = vmatpush2.bf16.msra.mxu0 0
      %869 = vmatprep.subr.bf16.mxu0 0
      %870 = vmatpush2.bf16.msra.mxu0 0
      %871 = vmatprep.mubr.bf16.mxu0 0
      %872 = vmatmul.mubr.bf16.gmra.mxu0 %v834
      %v873 = vpop.f32.mrf.mxu0
      %v874 = vadd.f32 0.0, %v873
      %v875 = vpop.f32.mrf.mxu0
      %v876 = vpop.f32.mrf.mxu0
      %v877 = vpop.f32.mrf.mxu0
      %878 = vdwg.mxu0
      %v879 = vadd.f32 %v824, %v874
      %v880 = vld [vmem:[%s348] sm:$0x1]
      %v882 = vlaneseq
      %v883 = vshrl.u32 %v882, 7
      %v884 = vsub.s32 0, %v883
      %v885 = vrot.slane %v880, %v884
      %v887 = vmul.f32 %v879, %v885
      %v888 = vpack.c.bf16 %v887, %v887
      %889 = vst [vmem:[%s376] sm:$0xf] %v888
      %890 = vadd.xlane.f32.xlu0 %v887
      %v891 = vpop.xlane.xlu0 %890
      %vm892 = vcmask 7168
      %893 = vst.msk [vmem:[%s380] sm:$0xff] %vm892, %v891
      %v894 = vmul.f32 %v887, %v887
      %895 = vadd.xlane.f32.xlu0 %v894
      %v896 = vpop.xlane.xlu0 %895
      %897 = vst.msk [vmem:[%s384] sm:$0xff] %vm892, %v896
      %p898 = scmp.lt.s32.totalorder %s19, 1
      %s899 = scalar_select %p898, %s19, 1
      %s900 = smul.addr %s899, 4
      %s901 = scalar_lea.vmem %s5, %s900
      %p902 = scmp.lt.s32.totalorder %s19, 1
      %s903 = scalar_select %p902, %s19, 1
      %s904 = smul.addr %s903, 8
      %s905 = scalar_lea.vmem %s6, %s904
      %p906 = scmp.lt.s32.totalorder %s19, 1
      %s907 = scalar_select %p906, %s19, 1
      %s908 = smul.addr %s907, 8
      %s909 = scalar_lea.vmem %s7, %s908
      // Predicated region
      $region41: #{down_conv_res_block.18} parent=39 // pred_check
        %p910 = pneg %p174
      $region42: #{down_conv_res_block.18} parent=39 // pred_check_branch
        %912 = sbr.rel (%p910) target = $region44
      $region43: #{down_conv_res_block.18} parent=39 // pred_region
        _
      $region44: #{down_conv_res_block.18} parent=39 // pred_fallthru
        _
      // Predicated region
      $region45: #{down_conv_res_block.18} parent=39 // pred_check
        %p913 = pneg %p200
      $region46: #{down_conv_res_block.18} parent=39 // pred_check_branch
        %915 = sbr.rel (%p913) target = $region48
      $region47: #{down_conv_res_block.18} parent=39 // pred_region
        _
      $region48: #{down_conv_res_block.18} parent=39 // pred_fallthru
        _
      // Predicated region
      $region49: #{down_conv_res_block.18} parent=39 // pred_check
        %p916 = pneg %p226
      $region50: #{down_conv_res_block.18} parent=39 // pred_check_branch
        %918 = sbr.rel (%p916) target = $region52
      $region51: #{down_conv_res_block.18} parent=39 // pred_region
        _
      $region52: #{down_conv_res_block.18} parent=39 // pred_fallthru
        _
    $region40: #{down_conv_res_block.18} parent=5 // pred_fallthru
      _
    %p919 = scmp.le.s32.totalorder 2, %s14
    // Predicated region
    $region53: #{down_conv_res_block.18} parent=5 // pred_check
      %p920 = pneg %p919
    $region54: #{down_conv_res_block.18} parent=5 // pred_check_branch
      %922 = sbr.rel (%p920) target = $region56
    $region55: #{down_conv_res_block.18} parent=5 // pred_region
      %s923 = ssub.s32 %s14, 2
      // Predicated region
      $region57: #{down_conv_res_block.18} parent=55 // pred_check
        %p924 = pneg %p180
      $region58: #{down_conv_res_block.18} parent=55 // pred_check_branch
        %926 = sbr.rel (%p924) target = $region60
      $region59: #{down_conv_res_block.18} parent=55 // pred_region
        %p927 = scmp.lt.s32.totalorder %s20, 1
        %s928 = scalar_select %p927, %s20, 1
        %s929 = smul.addr %s928, 4
        %s930 = scalar_lea.vmem %s5, %s929
      $region60: #{down_conv_res_block.18} parent=55 // pred_fallthru
        _
      // Predicated region
      $region61: #{down_conv_res_block.18} parent=55 // pred_check
        %p931 = pneg %p206
      $region62: #{down_conv_res_block.18} parent=55 // pred_check_branch
        %933 = sbr.rel (%p931) target = $region64
      $region63: #{down_conv_res_block.18} parent=55 // pred_region
        %p934 = scmp.lt.s32.totalorder %s20, 1
        %s935 = scalar_select %p934, %s20, 1
        %s936 = smul.addr %s935, 8
        %s937 = scalar_lea.vmem %s6, %s936
      $region64: #{down_conv_res_block.18} parent=55 // pred_fallthru
        _
      // Predicated region
      $region65: #{down_conv_res_block.18} parent=55 // pred_check
        %p938 = pneg %p232
      $region66: #{down_conv_res_block.18} parent=55 // pred_check_branch
        %940 = sbr.rel (%p938) target = $region68
      $region67: #{down_conv_res_block.18} parent=55 // pred_region
        %p941 = scmp.lt.s32.totalorder %s20, 1
        %s942 = scalar_select %p941, %s20, 1
        %s943 = smul.addr %s942, 8
        %s944 = scalar_lea.vmem %s7, %s943
      $region68: #{down_conv_res_block.18} parent=55 // pred_fallthru
        _
    $region56: #{down_conv_res_block.18} parent=5 // pred_fallthru
      _
  $region6: #{down_conv_res_block.18} parent=0 // loop_footer
    %s18 = sadd.s32 1, %s14
  $region7: #{down_conv_res_block.18} parent=0 // loop_footer_branch
    %13 = sbr.rel target = $region3
  $region8: #{down_conv_res_block.18} parent=0 // loop_exit
    _

// kernel: down_conv_res_block.14
$region0: #{down_conv_res_block.14}
  #allocation0 [shape = 'u32[]', space=smem, size = 0x4, offset = 0x4, fixed_abs, tag = 'smem constant byte address 0x4 - core index']
  #allocation1 [shape = 'u32[144,128]{1,0:T(1,128)}', space=vmem, size = 0x12000, scoped, tag = 'internal scratch']
  %s0 = inlined_call_operand.vmem [shape: f32[1,256], index: 0, kind: input, shape index: {}]
  %s1 = inlined_call_operand.vmem [shape: bf16[1,8,4], index: 1, kind: input, shape index: {}]
  %s2 = inlined_call_operand.vmem [shape: bf16[4,256], index: 2, kind: input, shape index: {}]
  %s3 = inlined_call_operand.vmem [shape: bf16[8,256], index: 3, kind: output, shape index: {0}]
  %s4 = inlined_call_operand.vmem [shape: f32[2,8,1], index: 4, kind: output, shape index: {1}]
  %s5 = inlined_call_operand.vmem [shape: f32[2,8,1], index: 5, kind: output, shape index: {2}]
  %6 = xla_tuple %s3, %s4, %s5
  %s7 = sld [smem:[#allocation0]]
  $region61: #{down_conv_res_block.14} parent=0
    _
  %s9 = ssub.s32 1, %s7
  %s10 = scalar_select 0, %s9, %s7
  loop: start=0, step=1, limit=4
  $region2: #{down_conv_res_block.14} parent=0 // loop_pre_header
    _
  $region3: #{down_conv_res_block.14} parent=0 // loop_header
    %s12 = sphi 0, %s16
    %p13 = scmp.ge.s32.totalorder %s12, 4
    %s22 = sphi 0, %s24
    %s25 = sphi 0, %s22
    %s26 = sphi 0, %s25
    %s42 = sphi 0, %s26
    %s46 = sphi 0, %s46
    %s48 = sphi 0, %s46
    %s49 = sphi 0, %s48
    %s63 = sphi 0, %s49
    %s69 = sphi 0, %s71
    %s72 = sphi 0, %s69
    %s73 = sphi 0, %s72
    %s89 = sphi 0, %s73
    %s95 = sphi 0, %s97
    %s98 = sphi 0, %s95
    %s99 = sphi 0, %s98
    %s115 = sphi 0, %s99
    %s121 = sphi 0, %s123
    %s124 = sphi 0, %s121
    %s125 = sphi 0, %s124
    %s141 = sphi 0, %s125
    %s147 = sphi 0, %s149
    %s150 = sphi 0, %s147
    %s151 = sphi 0, %s150
    %s167 = sphi 0, %s151
  $region4: #{down_conv_res_block.14} parent=0 // loop_header_branch
    %15 = sbr.rel (%p13) target = $region8
  $region5: #{down_conv_res_block.14} parent=0 // loop_body
    %s17 = ssub.s32 %s12, 1
    %s18 = ssub.s32 %s12, 2
    %s19 = sadd.s32 %s12, 1
    %s20 = ssub.s32 %s12, %s19
    %p21 = scmp.eq.s32.totalorder %s20, 0
    %s23 = sadd.s32 %s22, 1
    %s24 = scalar_select %p21, %s22, %s23
    %p27 = pneg %p21
    %p28 = scmp.eq.s32.totalorder %s12, 1
    %p29 = por %p27, %p28
    %p30 = scmp.ne.s32.totalorder %s22, %s25
    %p31 = scmp.eq.s32.totalorder %s12, 0
    %p32 = por %p30, %p31
    %p33 = scmp.ne.s32.totalorder %s22, %s25
    %p34 = scmp.eq.s32.totalorder %s17, 1
    %p35 = por %p33, %p34
    %p36 = scmp.ne.s32.totalorder %s25, %s26
    %p37 = scmp.eq.s32.totalorder %s17, 0
    %p38 = por %p36, %p37
    %p39 = scmp.ne.s32.totalorder %s25, %s26
    %p40 = scmp.eq.s32.totalorder %s18, 1
    %p41 = por %p39, %p40
    %p43 = scmp.ne.s32.totalorder %s26, %s42
    %p44 = scmp.eq.s32.totalorder %s18, 0
    %p45 = por %p43, %p44
    %s47 = sadd.s32 %s46, 1
    %p50 = scmp.eq.s32.totalorder %s12, 1
    %p51 = scmp.ne.s32.totalorder %s46, %s48
    %p52 = scmp.eq.s32.totalorder %s12, 0
    %p53 = por %p51, %p52
    %p54 = scmp.ne.s32.totalorder %s46, %s48
    %p55 = scmp.eq.s32.totalorder %s17, 1
    %p56 = por %p54, %p55
    %p57 = scmp.ne.s32.totalorder %s48, %s49
    %p58 = scmp.eq.s32.totalorder %s17, 0
    %p59 = por %p57, %p58
    %p60 = scmp.ne.s32.totalorder %s48, %s49
    %p61 = scmp.eq.s32.totalorder %s18, 1
    %p62 = por %p60, %p61
    %p64 = scmp.ne.s32.totalorder %s49, %s63
    %p65 = scmp.eq.s32.totalorder %s18, 0
    %p66 = por %p64, %p65
    %s67 = ssub.s32 %s12, %s19
    %p68 = scmp.eq.s32.totalorder %s67, 0
    %s70 = sadd.s32 %s69, 1
    %s71 = scalar_select %p68, %s69, %s70
    %p74 = pneg %p68
    %p75 = scmp.eq.s32.totalorder %s12, 1
    %p76 = por %p74, %p75
    %p77 = scmp.ne.s32.totalorder %s69, %s72
    %p78 = scmp.eq.s32.totalorder %s12, 0
    %p79 = por %p77, %p78
    %p80 = scmp.ne.s32.totalorder %s69, %s72
    %p81 = scmp.eq.s32.totalorder %s17, 1
    %p82 = por %p80, %p81
    %p83 = scmp.ne.s32.totalorder %s72, %s73
    %p84 = scmp.eq.s32.totalorder %s17, 0
    %p85 = por %p83, %p84
    %p86 = scmp.ne.s32.totalorder %s72, %s73
    %p87 = scmp.eq.s32.totalorder %s18, 1
    %p88 = por %p86, %p87
    %p90 = scmp.ne.s32.totalorder %s73, %s89
    %p91 = scmp.eq.s32.totalorder %s18, 0
    %p92 = por %p90, %p91
    %s93 = ssub.s32 %s12, %s19
    %p94 = scmp.eq.s32.totalorder %s93, 0
    %s96 = sadd.s32 %s95, 1
    %s97 = scalar_select %p94, %s95, %s96
    %p100 = pneg %p94
    %p101 = scmp.eq.s32.totalorder %s12, 1
    %p102 = por %p100, %p101
    %p103 = scmp.ne.s32.totalorder %s95, %s98
    %p104 = scmp.eq.s32.totalorder %s12, 0
    %p105 = por %p103, %p104
    %p106 = scmp.ne.s32.totalorder %s95, %s98
    %p107 = scmp.eq.s32.totalorder %s17, 1
    %p108 = por %p106, %p107
    %p109 = scmp.ne.s32.totalorder %s98, %s99
    %p110 = scmp.eq.s32.totalorder %s17, 0
    %p111 = por %p109, %p110
    %p112 = scmp.ne.s32.totalorder %s98, %s99
    %p113 = scmp.eq.s32.totalorder %s18, 1
    %p114 = por %p112, %p113
    %p116 = scmp.ne.s32.totalorder %s99, %s115
    %p117 = scmp.eq.s32.totalorder %s18, 0
    %p118 = por %p116, %p117
    %s119 = ssub.s32 %s12, %s19
    %p120 = scmp.eq.s32.totalorder %s119, 0
    %s122 = sadd.s32 %s121, 1
    %s123 = scalar_select %p120, %s121, %s122
    %p126 = pneg %p120
    %p127 = scmp.eq.s32.totalorder %s12, 1
    %p128 = por %p126, %p127
    %p129 = scmp.ne.s32.totalorder %s121, %s124
    %p130 = scmp.eq.s32.totalorder %s12, 0
    %p131 = por %p129, %p130
    %p132 = scmp.ne.s32.totalorder %s121, %s124
    %p133 = scmp.eq.s32.totalorder %s17, 1
    %p134 = por %p132, %p133
    %p135 = scmp.ne.s32.totalorder %s124, %s125
    %p136 = scmp.eq.s32.totalorder %s17, 0
    %p137 = por %p135, %p136
    %p138 = scmp.ne.s32.totalorder %s124, %s125
    %p139 = scmp.eq.s32.totalorder %s18, 1
    %p140 = por %p138, %p139
    %p142 = scmp.ne.s32.totalorder %s125, %s141
    %p143 = scmp.eq.s32.totalorder %s18, 0
    %p144 = por %p142, %p143
    %s145 = ssub.s32 %s12, %s19
    %p146 = scmp.eq.s32.totalorder %s145, 0
    %s148 = sadd.s32 %s147, 1
    %s149 = scalar_select %p146, %s147, %s148
    %p152 = pneg %p146
    %p153 = scmp.eq.s32.totalorder %s12, 1
    %p154 = por %p152, %p153
    %p155 = scmp.ne.s32.totalorder %s147, %s150
    %p156 = scmp.eq.s32.totalorder %s12, 0
    %p157 = por %p155, %p156
    %p158 = scmp.ne.s32.totalorder %s147, %s150
    %p159 = scmp.eq.s32.totalorder %s17, 1
    %p160 = por %p158, %p159
    %p161 = scmp.ne.s32.totalorder %s150, %s151
    %p162 = scmp.eq.s32.totalorder %s17, 0
    %p163 = por %p161, %p162
    %p164 = scmp.ne.s32.totalorder %s150, %s151
    %p165 = scmp.eq.s32.totalorder %s18, 1
    %p166 = por %p164, %p165
    %p168 = scmp.ne.s32.totalorder %s151, %s167
    %p169 = scmp.eq.s32.totalorder %s18, 0
    %p170 = por %p168, %p169
    %p171 = scmp.le.s32.totalorder 1, %s12
    %p172 = scmp.lt.s32.totalorder %s12, 3
    %p173 = pnand %p171, %p172
    %p174 = pneg %p173
    // Predicated region
    $region9: #{down_conv_res_block.14} parent=5 // pred_check
      _
    $region10: #{down_conv_res_block.14} parent=5 // pred_check_branch
      %176 = sbr.rel (%p173) target = $region12
    $region11: #{down_conv_res_block.14} parent=5 // pred_region
      %s177 = ssub.s32 %s12, 1
      // Predicated region
      $region13: #{down_conv_res_block.14} parent=11 // pred_check
        %p178 = pneg %p59
      $region14: #{down_conv_res_block.14} parent=11 // pred_check_branch
        %180 = sbr.rel (%p178) target = $region16
      $region15: #{down_conv_res_block.14} parent=11 // pred_region
        _
      $region16: #{down_conv_res_block.14} parent=11 // pred_fallthru
        _
    $region12: #{down_conv_res_block.14} parent=5 // pred_fallthru
      _
    %p181 = scmp.lt.s32.totalorder %s12, 2
    // Predicated region
    $region17: #{down_conv_res_block.14} parent=5 // pred_check
      %p182 = pneg %p181
    $region18: #{down_conv_res_block.14} parent=5 // pred_check_branch
      %184 = sbr.rel (%p182) target = $region20
    $region19: #{down_conv_res_block.14} parent=5 // pred_region
      // Predicated region
      $region21: #{down_conv_res_block.14} parent=19 // pred_check
        %p185 = pneg %p32
      $region22: #{down_conv_res_block.14} parent=19 // pred_check_branch
        %187 = sbr.rel (%p185) target = $region24
      $region23: #{down_conv_res_block.14} parent=19 // pred_region
        %p188 = scmp.lt.s32.totalorder %s12, 1
        %s189 = scalar_select %p188, %s12, 1
        %s190 = scalar_lea.vmem %s0, %s189
      $region24: #{down_conv_res_block.14} parent=19 // pred_fallthru
        _
      // Predicated region
      $region25: #{down_conv_res_block.14} parent=19 // pred_check
        %p191 = pneg %p79
      $region26: #{down_conv_res_block.14} parent=19 // pred_check_branch
        %193 = sbr.rel (%p191) target = $region28
      $region27: #{down_conv_res_block.14} parent=19 // pred_region
        %p194 = scmp.lt.s32.totalorder %s12, 1
        %s195 = scalar_select %p194, %s12, 1
        %s196 = smul.addr %s195, 2
        %s197 = scalar_lea.vmem %s2, %s196
      $region28: #{down_conv_res_block.14} parent=19 // pred_fallthru
        _
    $region20: #{down_conv_res_block.14} parent=5 // pred_fallthru
      _
    %p198 = scmp.le.s32.totalorder 1, %s12
    %p199 = scmp.lt.s32.totalorder %s12, 3
    %p200 = pnand %p198, %p199
    %p201 = pneg %p200
    // Predicated region
    $region29: #{down_conv_res_block.14} parent=5 // pred_check
      _
    $region30: #{down_conv_res_block.14} parent=5 // pred_check_branch
      %203 = sbr.rel (%p200) target = $region32
    $region31: #{down_conv_res_block.14} parent=5 // pred_region
      %s204 = ssub.s32 %s12, 1
      %p205 = scmp.lt.s32.totalorder %s17, 1
      %s206 = scalar_select %p205, %s17, 1
      %s207 = scalar_lea.vmem %s0, %s206
      %p208 = pneg %p38
      %p209 = pneg %p35
      %p210 = pneg %p59
      %p211 = pneg %p56
      %p212 = scmp.lt.s32.totalorder %s17, 1
      %s213 = scalar_select %p212, %s17, 1
      %s214 = smul.addr %s213, 2
      %s215 = scalar_lea.vmem %s2, %s214
      %p216 = pneg %p85
      %p217 = pneg %p82
      %p218 = pneg %p111
      %p219 = pneg %p108
      %p220 = scmp.lt.s32.totalorder %s17, 1
      %s221 = scalar_select %p220, %s17, 1
      %s222 = smul.addr %s221, 4
      %s223 = scalar_lea.vmem %s3, %s222
      %p224 = pneg %p137
      %p225 = pneg %p134
      %p226 = scmp.lt.s32.totalorder %s17, 1
      %s227 = scalar_select %p226, %s17, 1
      %s228 = smul.addr %s227, 8
      %s229 = scalar_lea.vmem %s4, %s228
      %p230 = pneg %p163
      %p231 = pneg %p160
      %p232 = scmp.lt.s32.totalorder %s17, 1
      %s233 = scalar_select %p232, %s17, 1
      %s234 = smul.addr %s233, 8
      %s235 = scalar_lea.vmem %s5, %s234
      %p236 = scmp.lt.s32.totalorder %s17, 1
      %s237 = scalar_select %p236, %s17, 1
      %s238 = scalar_lea.vmem %s0, %s237
      %p239 = scmp.lt.s32.totalorder %s17, 1
      %s240 = scalar_select %p239, %s17, 1
      %s241 = smul.addr %s240, 2
      %s242 = scalar_lea.vmem %s2, %s241
      %p243 = scmp.lt.s32.totalorder %s17, 1
      %s244 = scalar_select %p243, %s17, 1
      %s245 = smul.addr %s244, 4
      %s246 = scalar_lea.vmem %s3, %s245
      %p247 = scmp.lt.s32.totalorder %s17, 1
      %s248 = scalar_select %p247, %s17, 1
      %s249 = smul.addr %s248, 8
      %s250 = scalar_lea.vmem %s4, %s249
      %p251 = scmp.lt.s32.totalorder %s17, 1
      %s252 = scalar_select %p251, %s17, 1
      %s253 = smul.addr %s252, 8
      %s254 = scalar_lea.vmem %s5, %s253
      %v256 = vld [vmem:[%s242] sm:$0x3]
      %v257 = vld [vmem:[%s1] sm:$0xf]
      %vm258 = vcmask 31744
      %v260 = vsel %vm258, %v257, 0
      %vm262 = vcmask 1041408
      %v264 = vsel %vm262, %v256, 0
      %266 = vmatprep.subr.bf16.mxu0 0
      %267 = vmatpush1.bf16.msra.mxu0 0
      %268 = vmatprep.subr.bf16.mxu0 0
      %269 = vmatpush1.bf16.msra.mxu0 0
      %270 = vmatprep.subr.bf16.mxu0 0
      %271 = vmatpush1.bf16.msra.mxu0 0
      %272 = vmatprep.subr.bf16.mxu0 0
      %273 = vmatpush1.bf16.msra.mxu0 0
      %274 = vmatprep.subr.bf16.mxu0 0
      %275 = vmatpush1.bf16.msra.mxu0 0
      %276 = vmatprep.subr.bf16.mxu0 0
      %277 = vmatpush1.bf16.msra.mxu0 0
      %278 = vmatprep.subr.bf16.mxu0 0
      %279 = vmatpush1.bf16.msra.mxu0 0
      %280 = vmatprep.subr.bf16.mxu0 0
      %281 = vmatpush1.bf16.msra.mxu0 %v264
      %282 = vmatprep.subr.bf16.mxu0 0
      %283 = vmatpush2.bf16.msra.mxu0 0
      %284 = vmatprep.subr.bf16.mxu0 0
      %285 = vmatpush2.bf16.msra.mxu0 0
      %286 = vmatprep.subr.bf16.mxu0 0
      %287 = vmatpush2.bf16.msra.mxu0 0
      %288 = vmatprep.subr.bf16.mxu0 0
      %289 = vmatpush2.bf16.msra.mxu0 0
      %290 = vmatprep.subr.bf16.mxu0 0
      %291 = vmatpush2.bf16.msra.mxu0 0
      %292 = vmatprep.subr.bf16.mxu0 0
      %293 = vmatpush2.bf16.msra.mxu0 0
      %294 = vmatprep.subr.bf16.mxu0 0
      %295 = vmatpush2.bf16.msra.mxu0 0
      %296 = vmatprep.subr.bf16.mxu0 0
      %297 = vmatpush2.bf16.msra.mxu0 0
      %298 = vmatprep.mubr.bf16.mxu0 0
      %299 = vmatmul.mubr.bf16.gmra.mxu0 %v260
      %v300 = vpop.f32.mrf.mxu0
      %v301 = vadd.f32 0.0, %v300
      %v302 = vpop.f32.mrf.mxu0
      %v303 = vpop.f32.mrf.mxu0
      %v304 = vpop.f32.mrf.mxu0
      %305 = vdwg.mxu0
      %v306 = vld [vmem:[%s238] sm:$0x1]
      %v308 = vlaneseq
      %v309 = vshrl.u32 %v308, 7
      %v310 = vsub.s32 0, %v309
      %v311 = vrot.slane %v306, %v310
      %v313 = vmul.f32 %v301, %v311
      %v314 = vpack.c.bf16 %v313, %v313
      %315 = vst [vmem:[%s246] sm:$0xf] %v314
      %316 = vadd.xlane.f32.xlu0 %v313
      %v317 = vpop.xlane.xlu0 %316
      %vm318 = vcmask 7168
      %319 = vst.msk [vmem:[%s250] sm:$0xff] %vm318, %v317
      %v320 = vmul.f32 %v313, %v313
      %321 = vadd.xlane.f32.xlu0 %v320
      %v322 = vpop.xlane.xlu0 %321
      %323 = vst.msk [vmem:[%s254] sm:$0xff] %vm318, %v322
      %p324 = scmp.lt.s32.totalorder %s17, 1
      %s325 = scalar_select %p324, %s17, 1
      %s326 = smul.addr %s325, 4
      %s327 = scalar_lea.vmem %s3, %s326
      %p328 = scmp.lt.s32.totalorder %s17, 1
      %s329 = scalar_select %p328, %s17, 1
      %s330 = smul.addr %s329, 8
      %s331 = scalar_lea.vmem %s4, %s330
      %p332 = scmp.lt.s32.totalorder %s17, 1
      %s333 = scalar_select %p332, %s17, 1
      %s334 = smul.addr %s333, 8
      %s335 = scalar_lea.vmem %s5, %s334
      // Predicated region
      $region33: #{down_conv_res_block.14} parent=31 // pred_check
        %p336 = pneg %p108
      $region34: #{down_conv_res_block.14} parent=31 // pred_check_branch
        %338 = sbr.rel (%p336) target = $region36
      $region35: #{down_conv_res_block.14} parent=31 // pred_region
        _
      $region36: #{down_conv_res_block.14} parent=31 // pred_fallthru
        _
      // Predicated region
      $region37: #{down_conv_res_block.14} parent=31 // pred_check
        %p339 = pneg %p134
      $region38: #{down_conv_res_block.14} parent=31 // pred_check_branch
        %341 = sbr.rel (%p339) target = $region40
      $region39: #{down_conv_res_block.14} parent=31 // pred_region
        _
      $region40: #{down_conv_res_block.14} parent=31 // pred_fallthru
        _
      // Predicated region
      $region41: #{down_conv_res_block.14} parent=31 // pred_check
        %p342 = pneg %p160
      $region42: #{down_conv_res_block.14} parent=31 // pred_check_branch
        %344 = sbr.rel (%p342) target = $region44
      $region43: #{down_conv_res_block.14} parent=31 // pred_region
        _
      $region44: #{down_conv_res_block.14} parent=31 // pred_fallthru
        _
    $region32: #{down_conv_res_block.14} parent=5 // pred_fallthru
      _
    %p345 = scmp.le.s32.totalorder 2, %s12
    // Predicated region
    $region45: #{down_conv_res_block.14} parent=5 // pred_check
      %p346 = pneg %p345
    $region46: #{down_conv_res_block.14} parent=5 // pred_check_branch
      %348 = sbr.rel (%p346) target = $region48
    $region47: #{down_conv_res_block.14} parent=5 // pred_region
      %s349 = ssub.s32 %s12, 2
      // Predicated region
      $region49: #{down_conv_res_block.14} parent=47 // pred_check
        %p350 = pneg %p114
      $region50: #{down_conv_res_block.14} parent=47 // pred_check_branch
        %352 = sbr.rel (%p350) target = $region52
      $region51: #{down_conv_res_block.14} parent=47 // pred_region
        %p353 = scmp.lt.s32.totalorder %s18, 1
        %s354 = scalar_select %p353, %s18, 1
        %s355 = smul.addr %s354, 4
        %s356 = scalar_lea.vmem %s3, %s355
      $region52: #{down_conv_res_block.14} parent=47 // pred_fallthru
        _
      // Predicated region
      $region53: #{down_conv_res_block.14} parent=47 // pred_check
        %p357 = pneg %p140
      $region54: #{down_conv_res_block.14} parent=47 // pred_check_branch
        %359 = sbr.rel (%p357) target = $region56
      $region55: #{down_conv_res_block.14} parent=47 // pred_region
        %p360 = scmp.lt.s32.totalorder %s18, 1
        %s361 = scalar_select %p360, %s18, 1
        %s362 = smul.addr %s361, 8
        %s363 = scalar_lea.vmem %s4, %s362
      $region56: #{down_conv_res_block.14} parent=47 // pred_fallthru
        _
      // Predicated region
      $region57: #{down_conv_res_block.14} parent=47 // pred_check
        %p364 = pneg %p166
      $region58: #{down_conv_res_block.14} parent=47 // pred_check_branch
        %366 = sbr.rel (%p364) target = $region60
      $region59: #{down_conv_res_block.14} parent=47 // pred_region
        %p367 = scmp.lt.s32.totalorder %s18, 1
        %s368 = scalar_select %p367, %s18, 1
        %s369 = smul.addr %s368, 8
        %s370 = scalar_lea.vmem %s5, %s369
      $region60: #{down_conv_res_block.14} parent=47 // pred_fallthru
        _
    $region48: #{down_conv_res_block.14} parent=5 // pred_fallthru
      _
  $region6: #{down_conv_res_block.14} parent=0 // loop_footer
    %s16 = sadd.s32 1, %s12
  $region7: #{down_conv_res_block.14} parent=0 // loop_footer_branch
    %11 = sbr.rel target = $region3
  $region8: #{down_conv_res_block.14} parent=0 // loop_exit
    _

// kernel: down_conv_res_block.19
$region0: #{down_conv_res_block.19}
  #allocation0 [shape = 'u32[]', space=smem, size = 0x4, offset = 0x4, fixed_abs, tag = 'smem constant byte address 0x4 - core index']
  #allocation1 [shape = 'u32[144,128]{1,0:T(1,128)}', space=vmem, size = 0x12000, scoped, tag = 'internal scratch']
  %s0 = inlined_call_operand.vmem [shape: bf16[8,256], index: 0, kind: input, shape index: {}]
  %s1 = inlined_call_operand.vmem [shape: f32[8,1], index: 1, kind: input, shape index: {}]
  %s2 = inlined_call_operand.vmem [shape: f32[8,1], index: 2, kind: input, shape index: {}]
  %s3 = inlined_call_operand.vmem [shape: f32[1,256], index: 3, kind: input, shape index: {}]
  %s4 = inlined_call_operand.vmem [shape: bf16[8,256], index: 4, kind: input, shape index: {}]
  %s5 = inlined_call_operand.vmem [shape: bf16[8,256], index: 5, kind: output, shape index: {}]
  %s6 = sld [smem:[#allocation0]]
  $region53: #{down_conv_res_block.19} parent=0
    _
  %s8 = ssub.s32 1, %s6
  %s9 = scalar_select 0, %s8, %s6
  loop: start=0, step=1, limit=4
  $region2: #{down_conv_res_block.19} parent=0 // loop_pre_header
    _
  $region3: #{down_conv_res_block.19} parent=0 // loop_header
    %s11 = sphi 0, %s15
    %p12 = scmp.ge.s32.totalorder %s11, 4
    %s21 = sphi 0, %s23
    %s24 = sphi 0, %s21
    %s25 = sphi 0, %s24
    %s41 = sphi 0, %s25
    %s45 = sphi 0, %s45
    %s47 = sphi 0, %s45
    %s48 = sphi 0, %s47
    %s62 = sphi 0, %s48
    %s66 = sphi 0, %s66
    %s68 = sphi 0, %s66
    %s69 = sphi 0, %s68
    %s83 = sphi 0, %s69
    %s89 = sphi 0, %s91
    %s92 = sphi 0, %s89
    %s93 = sphi 0, %s92
    %s109 = sphi 0, %s93
    %s115 = sphi 0, %s117
    %s118 = sphi 0, %s115
    %s119 = sphi 0, %s118
    %s135 = sphi 0, %s119
    %s141 = sphi 0, %s143
    %s144 = sphi 0, %s141
    %s145 = sphi 0, %s144
    %s161 = sphi 0, %s145
  $region4: #{down_conv_res_block.19} parent=0 // loop_header_branch
    %14 = sbr.rel (%p12) target = $region8
  $region5: #{down_conv_res_block.19} parent=0 // loop_body
    %s16 = ssub.s32 %s11, 1
    %s17 = ssub.s32 %s11, 2
    %s18 = sadd.s32 %s11, 1
    %s19 = ssub.s32 %s11, %s18
    %p20 = scmp.eq.s32.totalorder %s19, 0
    %s22 = sadd.s32 %s21, 1
    %s23 = scalar_select %p20, %s21, %s22
    %p26 = pneg %p20
    %p27 = scmp.eq.s32.totalorder %s11, 1
    %p28 = por %p26, %p27
    %p29 = scmp.ne.s32.totalorder %s21, %s24
    %p30 = scmp.eq.s32.totalorder %s11, 0
    %p31 = por %p29, %p30
    %p32 = scmp.ne.s32.totalorder %s21, %s24
    %p33 = scmp.eq.s32.totalorder %s16, 1
    %p34 = por %p32, %p33
    %p35 = scmp.ne.s32.totalorder %s24, %s25
    %p36 = scmp.eq.s32.totalorder %s16, 0
    %p37 = por %p35, %p36
    %p38 = scmp.ne.s32.totalorder %s24, %s25
    %p39 = scmp.eq.s32.totalorder %s17, 1
    %p40 = por %p38, %p39
    %p42 = scmp.ne.s32.totalorder %s25, %s41
    %p43 = scmp.eq.s32.totalorder %s17, 0
    %p44 = por %p42, %p43
    %s46 = sadd.s32 %s45, 1
    %p49 = scmp.eq.s32.totalorder %s11, 1
    %p50 = scmp.ne.s32.totalorder %s45, %s47
    %p51 = scmp.eq.s32.totalorder %s11, 0
    %p52 = por %p50, %p51
    %p53 = scmp.ne.s32.totalorder %s45, %s47
    %p54 = scmp.eq.s32.totalorder %s16, 1
    %p55 = por %p53, %p54
    %p56 = scmp.ne.s32.totalorder %s47, %s48
    %p57 = scmp.eq.s32.totalorder %s16, 0
    %p58 = por %p56, %p57
    %p59 = scmp.ne.s32.totalorder %s47, %s48
    %p60 = scmp.eq.s32.totalorder %s17, 1
    %p61 = por %p59, %p60
    %p63 = scmp.ne.s32.totalorder %s48, %s62
    %p64 = scmp.eq.s32.totalorder %s17, 0
    %p65 = por %p63, %p64
    %s67 = sadd.s32 %s66, 1
    %p70 = scmp.eq.s32.totalorder %s11, 1
    %p71 = scmp.ne.s32.totalorder %s66, %s68
    %p72 = scmp.eq.s32.totalorder %s11, 0
    %p73 = por %p71, %p72
    %p74 = scmp.ne.s32.totalorder %s66, %s68
    %p75 = scmp.eq.s32.totalorder %s16, 1
    %p76 = por %p74, %p75
    %p77 = scmp.ne.s32.totalorder %s68, %s69
    %p78 = scmp.eq.s32.totalorder %s16, 0
    %p79 = por %p77, %p78
    %p80 = scmp.ne.s32.totalorder %s68, %s69
    %p81 = scmp.eq.s32.totalorder %s17, 1
    %p82 = por %p80, %p81
    %p84 = scmp.ne.s32.totalorder %s69, %s83
    %p85 = scmp.eq.s32.totalorder %s17, 0
    %p86 = por %p84, %p85
    %s87 = ssub.s32 %s11, %s18
    %p88 = scmp.eq.s32.totalorder %s87, 0
    %s90 = sadd.s32 %s89, 1
    %s91 = scalar_select %p88, %s89, %s90
    %p94 = pneg %p88
    %p95 = scmp.eq.s32.totalorder %s11, 1
    %p96 = por %p94, %p95
    %p97 = scmp.ne.s32.totalorder %s89, %s92
    %p98 = scmp.eq.s32.totalorder %s11, 0
    %p99 = por %p97, %p98
    %p100 = scmp.ne.s32.totalorder %s89, %s92
    %p101 = scmp.eq.s32.totalorder %s16, 1
    %p102 = por %p100, %p101
    %p103 = scmp.ne.s32.totalorder %s92, %s93
    %p104 = scmp.eq.s32.totalorder %s16, 0
    %p105 = por %p103, %p104
    %p106 = scmp.ne.s32.totalorder %s92, %s93
    %p107 = scmp.eq.s32.totalorder %s17, 1
    %p108 = por %p106, %p107
    %p110 = scmp.ne.s32.totalorder %s93, %s109
    %p111 = scmp.eq.s32.totalorder %s17, 0
    %p112 = por %p110, %p111
    %s113 = ssub.s32 %s11, %s18
    %p114 = scmp.eq.s32.totalorder %s113, 0
    %s116 = sadd.s32 %s115, 1
    %s117 = scalar_select %p114, %s115, %s116
    %p120 = pneg %p114
    %p121 = scmp.eq.s32.totalorder %s11, 1
    %p122 = por %p120, %p121
    %p123 = scmp.ne.s32.totalorder %s115, %s118
    %p124 = scmp.eq.s32.totalorder %s11, 0
    %p125 = por %p123, %p124
    %p126 = scmp.ne.s32.totalorder %s115, %s118
    %p127 = scmp.eq.s32.totalorder %s16, 1
    %p128 = por %p126, %p127
    %p129 = scmp.ne.s32.totalorder %s118, %s119
    %p130 = scmp.eq.s32.totalorder %s16, 0
    %p131 = por %p129, %p130
    %p132 = scmp.ne.s32.totalorder %s118, %s119
    %p133 = scmp.eq.s32.totalorder %s17, 1
    %p134 = por %p132, %p133
    %p136 = scmp.ne.s32.totalorder %s119, %s135
    %p137 = scmp.eq.s32.totalorder %s17, 0
    %p138 = por %p136, %p137
    %s139 = ssub.s32 %s11, %s18
    %p140 = scmp.eq.s32.totalorder %s139, 0
    %s142 = sadd.s32 %s141, 1
    %s143 = scalar_select %p140, %s141, %s142
    %p146 = pneg %p140
    %p147 = scmp.eq.s32.totalorder %s11, 1
    %p148 = por %p146, %p147
    %p149 = scmp.ne.s32.totalorder %s141, %s144
    %p150 = scmp.eq.s32.totalorder %s11, 0
    %p151 = por %p149, %p150
    %p152 = scmp.ne.s32.totalorder %s141, %s144
    %p153 = scmp.eq.s32.totalorder %s16, 1
    %p154 = por %p152, %p153
    %p155 = scmp.ne.s32.totalorder %s144, %s145
    %p156 = scmp.eq.s32.totalorder %s16, 0
    %p157 = por %p155, %p156
    %p158 = scmp.ne.s32.totalorder %s144, %s145
    %p159 = scmp.eq.s32.totalorder %s17, 1
    %p160 = por %p158, %p159
    %p162 = scmp.ne.s32.totalorder %s145, %s161
    %p163 = scmp.eq.s32.totalorder %s17, 0
    %p164 = por %p162, %p163
    %p165 = scmp.le.s32.totalorder 1, %s11
    %p166 = scmp.lt.s32.totalorder %s11, 3
    %p167 = pnand %p165, %p166
    %p168 = pneg %p167
    // Predicated region
    $region9: #{down_conv_res_block.19} parent=5 // pred_check
      _
    $region10: #{down_conv_res_block.19} parent=5 // pred_check_branch
      %170 = sbr.rel (%p167) target = $region12
    $region11: #{down_conv_res_block.19} parent=5 // pred_region
      %s171 = ssub.s32 %s11, 1
      // Predicated region
      $region13: #{down_conv_res_block.19} parent=11 // pred_check
        %p172 = pneg %p58
      $region14: #{down_conv_res_block.19} parent=11 // pred_check_branch
        %174 = sbr.rel (%p172) target = $region16
      $region15: #{down_conv_res_block.19} parent=11 // pred_region
        _
      $region16: #{down_conv_res_block.19} parent=11 // pred_fallthru
        _
      // Predicated region
      $region17: #{down_conv_res_block.19} parent=11 // pred_check
        %p175 = pneg %p79
      $region18: #{down_conv_res_block.19} parent=11 // pred_check_branch
        %177 = sbr.rel (%p175) target = $region20
      $region19: #{down_conv_res_block.19} parent=11 // pred_region
        _
      $region20: #{down_conv_res_block.19} parent=11 // pred_fallthru
        _
    $region12: #{down_conv_res_block.19} parent=5 // pred_fallthru
      _
    %p178 = scmp.lt.s32.totalorder %s11, 2
    // Predicated region
    $region21: #{down_conv_res_block.19} parent=5 // pred_check
      %p179 = pneg %p178
    $region22: #{down_conv_res_block.19} parent=5 // pred_check_branch
      %181 = sbr.rel (%p179) target = $region24
    $region23: #{down_conv_res_block.19} parent=5 // pred_region
      // Predicated region
      $region25: #{down_conv_res_block.19} parent=23 // pred_check
        %p182 = pneg %p31
      $region26: #{down_conv_res_block.19} parent=23 // pred_check_branch
        %184 = sbr.rel (%p182) target = $region28
      $region27: #{down_conv_res_block.19} parent=23 // pred_region
        %p185 = scmp.lt.s32.totalorder %s11, 1
        %s186 = scalar_select %p185, %s11, 1
        %s187 = smul.addr %s186, 4
        %s188 = scalar_lea.vmem %s0, %s187
      $region28: #{down_conv_res_block.19} parent=23 // pred_fallthru
        _
      // Predicated region
      $region29: #{down_conv_res_block.19} parent=23 // pred_check
        %p189 = pneg %p99
      $region30: #{down_conv_res_block.19} parent=23 // pred_check_branch
        %191 = sbr.rel (%p189) target = $region32
      $region31: #{down_conv_res_block.19} parent=23 // pred_region
        %p192 = scmp.lt.s32.totalorder %s11, 1
        %s193 = scalar_select %p192, %s11, 1
        %s194 = scalar_lea.vmem %s3, %s193
      $region32: #{down_conv_res_block.19} parent=23 // pred_fallthru
        _
      // Predicated region
      $region33: #{down_conv_res_block.19} parent=23 // pred_check
        %p195 = pneg %p125
      $region34: #{down_conv_res_block.19} parent=23 // pred_check_branch
        %197 = sbr.rel (%p195) target = $region36
      $region35: #{down_conv_res_block.19} parent=23 // pred_region
        %p198 = scmp.lt.s32.totalorder %s11, 1
        %s199 = scalar_select %p198, %s11, 1
        %s200 = smul.addr %s199, 4
        %s201 = scalar_lea.vmem %s4, %s200
      $region36: #{down_conv_res_block.19} parent=23 // pred_fallthru
        _
    $region24: #{down_conv_res_block.19} parent=5 // pred_fallthru
      _
    %p202 = scmp.le.s32.totalorder 1, %s11
    %p203 = scmp.lt.s32.totalorder %s11, 3
    %p204 = pnand %p202, %p203
    %p205 = pneg %p204
    // Predicated region
    $region37: #{down_conv_res_block.19} parent=5 // pred_check
      _
    $region38: #{down_conv_res_block.19} parent=5 // pred_check_branch
      %207 = sbr.rel (%p204) target = $region40
    $region39: #{down_conv_res_block.19} parent=5 // pred_region
      %s208 = ssub.s32 %s11, 1
      %p209 = scmp.lt.s32.totalorder %s16, 1
      %s210 = scalar_select %p209, %s16, 1
      %s211 = smul.addr %s210, 4
      %s212 = scalar_lea.vmem %s0, %s211
      %p213 = pneg %p37
      %p214 = pneg %p34
      %p215 = pneg %p58
      %p216 = pneg %p55
      %p217 = pneg %p79
      %p218 = pneg %p76
      %p219 = scmp.lt.s32.totalorder %s16, 1
      %s220 = scalar_select %p219, %s16, 1
      %s221 = scalar_lea.vmem %s3, %s220
      %p222 = pneg %p105
      %p223 = pneg %p102
      %p224 = scmp.lt.s32.totalorder %s16, 1
      %s225 = scalar_select %p224, %s16, 1
      %s226 = smul.addr %s225, 4
      %s227 = scalar_lea.vmem %s4, %s226
      %p228 = pneg %p131
      %p229 = pneg %p128
      %p230 = pneg %p157
      %p231 = pneg %p154
      %p232 = scmp.lt.s32.totalorder %s16, 1
      %s233 = scalar_select %p232, %s16, 1
      %s234 = smul.addr %s233, 4
      %s235 = scalar_lea.vmem %s5, %s234
      %p236 = scmp.lt.s32.totalorder %s16, 1
      %s237 = scalar_select %p236, %s16, 1
      %s238 = smul.addr %s237, 4
      %s239 = scalar_lea.vmem %s0, %s238
      %p240 = scmp.lt.s32.totalorder %s16, 1
      %s241 = scalar_select %p240, %s16, 1
      %s242 = scalar_lea.vmem %s3, %s241
      %p243 = scmp.lt.s32.totalorder %s16, 1
      %s244 = scalar_select %p243, %s16, 1
      %s245 = smul.addr %s244, 4
      %s246 = scalar_lea.vmem %s4, %s245
      %p247 = scmp.lt.s32.totalorder %s16, 1
      %s248 = scalar_select %p247, %s16, 1
      %s249 = smul.addr %s248, 4
      %s250 = scalar_lea.vmem %s5, %s249
      %v251 = vld [vmem:[%s239] sm:$0xf]
      %v252 = vunpack.c.l.bf16 %v251
      %v253 = vld [vmem:[%s1] sm:$0xff]
      %255 = vset.pattern.permute.xlu0 0
      %256 = vperm.xlu0 %255, %v253
      %v257 = vpop.permute.xlu0 %256
      %v259 = vmul.f32 %v252, %v257
      %v260 = vld [vmem:[%s2] sm:$0xff]
      %262 = vset.pattern.permute.xlu0 0
      %263 = vperm.xlu0 %262, %v260
      %v264 = vpop.permute.xlu0 %263
      %v266 = vadd.f32 %v259, %v264
      %v267 = vld [vmem:[%s246] sm:$0xf]
      %v268 = vunpack.c.l.bf16 %v267
      %v269 = vadd.f32 %v266, %v268
      %v270 = vmax.f32 %v269, 0.0
      %v271 = vld [vmem:[%s242] sm:$0x1]
      %v273 = vlaneseq
      %v274 = vshrl.u32 %v273, 7
      %v275 = vsub.s32 0, %v274
      %v276 = vrot.slane %v271, %v275
      %v278 = vmul.f32 %v270, %v276
      %v279 = vpack.c.bf16 %v278, %v278
      %280 = vst [vmem:[%s250] sm:$0xf] %v279
      %p281 = scmp.lt.s32.totalorder %s16, 1
      %s282 = scalar_select %p281, %s16, 1
      %s283 = smul.addr %s282, 4
      %s284 = scalar_lea.vmem %s5, %s283
      // Predicated region
      $region41: #{down_conv_res_block.19} parent=39 // pred_check
        %p285 = pneg %p154
      $region42: #{down_conv_res_block.19} parent=39 // pred_check_branch
        %287 = sbr.rel (%p285) target = $region44
      $region43: #{down_conv_res_block.19} parent=39 // pred_region
        _
      $region44: #{down_conv_res_block.19} parent=39 // pred_fallthru
        _
    $region40: #{down_conv_res_block.19} parent=5 // pred_fallthru
      _
    %p288 = scmp.le.s32.totalorder 2, %s11
    // Predicated region
    $region45: #{down_conv_res_block.19} parent=5 // pred_check
      %p289 = pneg %p288
    $region46: #{down_conv_res_block.19} parent=5 // pred_check_branch
      %291 = sbr.rel (%p289) target = $region48
    $region47: #{down_conv_res_block.19} parent=5 // pred_region
      %s292 = ssub.s32 %s11, 2
      // Predicated region
      $region49: #{down_conv_res_block.19} parent=47 // pred_check
        %p293 = pneg %p160
      $region50: #{down_conv_res_block.19} parent=47 // pred_check_branch
        %295 = sbr.rel (%p293) target = $region52
      $region51: #{down_conv_res_block.19} parent=47 // pred_region
        %p296 = scmp.lt.s32.totalorder %s17, 1
        %s297 = scalar_select %p296, %s17, 1
        %s298 = smul.addr %s297, 4
        %s299 = scalar_lea.vmem %s5, %s298
      $region52: #{down_conv_res_block.19} parent=47 // pred_fallthru
        _
    $region48: #{down_conv_res_block.19} parent=5 // pred_fallthru
      _
  $region6: #{down_conv_res_block.19} parent=0 // loop_footer
    %s15 = sadd.s32 1, %s11
  $region7: #{down_conv_res_block.19} parent=0 // loop_footer_branch
    %10 = sbr.rel target = $region3
  $region8: #{down_conv_res_block.19} parent=0 // loop_exit
    _

// kernel: down_conv_res_block.15
$region0: #{down_conv_res_block.15}
  #allocation0 [shape = 'u32[]', space=smem, size = 0x4, offset = 0x4, fixed_abs, tag = 'smem constant byte address 0x4 - core index']
  #allocation1 [shape = 'u32[144,128]{1,0:T(1,128)}', space=vmem, size = 0x12000, scoped, tag = 'internal scratch']
  %s0 = inlined_call_operand.vmem [shape: bf16[8,256], index: 0, kind: input, shape index: {}]
  %s1 = inlined_call_operand.vmem [shape: f32[8,1], index: 1, kind: input, shape index: {}]
  %s2 = inlined_call_operand.vmem [shape: f32[8,1], index: 2, kind: input, shape index: {}]
  %s3 = inlined_call_operand.vmem [shape: f32[1,256], index: 3, kind: input, shape index: {}]
  %s4 = inlined_call_operand.vmem [shape: bf16[8,256], index: 4, kind: output, shape index: {}]
  %s5 = sld [smem:[#allocation0]]
  $region49: #{down_conv_res_block.15} parent=0
    _
  %s7 = ssub.s32 1, %s5
  %s8 = scalar_select 0, %s7, %s5
  loop: start=0, step=1, limit=4
  $region2: #{down_conv_res_block.15} parent=0 // loop_pre_header
    _
  $region3: #{down_conv_res_block.15} parent=0 // loop_header
    %s10 = sphi 0, %s14
    %p11 = scmp.ge.s32.totalorder %s10, 4
    %s20 = sphi 0, %s22
    %s23 = sphi 0, %s20
    %s24 = sphi 0, %s23
    %s40 = sphi 0, %s24
    %s44 = sphi 0, %s44
    %s46 = sphi 0, %s44
    %s47 = sphi 0, %s46
    %s61 = sphi 0, %s47
    %s65 = sphi 0, %s65
    %s67 = sphi 0, %s65
    %s68 = sphi 0, %s67
    %s82 = sphi 0, %s68
    %s88 = sphi 0, %s90
    %s91 = sphi 0, %s88
    %s92 = sphi 0, %s91
    %s108 = sphi 0, %s92
    %s114 = sphi 0, %s116
    %s117 = sphi 0, %s114
    %s118 = sphi 0, %s117
    %s134 = sphi 0, %s118
  $region4: #{down_conv_res_block.15} parent=0 // loop_header_branch
    %13 = sbr.rel (%p11) target = $region8
  $region5: #{down_conv_res_block.15} parent=0 // loop_body
    %s15 = ssub.s32 %s10, 1
    %s16 = ssub.s32 %s10, 2
    %s17 = sadd.s32 %s10, 1
    %s18 = ssub.s32 %s10, %s17
    %p19 = scmp.eq.s32.totalorder %s18, 0
    %s21 = sadd.s32 %s20, 1
    %s22 = scalar_select %p19, %s20, %s21
    %p25 = pneg %p19
    %p26 = scmp.eq.s32.totalorder %s10, 1
    %p27 = por %p25, %p26
    %p28 = scmp.ne.s32.totalorder %s20, %s23
    %p29 = scmp.eq.s32.totalorder %s10, 0
    %p30 = por %p28, %p29
    %p31 = scmp.ne.s32.totalorder %s20, %s23
    %p32 = scmp.eq.s32.totalorder %s15, 1
    %p33 = por %p31, %p32
    %p34 = scmp.ne.s32.totalorder %s23, %s24
    %p35 = scmp.eq.s32.totalorder %s15, 0
    %p36 = por %p34, %p35
    %p37 = scmp.ne.s32.totalorder %s23, %s24
    %p38 = scmp.eq.s32.totalorder %s16, 1
    %p39 = por %p37, %p38
    %p41 = scmp.ne.s32.totalorder %s24, %s40
    %p42 = scmp.eq.s32.totalorder %s16, 0
    %p43 = por %p41, %p42
    %s45 = sadd.s32 %s44, 1
    %p48 = scmp.eq.s32.totalorder %s10, 1
    %p49 = scmp.ne.s32.totalorder %s44, %s46
    %p50 = scmp.eq.s32.totalorder %s10, 0
    %p51 = por %p49, %p50
    %p52 = scmp.ne.s32.totalorder %s44, %s46
    %p53 = scmp.eq.s32.totalorder %s15, 1
    %p54 = por %p52, %p53
    %p55 = scmp.ne.s32.totalorder %s46, %s47
    %p56 = scmp.eq.s32.totalorder %s15, 0
    %p57 = por %p55, %p56
    %p58 = scmp.ne.s32.totalorder %s46, %s47
    %p59 = scmp.eq.s32.totalorder %s16, 1
    %p60 = por %p58, %p59
    %p62 = scmp.ne.s32.totalorder %s47, %s61
    %p63 = scmp.eq.s32.totalorder %s16, 0
    %p64 = por %p62, %p63
    %s66 = sadd.s32 %s65, 1
    %p69 = scmp.eq.s32.totalorder %s10, 1
    %p70 = scmp.ne.s32.totalorder %s65, %s67
    %p71 = scmp.eq.s32.totalorder %s10, 0
    %p72 = por %p70, %p71
    %p73 = scmp.ne.s32.totalorder %s65, %s67
    %p74 = scmp.eq.s32.totalorder %s15, 1
    %p75 = por %p73, %p74
    %p76 = scmp.ne.s32.totalorder %s67, %s68
    %p77 = scmp.eq.s32.totalorder %s15, 0
    %p78 = por %p76, %p77
    %p79 = scmp.ne.s32.totalorder %s67, %s68
    %p80 = scmp.eq.s32.totalorder %s16, 1
    %p81 = por %p79, %p80
    %p83 = scmp.ne.s32.totalorder %s68, %s82
    %p84 = scmp.eq.s32.totalorder %s16, 0
    %p85 = por %p83, %p84
    %s86 = ssub.s32 %s10, %s17
    %p87 = scmp.eq.s32.totalorder %s86, 0
    %s89 = sadd.s32 %s88, 1
    %s90 = scalar_select %p87, %s88, %s89
    %p93 = pneg %p87
    %p94 = scmp.eq.s32.totalorder %s10, 1
    %p95 = por %p93, %p94
    %p96 = scmp.ne.s32.totalorder %s88, %s91
    %p97 = scmp.eq.s32.totalorder %s10, 0
    %p98 = por %p96, %p97
    %p99 = scmp.ne.s32.totalorder %s88, %s91
    %p100 = scmp.eq.s32.totalorder %s15, 1
    %p101 = por %p99, %p100
    %p102 = scmp.ne.s32.totalorder %s91, %s92
    %p103 = scmp.eq.s32.totalorder %s15, 0
    %p104 = por %p102, %p103
    %p105 = scmp.ne.s32.totalorder %s91, %s92
    %p106 = scmp.eq.s32.totalorder %s16, 1
    %p107 = por %p105, %p106
    %p109 = scmp.ne.s32.totalorder %s92, %s108
    %p110 = scmp.eq.s32.totalorder %s16, 0
    %p111 = por %p109, %p110
    %s112 = ssub.s32 %s10, %s17
    %p113 = scmp.eq.s32.totalorder %s112, 0
    %s115 = sadd.s32 %s114, 1
    %s116 = scalar_select %p113, %s114, %s115
    %p119 = pneg %p113
    %p120 = scmp.eq.s32.totalorder %s10, 1
    %p121 = por %p119, %p120
    %p122 = scmp.ne.s32.totalorder %s114, %s117
    %p123 = scmp.eq.s32.totalorder %s10, 0
    %p124 = por %p122, %p123
    %p125 = scmp.ne.s32.totalorder %s114, %s117
    %p126 = scmp.eq.s32.totalorder %s15, 1
    %p127 = por %p125, %p126
    %p128 = scmp.ne.s32.totalorder %s117, %s118
    %p129 = scmp.eq.s32.totalorder %s15, 0
    %p130 = por %p128, %p129
    %p131 = scmp.ne.s32.totalorder %s117, %s118
    %p132 = scmp.eq.s32.totalorder %s16, 1
    %p133 = por %p131, %p132
    %p135 = scmp.ne.s32.totalorder %s118, %s134
    %p136 = scmp.eq.s32.totalorder %s16, 0
    %p137 = por %p135, %p136
    %p138 = scmp.le.s32.totalorder 1, %s10
    %p139 = scmp.lt.s32.totalorder %s10, 3
    %p140 = pnand %p138, %p139
    %p141 = pneg %p140
    // Predicated region
    $region9: #{down_conv_res_block.15} parent=5 // pred_check
      _
    $region10: #{down_conv_res_block.15} parent=5 // pred_check_branch
      %143 = sbr.rel (%p140) target = $region12
    $region11: #{down_conv_res_block.15} parent=5 // pred_region
      %s144 = ssub.s32 %s10, 1
      // Predicated region
      $region13: #{down_conv_res_block.15} parent=11 // pred_check
        %p145 = pneg %p57
      $region14: #{down_conv_res_block.15} parent=11 // pred_check_branch
        %147 = sbr.rel (%p145) target = $region16
      $region15: #{down_conv_res_block.15} parent=11 // pred_region
        _
      $region16: #{down_conv_res_block.15} parent=11 // pred_fallthru
        _
      // Predicated region
      $region17: #{down_conv_res_block.15} parent=11 // pred_check
        %p148 = pneg %p78
      $region18: #{down_conv_res_block.15} parent=11 // pred_check_branch
        %150 = sbr.rel (%p148) target = $region20
      $region19: #{down_conv_res_block.15} parent=11 // pred_region
        _
      $region20: #{down_conv_res_block.15} parent=11 // pred_fallthru
        _
    $region12: #{down_conv_res_block.15} parent=5 // pred_fallthru
      _
    %p151 = scmp.lt.s32.totalorder %s10, 2
    // Predicated region
    $region21: #{down_conv_res_block.15} parent=5 // pred_check
      %p152 = pneg %p151
    $region22: #{down_conv_res_block.15} parent=5 // pred_check_branch
      %154 = sbr.rel (%p152) target = $region24
    $region23: #{down_conv_res_block.15} parent=5 // pred_region
      // Predicated region
      $region25: #{down_conv_res_block.15} parent=23 // pred_check
        %p155 = pneg %p30
      $region26: #{down_conv_res_block.15} parent=23 // pred_check_branch
        %157 = sbr.rel (%p155) target = $region28
      $region27: #{down_conv_res_block.15} parent=23 // pred_region
        %p158 = scmp.lt.s32.totalorder %s10, 1
        %s159 = scalar_select %p158, %s10, 1
        %s160 = smul.addr %s159, 4
        %s161 = scalar_lea.vmem %s0, %s160
      $region28: #{down_conv_res_block.15} parent=23 // pred_fallthru
        _
      // Predicated region
      $region29: #{down_conv_res_block.15} parent=23 // pred_check
        %p162 = pneg %p98
      $region30: #{down_conv_res_block.15} parent=23 // pred_check_branch
        %164 = sbr.rel (%p162) target = $region32
      $region31: #{down_conv_res_block.15} parent=23 // pred_region
        %p165 = scmp.lt.s32.totalorder %s10, 1
        %s166 = scalar_select %p165, %s10, 1
        %s167 = scalar_lea.vmem %s3, %s166
      $region32: #{down_conv_res_block.15} parent=23 // pred_fallthru
        _
    $region24: #{down_conv_res_block.15} parent=5 // pred_fallthru
      _
    %p168 = scmp.le.s32.totalorder 1, %s10
    %p169 = scmp.lt.s32.totalorder %s10, 3
    %p170 = pnand %p168, %p169
    %p171 = pneg %p170
    // Predicated region
    $region33: #{down_conv_res_block.15} parent=5 // pred_check
      _
    $region34: #{down_conv_res_block.15} parent=5 // pred_check_branch
      %173 = sbr.rel (%p170) target = $region36
    $region35: #{down_conv_res_block.15} parent=5 // pred_region
      %s174 = ssub.s32 %s10, 1
      %p175 = scmp.lt.s32.totalorder %s15, 1
      %s176 = scalar_select %p175, %s15, 1
      %s177 = smul.addr %s176, 4
      %s178 = scalar_lea.vmem %s0, %s177
      %p179 = pneg %p36
      %p180 = pneg %p33
      %p181 = pneg %p57
      %p182 = pneg %p54
      %p183 = pneg %p78
      %p184 = pneg %p75
      %p185 = scmp.lt.s32.totalorder %s15, 1
      %s186 = scalar_select %p185, %s15, 1
      %s187 = scalar_lea.vmem %s3, %s186
      %p188 = pneg %p104
      %p189 = pneg %p101
      %p190 = pneg %p130
      %p191 = pneg %p127
      %p192 = scmp.lt.s32.totalorder %s15, 1
      %s193 = scalar_select %p192, %s15, 1
      %s194 = smul.addr %s193, 4
      %s195 = scalar_lea.vmem %s4, %s194
      %p196 = scmp.lt.s32.totalorder %s15, 1
      %s197 = scalar_select %p196, %s15, 1
      %s198 = smul.addr %s197, 4
      %s199 = scalar_lea.vmem %s0, %s198
      %p200 = scmp.lt.s32.totalorder %s15, 1
      %s201 = scalar_select %p200, %s15, 1
      %s202 = scalar_lea.vmem %s3, %s201
      %p203 = scmp.lt.s32.totalorder %s15, 1
      %s204 = scalar_select %p203, %s15, 1
      %s205 = smul.addr %s204, 4
      %s206 = scalar_lea.vmem %s4, %s205
      %v207 = vld [vmem:[%s199] sm:$0xf]
      %v208 = vunpack.c.l.bf16 %v207
      %v209 = vld [vmem:[%s1] sm:$0xff]
      %211 = vset.pattern.permute.xlu0 0
      %212 = vperm.xlu0 %211, %v209
      %v213 = vpop.permute.xlu0 %212
      %v215 = vmul.f32 %v208, %v213
      %v216 = vld [vmem:[%s2] sm:$0xff]
      %218 = vset.pattern.permute.xlu0 0
      %219 = vperm.xlu0 %218, %v216
      %v220 = vpop.permute.xlu0 %219
      %v222 = vadd.f32 %v215, %v220
      %v223 = vld [vmem:[%s202] sm:$0x1]
      %v225 = vlaneseq
      %v226 = vshrl.u32 %v225, 7
      %v227 = vsub.s32 0, %v226
      %v228 = vrot.slane %v223, %v227
      %v230 = vmul.f32 %v222, %v228
      %v231 = vpack.c.bf16 %v230, %v230
      %232 = vst [vmem:[%s206] sm:$0xf] %v231
      %p233 = scmp.lt.s32.totalorder %s15, 1
      %s234 = scalar_select %p233, %s15, 1
      %s235 = smul.addr %s234, 4
      %s236 = scalar_lea.vmem %s4, %s235
      // Predicated region
      $region37: #{down_conv_res_block.15} parent=35 // pred_check
        %p237 = pneg %p127
      $region38: #{down_conv_res_block.15} parent=35 // pred_check_branch
        %239 = sbr.rel (%p237) target = $region40
      $region39: #{down_conv_res_block.15} parent=35 // pred_region
        _
      $region40: #{down_conv_res_block.15} parent=35 // pred_fallthru
        _
    $region36: #{down_conv_res_block.15} parent=5 // pred_fallthru
      _
    %p240 = scmp.le.s32.totalorder 2, %s10
    // Predicated region
    $region41: #{down_conv_res_block.15} parent=5 // pred_check
      %p241 = pneg %p240
    $region42: #{down_conv_res_block.15} parent=5 // pred_check_branch
      %243 = sbr.rel (%p241) target = $region44
    $region43: #{down_conv_res_block.15} parent=5 // pred_region
      %s244 = ssub.s32 %s10, 2
      // Predicated region
      $region45: #{down_conv_res_block.15} parent=43 // pred_check
        %p245 = pneg %p133
      $region46: #{down_conv_res_block.15} parent=43 // pred_check_branch
        %247 = sbr.rel (%p245) target = $region48
      $region47: #{down_conv_res_block.15} parent=43 // pred_region
        %p248 = scmp.lt.s32.totalorder %s16, 1
        %s249 = scalar_select %p248, %s16, 1
        %s250 = smul.addr %s249, 4
        %s251 = scalar_lea.vmem %s4, %s250
      $region48: #{down_conv_res_block.15} parent=43 // pred_fallthru
        _
    $region44: #{down_conv_res_block.15} parent=5 // pred_fallthru
      _
  $region6: #{down_conv_res_block.15} parent=0 // loop_footer
    %s14 = sadd.s32 1, %s10
  $region7: #{down_conv_res_block.15} parent=0 // loop_footer_branch
    %9 = sbr.rel target = $region3
  $region8: #{down_conv_res_block.15} parent=0 // loop_exit
    _

</llo_original>
